<compile_context>
chip_gen: v7x
topology: tpu7x:2x2x1
jax: 0.10.0
libtpu: 0.0.40
codegen_flags: <defaults>
</compile_context>

<pallas_src>
import functools

import jax
import jax.numpy as jnp
import numpy as np
from jax.experimental import pallas as pl
from jax.experimental.pallas import tpu as pltpu


def dhgn_kernel(x_ref, adj_ref, adj_t_ref,
                w_init_ref, b_init_ref,
                w_v2e_ref, b_v2e_ref,
                w_e2v_v_ref, w_e2v_m_ref, b_e2v_ref,
                out_ref, *, n_layers):
    Bb, N, Din = x_ref.shape
    _, E, _ = adj_ref.shape
    F = w_init_ref.shape[1]

    # ---- adjacency masks (hoisted: layer-invariant) -------------------------
    adj = adj_ref[...].astype(jnp.float32)           # (Bb, E, N)
    adj_t = adj_t_ref[...].astype(jnp.float32)       # (Bb, N, E)

    adj_target = jnp.where(adj == -1.0, 1.0, 0.0)               # (Bb, E, N)
    norm = jnp.sum(adj_target, axis=-1, keepdims=True)          # (Bb, E, 1)
    inv_norm = pl.reciprocal(jnp.where(norm == 0.0, 1.0, norm), approx=False)
    # Fold 1/norm into the mask once -> no per-layer divide; bf16 MXU operand.
    adj_target = (adj_target * inv_norm).astype(jnp.bfloat16)   # (Bb, E, N)
    # Source mask arrives already transposed (host-side layout plumbing), so
    # the he->v contraction below is a plain batched matmul (no XLU transpose).
    adj_source_t = jnp.where(adj_t == 1.0, 1.0, 0.0).astype(jnp.bfloat16)  # (Bb, N, E)

    # ---- init_node_embedding: (Bb*N, Din) @ (Din, F) ------------------------
    x2d = x_ref[...].reshape(Bb * N, Din)
    v2d = jnp.dot(x2d.astype(jnp.bfloat16), w_init_ref[...],
                  preferred_element_type=jnp.float32) + b_init_ref[...]   # (Bb*N, F) f32

    # n_layers is small here; a static unroll is fine.  For larger L, switch to
    # lax.fori_loop(..., unroll=True) to keep vreg live ranges bounded.
    for l in range(n_layers):
        v3d = v2d.reshape(Bb, N, F)

        # vertex -> hyperedge (normalized aggregation over target vertices)
        msg_v = jnp.einsum('ben,bnf->bef', adj_target,
                           v3d.astype(jnp.bfloat16),
                           preferred_element_type=jnp.float32)            # (Bb, E, F)
        he2d = jnp.maximum(
            jnp.dot(msg_v.reshape(Bb * E, F).astype(jnp.bfloat16), w_v2e_ref[l],
                    preferred_element_type=jnp.float32) + b_v2e_ref[l],
            0.0)                                                          # (Bb*E, F)

        # hyperedge -> source vertices
        msg_he = jnp.einsum('bne,bef->bnf', adj_source_t,
                            he2d.reshape(Bb, E, F).astype(jnp.bfloat16),
                            preferred_element_type=jnp.float32)           # (Bb, N, F)

        # Linear(2F -> F) on cat([v, msg_he]) == v @ W_v + msg_he @ W_m
        v2d = jnp.maximum(
            jnp.dot(v2d.astype(jnp.bfloat16), w_e2v_v_ref[l],
                    preferred_element_type=jnp.float32)
            + jnp.dot(msg_he.reshape(Bb * N, F).astype(jnp.bfloat16), w_e2v_m_ref[l],
                      preferred_element_type=jnp.float32)
            + b_e2v_ref[l],
            0.0)                                                          # (Bb*N, F)

    # TODO(synk): with F < 128 the final store is lane-masked; padding F to 128
    # in out_shape (and slicing in the wrapper) would trade 4x output bytes for
    # unmasked stores -- not worthwhile at this output size.
    out_ref[...] = v2d.reshape(Bb, N, F).astype(out_ref.dtype)


def _choose_block_b(B, N, target_rows=128):
    """Pick the batch block: smallest divisor of B whose Bb*N reaches
    `target_rows` MXU rows, while keeping >= 2 grid steps when B >= 2
    (megacore sharding / 2 TensorCores on v7x)."""
    divisors = [d for d in range(1, B + 1) if B % d == 0]
    if B >= 2:
        divisors = [d for d in divisors if B // d >= 2]
    for d in divisors:
        if d * N >= target_rows:
            return d
    return divisors[-1]


def directed_hgnn_forward(node_features, adj, params, n_layers, block_b=None):
    B, N, Din = node_features.shape
    _, E, _ = adj.shape
    F = params["w_init"].shape[1]
    L = n_layers

    Bb = _choose_block_b(B, N) if block_b is None else block_b
    assert B % Bb == 0, (B, Bb)

    # Adjacency streamed as int8 ({-1,0,+1}); transposed copy is pure layout
    # plumbing so the kernel needs no transpose at all.
    adj_i8 = adj.astype(jnp.int8)
    adj_t_i8 = jnp.swapaxes(adj_i8, 1, 2)

    # bf16 weights for the MXU (halves weight DMA / VMEM); biases stay f32
    # since they are added to the f32 accumulator.
    w_init = params["w_init"].astype(jnp.bfloat16)
    w_v2e = params["w_v2e"].astype(jnp.bfloat16)
    w_e2v_v = params["w_e2v_v"].astype(jnp.bfloat16)
    w_e2v_m = params["w_e2v_m"].astype(jnp.bfloat16)

    kernel = functools.partial(dhgn_kernel, n_layers=L)
    in_specs = [
        pl.BlockSpec((Bb, N, Din), lambda b: (b, 0, 0)),   # node_features
        pl.BlockSpec((Bb, E, N), lambda b: (b, 0, 0)),     # adj (int8)
        pl.BlockSpec((Bb, N, E), lambda b: (b, 0, 0)),     # adj^T (int8)
        pl.BlockSpec((Din, F), lambda b: (0, 0)),          # w_init (bf16)
        pl.BlockSpec((1, F), lambda b: (0, 0)),            # b_init
        pl.BlockSpec((L, F, F), lambda b: (0, 0, 0)),      # w_v2e (bf16)
        pl.BlockSpec((L, 1, F), lambda b: (0, 0, 0)),      # b_v2e
        pl.BlockSpec((L, F, F), lambda b: (0, 0, 0)),      # w_e2v (vertex half)
        pl.BlockSpec((L, F, F), lambda b: (0, 0, 0)),      # w_e2v (message half)
        pl.BlockSpec((L, 1, F), lambda b: (0, 0, 0)),      # b_e2v
    ]
    out_specs = pl.BlockSpec((Bb, N, F), lambda b: (b, 0, 0))

    return pl.pallas_call(
        kernel,
        out_shape=jax.ShapeDtypeStruct((B, N, F), jnp.float32),
        grid=(B // Bb,),
        in_specs=in_specs,
        out_specs=out_specs,
        compiler_params=pltpu.CompilerParams(
            dimension_semantics=("parallel",),
            vmem_limit_bytes=32 * 1024 * 1024),
    )(node_features, adj_i8, adj_t_i8,
      w_init, params["b_init"],
      w_v2e, params["b_v2e"],
      w_e2v_v, w_e2v_m, params["b_e2v"])


def reference_forward(x, adj, params, n_layers):
    """Pure-JAX f32 reference mirroring the PyTorch module."""
    v = x @ params["w_init"] + params["b_init"]
    adj_t = jnp.where(adj == -1.0, 1.0, 0.0)
    norm = jnp.sum(adj_t, axis=-1, keepdims=True)
    norm = jnp.where(norm == 0.0, 1.0, norm)
    adj_s_T = jnp.swapaxes(jnp.where(adj == 1.0, 1.0, 0.0), 1, 2)
    for l in range(n_layers):
        msg_v = (adj_t @ v) / norm
        he = jax.nn.relu(msg_v @ params["w_v2e"][l] + params["b_v2e"][l])
        msg_he = adj_s_T @ he
        v = jax.nn.relu(v @ params["w_e2v_v"][l]
                        + msg_he @ params["w_e2v_m"][l]
                        + params["b_e2v"][l])
    return v


def init_params(key, n_obs_in, n_features, n_layers):
    """Deterministic, PyTorch-Linear-style uniform init (shapes from __init__)."""
    F = n_features
    ks = jax.random.split(key, 9)

    def u(k, shape, fan_in):
        bound = 1.0 / np.sqrt(fan_in)
        return jax.random.uniform(k, shape, jnp.float32, -bound, bound)

    return {
        "w_init": u(ks[0], (n_obs_in, F), n_obs_in),
        "b_init": u(ks[1], (1, F), n_obs_in),
        "w_v2e": u(ks[2], (n_layers, F, F), F),
        "b_v2e": u(ks[3], (n_layers, 1, F), F),
        # e2v_layer is Linear(2F -> F); split its weight into the half that
        # multiplies the vertex embedding and the half for the he message.
        "w_e2v_v": u(ks[4], (n_layers, F, F), 2 * F),
        "w_e2v_m": u(ks[5], (n_layers, F, F), 2 * F),
        "b_e2v": u(ks[6], (n_layers, 1, F), 2 * F),
    }


if __name__ == "__main__":
    B, N, E = 16, 16, 8        # batch, vertices, hyperedges
    n_obs_in, n_features, n_layers = 4, 32, 3

    key = jax.random.PRNGKey(0)
    k_x, k_adj, k_p = jax.random.split(key, 3)

    node_features = jax.random.normal(k_x, (B, N, n_obs_in), jnp.float32)
    # adjacency entries in {-1, 0, +1}
    adj = jax.random.randint(k_adj, (B, E, N), minval=-1, maxval=2).astype(jnp.float32)

    params = init_params(k_p, n_obs_in, n_features, n_layers)

    out = directed_hgnn_forward(node_features, adj, params, n_layers)
    out = jax.block_until_ready(out)

    ref = reference_forward(node_features, adj, params, n_layers)
    # bf16 MXU operands (f32 accumulation) -> compare against the f32 reference
    # with correspondingly relaxed tolerances.
    np.testing.assert_allclose(np.asarray(out), np.asarray(ref),
                               rtol=5e-2, atol=5e-2)
    print("KERNEL_OK")
</pallas_src>

<mosaic_0001>
module attributes {stable_mosaic.version = 11 : i64} {
  func.func @dhgn_kernel(%arg0: i32, %arg1: memref<8x16x4xf32, #tpu.memory_space<vmem>>, %arg2: memref<8x8x16xi8, #tpu.memory_space<vmem>>, %arg3: memref<8x16x8xi8, #tpu.memory_space<vmem>>, %arg4: memref<4x32xbf16, #tpu.memory_space<vmem>>, %arg5: memref<1x32xf32, #tpu.memory_space<vmem>>, %arg6: memref<3x32x32xbf16, #tpu.memory_space<vmem>>, %arg7: memref<3x1x32xf32, #tpu.memory_space<vmem>>, %arg8: memref<3x32x32xbf16, #tpu.memory_space<vmem>>, %arg9: memref<3x32x32xbf16, #tpu.memory_space<vmem>>, %arg10: memref<3x1x32xf32, #tpu.memory_space<vmem>>, %arg11: memref<8x16x32xf32, #tpu.memory_space<vmem>>) attributes {dimension_semantics = [#tpu.dimension_semantics<parallel>], iteration_bounds = array<i64: 2>, scalar_prefetch = 0 : i64, scratch_operands = 0 : i64, tpu.core_type = #tpu.core_type<tc>, window_params = [{transform_indices = @transform_0, window_bounds = array<i64: 8, 16, 4>}, {transform_indices = @transform_1, window_bounds = array<i64: 8, 8, 16>}, {transform_indices = @transform_2, window_bounds = array<i64: 8, 16, 8>}, {pipeline_mode = #tpu.pipeline_mode<synchronous>, transform_indices = @transform_3, window_bounds = array<i64: 4, 32>}, {pipeline_mode = #tpu.pipeline_mode<synchronous>, transform_indices = @transform_4, window_bounds = array<i64: 1, 32>}, {pipeline_mode = #tpu.pipeline_mode<synchronous>, transform_indices = @transform_5, window_bounds = array<i64: 3, 32, 32>}, {pipeline_mode = #tpu.pipeline_mode<synchronous>, transform_indices = @transform_6, window_bounds = array<i64: 3, 1, 32>}, {pipeline_mode = #tpu.pipeline_mode<synchronous>, transform_indices = @transform_7, window_bounds = array<i64: 3, 32, 32>}, {pipeline_mode = #tpu.pipeline_mode<synchronous>, transform_indices = @transform_8, window_bounds = array<i64: 3, 32, 32>}, {pipeline_mode = #tpu.pipeline_mode<synchronous>, transform_indices = @transform_9, window_bounds = array<i64: 3, 1, 32>}, {transform_indices = @transform_10, window_bounds = array<i64: 8, 16, 32>}]} {
    %c0 = arith.constant 0 : index
    %c0_0 = arith.constant 0 : index
    %c0_1 = arith.constant 0 : index
    %0 = vector.load %arg2[%c0, %c0_0, %c0_1] : memref<8x8x16xi8, #tpu.memory_space<vmem>>, vector<8x8x16xi8>
    %1 = arith.sitofp %0 : vector<8x8x16xi8> to vector<8x8x16xf32>
    %c0_2 = arith.constant 0 : index
    %c0_3 = arith.constant 0 : index
    %c0_4 = arith.constant 0 : index
    %2 = vector.load %arg3[%c0_2, %c0_3, %c0_4] : memref<8x16x8xi8, #tpu.memory_space<vmem>>, vector<8x16x8xi8>
    %3 = arith.sitofp %2 : vector<8x16x8xi8> to vector<8x16x8xf32>
    %cst = arith.constant -1.000000e+00 : f32
    %4 = vector.broadcast %cst : f32 to vector<8x8x16xf32>
    %5 = arith.cmpf oeq, %1, %4 : vector<8x8x16xf32>
    %cst_5 = arith.constant 1.000000e+00 : f32
    %cst_6 = arith.constant 0.000000e+00 : f32
    %6 = vector.broadcast %cst_5 : f32 to vector<8x8x16xf32>
    %7 = vector.broadcast %cst_6 : f32 to vector<8x8x16xf32>
    %8 = arith.select %5, %6, %7 : vector<8x8x16xi1>, vector<8x8x16xf32>
    %cst_7 = arith.constant dense<0.000000e+00> : vector<8x8xf32>
    %9 = vector.multi_reduction <add>, %8, %cst_7 [2] : vector<8x8x16xf32> to vector<8x8xf32>
    %10 = vector.shape_cast %9 : vector<8x8xf32> to vector<8x8x1xf32>
    %cst_8 = arith.constant 0.000000e+00 : f32
    %11 = vector.broadcast %cst_8 : f32 to vector<8x8x1xf32>
    %12 = arith.cmpf oeq, %10, %11 : vector<8x8x1xf32>
    %cst_9 = arith.constant 1.000000e+00 : f32
    %13 = vector.broadcast %cst_9 : f32 to vector<8x8x1xf32>
    %14 = arith.select %12, %13, %10 : vector<8x8x1xi1>, vector<8x8x1xf32>
    %15 = tpu.reciprocal %14 : vector<8x8x1xf32> -> vector<8x8x1xf32>
    %16 = vector.broadcast %15 : vector<8x8x1xf32> to vector<8x8x16xf32>
    %17 = arith.mulf %8, %16 : vector<8x8x16xf32>
    %18 = arith.truncf %17 : vector<8x8x16xf32> to vector<8x8x16xbf16>
    %cst_10 = arith.constant 1.000000e+00 : f32
    %19 = vector.broadcast %cst_10 : f32 to vector<8x16x8xf32>
    %20 = arith.cmpf oeq, %3, %19 : vector<8x16x8xf32>
    %cst_11 = arith.constant 1.000000e+00 : f32
    %cst_12 = arith.constant 0.000000e+00 : f32
    %21 = vector.broadcast %cst_11 : f32 to vector<8x16x8xf32>
    %22 = vector.broadcast %cst_12 : f32 to vector<8x16x8xf32>
    %23 = arith.select %20, %21, %22 : vector<8x16x8xi1>, vector<8x16x8xf32>
    %24 = arith.truncf %23 : vector<8x16x8xf32> to vector<8x16x8xbf16>
    %c0_13 = arith.constant 0 : index
    %c0_14 = arith.constant 0 : index
    %c0_15 = arith.constant 0 : index
    %25 = vector.load %arg1[%c0_13, %c0_14, %c0_15] : memref<8x16x4xf32, #tpu.memory_space<vmem>>, vector<8x16x4xf32>
    %26 = vector.shape_cast %25 : vector<8x16x4xf32> to vector<128x4xf32>
    %27 = arith.truncf %26 : vector<128x4xf32> to vector<128x4xbf16>
    %c0_16 = arith.constant 0 : index
    %c0_17 = arith.constant 0 : index
    %28 = vector.load %arg4[%c0_16, %c0_17] : memref<4x32xbf16, #tpu.memory_space<vmem>>, vector<4x32xbf16>
    %cst_18 = arith.constant dense<0.000000e+00> : vector<128x32xf32>
    %29 = tpu.matmul %27, %28, %cst_18 {dimension_numbers = #tpu.dot_dimension_numbers<[1], [0], [0], [1], [0, 0, 1, 1], [], []>} : vector<128x4xbf16>, vector<4x32xbf16>, vector<128x32xf32> -> vector<128x32xf32>
    %c0_19 = arith.constant 0 : index
    %c0_20 = arith.constant 0 : index
    %30 = vector.load %arg5[%c0_19, %c0_20] : memref<1x32xf32, #tpu.memory_space<vmem>>, vector<1x32xf32>
    %31 = vector.broadcast %30 : vector<1x32xf32> to vector<128x32xf32>
    %32 = arith.addf %29, %31 : vector<128x32xf32>
    %33 = vector.shape_cast %32 : vector<128x32xf32> to vector<8x16x32xf32>
    %34 = arith.truncf %33 : vector<8x16x32xf32> to vector<8x16x32xbf16>
    "tpu.trace_start"() <{level = 10 : i32, message = "ben,bnf->bef"}> : () -> ()
    %cst_21 = arith.constant dense<0.000000e+00> : vector<8x8x32xf32>
    %35 = tpu.matmul %18, %34, %cst_21 {dimension_numbers = #tpu.dot_dimension_numbers<[2], [1], [1], [2], [0, 0, 0, 1, 1, 2], [0], [0]>} : vector<8x8x16xbf16>, vector<8x16x32xbf16>, vector<8x8x32xf32> -> vector<8x8x32xf32>
    "tpu.trace_stop"() : () -> ()
    %36 = vector.shape_cast %35 : vector<8x8x32xf32> to vector<64x32xf32>
    %37 = arith.truncf %36 : vector<64x32xf32> to vector<64x32xbf16>
    %c0_22 = arith.constant 0 : index
    %c0_23 = arith.constant 0 : index
    %c0_24 = arith.constant 0 : index
    %38 = vector.load %arg6[%c0_22, %c0_23, %c0_24] : memref<3x32x32xbf16, #tpu.memory_space<vmem>>, vector<1x32x32xbf16>
    %39 = vector.shape_cast %38 : vector<1x32x32xbf16> to vector<32x32xbf16>
    %cst_25 = arith.constant dense<0.000000e+00> : vector<64x32xf32>
    %40 = tpu.matmul %37, %39, %cst_25 {dimension_numbers = #tpu.dot_dimension_numbers<[1], [0], [0], [1], [0, 0, 1, 1], [], []>} : vector<64x32xbf16>, vector<32x32xbf16>, vector<64x32xf32> -> vector<64x32xf32>
    %c0_26 = arith.constant 0 : index
    %c0_27 = arith.constant 0 : index
    %c0_28 = arith.constant 0 : index
    %41 = vector.load %arg7[%c0_26, %c0_27, %c0_28] : memref<3x1x32xf32, #tpu.memory_space<vmem>>, vector<1x1x32xf32>
    %42 = vector.shape_cast %41 : vector<1x1x32xf32> to vector<1x32xf32>
    %43 = vector.broadcast %42 : vector<1x32xf32> to vector<64x32xf32>
    %44 = arith.addf %40, %43 : vector<64x32xf32>
    %cst_29 = arith.constant 0.000000e+00 : f32
    %45 = vector.broadcast %cst_29 : f32 to vector<64x32xf32>
    %46 = arith.maximumf %44, %45 : vector<64x32xf32>
    %47 = vector.shape_cast %46 : vector<64x32xf32> to vector<8x8x32xf32>
    %48 = arith.truncf %47 : vector<8x8x32xf32> to vector<8x8x32xbf16>
    "tpu.trace_start"() <{level = 10 : i32, message = "bne,bef->bnf"}> : () -> ()
    %cst_30 = arith.constant dense<0.000000e+00> : vector<8x16x32xf32>
    %49 = tpu.matmul %24, %48, %cst_30 {dimension_numbers = #tpu.dot_dimension_numbers<[2], [1], [1], [2], [0, 0, 0, 1, 1, 2], [0], [0]>} : vector<8x16x8xbf16>, vector<8x8x32xbf16>, vector<8x16x32xf32> -> vector<8x16x32xf32>
    "tpu.trace_stop"() : () -> ()
    %50 = arith.truncf %32 : vector<128x32xf32> to vector<128x32xbf16>
    %c0_31 = arith.constant 0 : index
    %c0_32 = arith.constant 0 : index
    %c0_33 = arith.constant 0 : index
    %51 = vector.load %arg8[%c0_31, %c0_32, %c0_33] : memref<3x32x32xbf16, #tpu.memory_space<vmem>>, vector<1x32x32xbf16>
    %52 = vector.shape_cast %51 : vector<1x32x32xbf16> to vector<32x32xbf16>
    %cst_34 = arith.constant dense<0.000000e+00> : vector<128x32xf32>
    %53 = tpu.matmul %50, %52, %cst_34 {dimension_numbers = #tpu.dot_dimension_numbers<[1], [0], [0], [1], [0, 0, 1, 1], [], []>} : vector<128x32xbf16>, vector<32x32xbf16>, vector<128x32xf32> -> vector<128x32xf32>
    %54 = vector.shape_cast %49 : vector<8x16x32xf32> to vector<128x32xf32>
    %55 = arith.truncf %54 : vector<128x32xf32> to vector<128x32xbf16>
    %c0_35 = arith.constant 0 : index
    %c0_36 = arith.constant 0 : index
    %c0_37 = arith.constant 0 : index
    %56 = vector.load %arg9[%c0_35, %c0_36, %c0_37] : memref<3x32x32xbf16, #tpu.memory_space<vmem>>, vector<1x32x32xbf16>
    %57 = vector.shape_cast %56 : vector<1x32x32xbf16> to vector<32x32xbf16>
    %cst_38 = arith.constant dense<0.000000e+00> : vector<128x32xf32>
    %58 = tpu.matmul %55, %57, %cst_38 {dimension_numbers = #tpu.dot_dimension_numbers<[1], [0], [0], [1], [0, 0, 1, 1], [], []>} : vector<128x32xbf16>, vector<32x32xbf16>, vector<128x32xf32> -> vector<128x32xf32>
    %59 = arith.addf %53, %58 : vector<128x32xf32>
    %c0_39 = arith.constant 0 : index
    %c0_40 = arith.constant 0 : index
    %c0_41 = arith.constant 0 : index
    %60 = vector.load %arg10[%c0_39, %c0_40, %c0_41] : memref<3x1x32xf32, #tpu.memory_space<vmem>>, vector<1x1x32xf32>
    %61 = vector.shape_cast %60 : vector<1x1x32xf32> to vector<1x32xf32>
    %62 = vector.broadcast %61 : vector<1x32xf32> to vector<128x32xf32>
    %63 = arith.addf %59, %62 : vector<128x32xf32>
    %cst_42 = arith.constant 0.000000e+00 : f32
    %64 = vector.broadcast %cst_42 : f32 to vector<128x32xf32>
    %65 = arith.maximumf %63, %64 : vector<128x32xf32>
    %66 = vector.shape_cast %65 : vector<128x32xf32> to vector<8x16x32xf32>
    %67 = arith.truncf %66 : vector<8x16x32xf32> to vector<8x16x32xbf16>
    "tpu.trace_start"() <{level = 10 : i32, message = "ben,bnf->bef"}> : () -> ()
    %cst_43 = arith.constant dense<0.000000e+00> : vector<8x8x32xf32>
    %68 = tpu.matmul %18, %67, %cst_43 {dimension_numbers = #tpu.dot_dimension_numbers<[2], [1], [1], [2], [0, 0, 0, 1, 1, 2], [0], [0]>} : vector<8x8x16xbf16>, vector<8x16x32xbf16>, vector<8x8x32xf32> -> vector<8x8x32xf32>
    "tpu.trace_stop"() : () -> ()
    %69 = vector.shape_cast %68 : vector<8x8x32xf32> to vector<64x32xf32>
    %70 = arith.truncf %69 : vector<64x32xf32> to vector<64x32xbf16>
    %c1 = arith.constant 1 : index
    %c0_44 = arith.constant 0 : index
    %c0_45 = arith.constant 0 : index
    %71 = vector.load %arg6[%c1, %c0_44, %c0_45] : memref<3x32x32xbf16, #tpu.memory_space<vmem>>, vector<1x32x32xbf16>
    %72 = vector.shape_cast %71 : vector<1x32x32xbf16> to vector<32x32xbf16>
    %cst_46 = arith.constant dense<0.000000e+00> : vector<64x32xf32>
    %73 = tpu.matmul %70, %72, %cst_46 {dimension_numbers = #tpu.dot_dimension_numbers<[1], [0], [0], [1], [0, 0, 1, 1], [], []>} : vector<64x32xbf16>, vector<32x32xbf16>, vector<64x32xf32> -> vector<64x32xf32>
    %c1_47 = arith.constant 1 : index
    %c0_48 = arith.constant 0 : index
    %c0_49 = arith.constant 0 : index
    %74 = vector.load %arg7[%c1_47, %c0_48, %c0_49] : memref<3x1x32xf32, #tpu.memory_space<vmem>>, vector<1x1x32xf32>
    %75 = vector.shape_cast %74 : vector<1x1x32xf32> to vector<1x32xf32>
    %76 = vector.broadcast %75 : vector<1x32xf32> to vector<64x32xf32>
    %77 = arith.addf %73, %76 : vector<64x32xf32>
    %cst_50 = arith.constant 0.000000e+00 : f32
    %78 = vector.broadcast %cst_50 : f32 to vector<64x32xf32>
    %79 = arith.maximumf %77, %78 : vector<64x32xf32>
    %80 = vector.shape_cast %79 : vector<64x32xf32> to vector<8x8x32xf32>
    %81 = arith.truncf %80 : vector<8x8x32xf32> to vector<8x8x32xbf16>
    "tpu.trace_start"() <{level = 10 : i32, message = "bne,bef->bnf"}> : () -> ()
    %cst_51 = arith.constant dense<0.000000e+00> : vector<8x16x32xf32>
    %82 = tpu.matmul %24, %81, %cst_51 {dimension_numbers = #tpu.dot_dimension_numbers<[2], [1], [1], [2], [0, 0, 0, 1, 1, 2], [0], [0]>} : vector<8x16x8xbf16>, vector<8x8x32xbf16>, vector<8x16x32xf32> -> vector<8x16x32xf32>
    "tpu.trace_stop"() : () -> ()
    %83 = arith.truncf %65 : vector<128x32xf32> to vector<128x32xbf16>
    %c1_52 = arith.constant 1 : index
    %c0_53 = arith.constant 0 : index
    %c0_54 = arith.constant 0 : index
    %84 = vector.load %arg8[%c1_52, %c0_53, %c0_54] : memref<3x32x32xbf16, #tpu.memory_space<vmem>>, vector<1x32x32xbf16>
    %85 = vector.shape_cast %84 : vector<1x32x32xbf16> to vector<32x32xbf16>
    %cst_55 = arith.constant dense<0.000000e+00> : vector<128x32xf32>
    %86 = tpu.matmul %83, %85, %cst_55 {dimension_numbers = #tpu.dot_dimension_numbers<[1], [0], [0], [1], [0, 0, 1, 1], [], []>} : vector<128x32xbf16>, vector<32x32xbf16>, vector<128x32xf32> -> vector<128x32xf32>
    %87 = vector.shape_cast %82 : vector<8x16x32xf32> to vector<128x32xf32>
    %88 = arith.truncf %87 : vector<128x32xf32> to vector<128x32xbf16>
    %c1_56 = arith.constant 1 : index
    %c0_57 = arith.constant 0 : index
    %c0_58 = arith.constant 0 : index
    %89 = vector.load %arg9[%c1_56, %c0_57, %c0_58] : memref<3x32x32xbf16, #tpu.memory_space<vmem>>, vector<1x32x32xbf16>
    %90 = vector.shape_cast %89 : vector<1x32x32xbf16> to vector<32x32xbf16>
    %cst_59 = arith.constant dense<0.000000e+00> : vector<128x32xf32>
    %91 = tpu.matmul %88, %90, %cst_59 {dimension_numbers = #tpu.dot_dimension_numbers<[1], [0], [0], [1], [0, 0, 1, 1], [], []>} : vector<128x32xbf16>, vector<32x32xbf16>, vector<128x32xf32> -> vector<128x32xf32>
    %92 = arith.addf %86, %91 : vector<128x32xf32>
    %c1_60 = arith.constant 1 : index
    %c0_61 = arith.constant 0 : index
    %c0_62 = arith.constant 0 : index
    %93 = vector.load %arg10[%c1_60, %c0_61, %c0_62] : memref<3x1x32xf32, #tpu.memory_space<vmem>>, vector<1x1x32xf32>
    %94 = vector.shape_cast %93 : vector<1x1x32xf32> to vector<1x32xf32>
    %95 = vector.broadcast %94 : vector<1x32xf32> to vector<128x32xf32>
    %96 = arith.addf %92, %95 : vector<128x32xf32>
    %cst_63 = arith.constant 0.000000e+00 : f32
    %97 = vector.broadcast %cst_63 : f32 to vector<128x32xf32>
    %98 = arith.maximumf %96, %97 : vector<128x32xf32>
    %99 = vector.shape_cast %98 : vector<128x32xf32> to vector<8x16x32xf32>
    %100 = arith.truncf %99 : vector<8x16x32xf32> to vector<8x16x32xbf16>
    "tpu.trace_start"() <{level = 10 : i32, message = "ben,bnf->bef"}> : () -> ()
    %cst_64 = arith.constant dense<0.000000e+00> : vector<8x8x32xf32>
    %101 = tpu.matmul %18, %100, %cst_64 {dimension_numbers = #tpu.dot_dimension_numbers<[2], [1], [1], [2], [0, 0, 0, 1, 1, 2], [0], [0]>} : vector<8x8x16xbf16>, vector<8x16x32xbf16>, vector<8x8x32xf32> -> vector<8x8x32xf32>
    "tpu.trace_stop"() : () -> ()
    %102 = vector.shape_cast %101 : vector<8x8x32xf32> to vector<64x32xf32>
    %103 = arith.truncf %102 : vector<64x32xf32> to vector<64x32xbf16>
    %c2 = arith.constant 2 : index
    %c0_65 = arith.constant 0 : index
    %c0_66 = arith.constant 0 : index
    %104 = vector.load %arg6[%c2, %c0_65, %c0_66] : memref<3x32x32xbf16, #tpu.memory_space<vmem>>, vector<1x32x32xbf16>
    %105 = vector.shape_cast %104 : vector<1x32x32xbf16> to vector<32x32xbf16>
    %cst_67 = arith.constant dense<0.000000e+00> : vector<64x32xf32>
    %106 = tpu.matmul %103, %105, %cst_67 {dimension_numbers = #tpu.dot_dimension_numbers<[1], [0], [0], [1], [0, 0, 1, 1], [], []>} : vector<64x32xbf16>, vector<32x32xbf16>, vector<64x32xf32> -> vector<64x32xf32>
    %c2_68 = arith.constant 2 : index
    %c0_69 = arith.constant 0 : index
    %c0_70 = arith.constant 0 : index
    %107 = vector.load %arg7[%c2_68, %c0_69, %c0_70] : memref<3x1x32xf32, #tpu.memory_space<vmem>>, vector<1x1x32xf32>
    %108 = vector.shape_cast %107 : vector<1x1x32xf32> to vector<1x32xf32>
    %109 = vector.broadcast %108 : vector<1x32xf32> to vector<64x32xf32>
    %110 = arith.addf %106, %109 : vector<64x32xf32>
    %cst_71 = arith.constant 0.000000e+00 : f32
    %111 = vector.broadcast %cst_71 : f32 to vector<64x32xf32>
    %112 = arith.maximumf %110, %111 : vector<64x32xf32>
    %113 = vector.shape_cast %112 : vector<64x32xf32> to vector<8x8x32xf32>
    %114 = arith.truncf %113 : vector<8x8x32xf32> to vector<8x8x32xbf16>
    "tpu.trace_start"() <{level = 10 : i32, message = "bne,bef->bnf"}> : () -> ()
    %cst_72 = arith.constant dense<0.000000e+00> : vector<8x16x32xf32>
    %115 = tpu.matmul %24, %114, %cst_72 {dimension_numbers = #tpu.dot_dimension_numbers<[2], [1], [1], [2], [0, 0, 0, 1, 1, 2], [0], [0]>} : vector<8x16x8xbf16>, vector<8x8x32xbf16>, vector<8x16x32xf32> -> vector<8x16x32xf32>
    "tpu.trace_stop"() : () -> ()
    %116 = arith.truncf %98 : vector<128x32xf32> to vector<128x32xbf16>
    %c2_73 = arith.constant 2 : index
    %c0_74 = arith.constant 0 : index
    %c0_75 = arith.constant 0 : index
    %117 = vector.load %arg8[%c2_73, %c0_74, %c0_75] : memref<3x32x32xbf16, #tpu.memory_space<vmem>>, vector<1x32x32xbf16>
    %118 = vector.shape_cast %117 : vector<1x32x32xbf16> to vector<32x32xbf16>
    %cst_76 = arith.constant dense<0.000000e+00> : vector<128x32xf32>
    %119 = tpu.matmul %116, %118, %cst_76 {dimension_numbers = #tpu.dot_dimension_numbers<[1], [0], [0], [1], [0, 0, 1, 1], [], []>} : vector<128x32xbf16>, vector<32x32xbf16>, vector<128x32xf32> -> vector<128x32xf32>
    %120 = vector.shape_cast %115 : vector<8x16x32xf32> to vector<128x32xf32>
    %121 = arith.truncf %120 : vector<128x32xf32> to vector<128x32xbf16>
    %c2_77 = arith.constant 2 : index
    %c0_78 = arith.constant 0 : index
    %c0_79 = arith.constant 0 : index
    %122 = vector.load %arg9[%c2_77, %c0_78, %c0_79] : memref<3x32x32xbf16, #tpu.memory_space<vmem>>, vector<1x32x32xbf16>
    %123 = vector.shape_cast %122 : vector<1x32x32xbf16> to vector<32x32xbf16>
    %cst_80 = arith.constant dense<0.000000e+00> : vector<128x32xf32>
    %124 = tpu.matmul %121, %123, %cst_80 {dimension_numbers = #tpu.dot_dimension_numbers<[1], [0], [0], [1], [0, 0, 1, 1], [], []>} : vector<128x32xbf16>, vector<32x32xbf16>, vector<128x32xf32> -> vector<128x32xf32>
    %125 = arith.addf %119, %124 : vector<128x32xf32>
    %c2_81 = arith.constant 2 : index
    %c0_82 = arith.constant 0 : index
    %c0_83 = arith.constant 0 : index
    %126 = vector.load %arg10[%c2_81, %c0_82, %c0_83] : memref<3x1x32xf32, #tpu.memory_space<vmem>>, vector<1x1x32xf32>
    %127 = vector.shape_cast %126 : vector<1x1x32xf32> to vector<1x32xf32>
    %128 = vector.broadcast %127 : vector<1x32xf32> to vector<128x32xf32>
    %129 = arith.addf %125, %128 : vector<128x32xf32>
    %cst_84 = arith.constant 0.000000e+00 : f32
    %130 = vector.broadcast %cst_84 : f32 to vector<128x32xf32>
    %131 = arith.maximumf %129, %130 : vector<128x32xf32>
    %132 = vector.shape_cast %131 : vector<128x32xf32> to vector<8x16x32xf32>
    %c0_85 = arith.constant 0 : index
    %c0_86 = arith.constant 0 : index
    %c0_87 = arith.constant 0 : index
    %133 = vector.load %arg11[%c0_85, %c0_86, %c0_87] : memref<8x16x32xf32, #tpu.memory_space<vmem>>, vector<8x16x32xf32>
    tpu.vector_store %arg11[%c0_85, %c0_86, %c0_87], %132 {strides = array<i32>} : memref<8x16x32xf32, #tpu.memory_space<vmem>>, vector<8x16x32xf32>,
    return
  }
  func.func @transform_0(%arg0: i32) -> (i32, i32, i32) {
    %c0_i32 = arith.constant 0 : i32
    %c0_i32_0 = arith.constant 0 : i32
    %c0_i32_1 = arith.constant 0 : i32
    return %arg0, %c0_i32, %c0_i32_0 : i32, i32, i32
  }
  func.func @transform_1(%arg0: i32) -> (i32, i32, i32) {
    %c0_i32 = arith.constant 0 : i32
    %c0_i32_0 = arith.constant 0 : i32
    %c0_i32_1 = arith.constant 0 : i32
    return %arg0, %c0_i32, %c0_i32_0 : i32, i32, i32
  }
  func.func @transform_2(%arg0: i32) -> (i32, i32, i32) {
    %c0_i32 = arith.constant 0 : i32
    %c0_i32_0 = arith.constant 0 : i32
    %c0_i32_1 = arith.constant 0 : i32
    return %arg0, %c0_i32, %c0_i32_0 : i32, i32, i32
  }
  func.func @transform_3(%arg0: i32) -> (i32, i32) {
    %c0_i32 = arith.constant 0 : i32
    %c0_i32_0 = arith.constant 0 : i32
    %c0_i32_1 = arith.constant 0 : i32
    return %c0_i32, %c0_i32_0 : i32, i32
  }
  func.func @transform_4(%arg0: i32) -> (i32, i32) {
    %c0_i32 = arith.constant 0 : i32
    %c0_i32_0 = arith.constant 0 : i32
    %c0_i32_1 = arith.constant 0 : i32
    return %c0_i32, %c0_i32_0 : i32, i32
  }
  func.func @transform_5(%arg0: i32) -> (i32, i32, i32) {
    %c0_i32 = arith.constant 0 : i32
    %c0_i32_0 = arith.constant 0 : i32
    %c0_i32_1 = arith.constant 0 : i32
    %c0_i32_2 = arith.constant 0 : i32
    return %c0_i32, %c0_i32_0, %c0_i32_1 : i32, i32, i32
  }
  func.func @transform_6(%arg0: i32) -> (i32, i32, i32) {
    %c0_i32 = arith.constant 0 : i32
    %c0_i32_0 = arith.constant 0 : i32
    %c0_i32_1 = arith.constant 0 : i32
    %c0_i32_2 = arith.constant 0 : i32
    return %c0_i32, %c0_i32_0, %c0_i32_1 : i32, i32, i32
  }
  func.func @transform_7(%arg0: i32) -> (i32, i32, i32) {
    %c0_i32 = arith.constant 0 : i32
    %c0_i32_0 = arith.constant 0 : i32
    %c0_i32_1 = arith.constant 0 : i32
    %c0_i32_2 = arith.constant 0 : i32
    return %c0_i32, %c0_i32_0, %c0_i32_1 : i32, i32, i32
  }
  func.func @transform_8(%arg0: i32) -> (i32, i32, i32) {
    %c0_i32 = arith.constant 0 : i32
    %c0_i32_0 = arith.constant 0 : i32
    %c0_i32_1 = arith.constant 0 : i32
    %c0_i32_2 = arith.constant 0 : i32
    return %c0_i32, %c0_i32_0, %c0_i32_1 : i32, i32, i32
  }
  func.func @transform_9(%arg0: i32) -> (i32, i32, i32) {
    %c0_i32 = arith.constant 0 : i32
    %c0_i32_0 = arith.constant 0 : i32
    %c0_i32_1 = arith.constant 0 : i32
    %c0_i32_2 = arith.constant 0 : i32
    return %c0_i32, %c0_i32_0, %c0_i32_1 : i32, i32, i32
  }
  func.func @transform_10(%arg0: i32) -> (i32, i32, i32) {
    %c0_i32 = arith.constant 0 : i32
    %c0_i32_0 = arith.constant 0 : i32
    %c0_i32_1 = arith.constant 0 : i32
    return %arg0, %c0_i32, %c0_i32_0 : i32, i32, i32
  }
}

</mosaic_0001>

<llo_original>
// kernel: tpu_custom_call.1
$region0: #{tpu_custom_call.1}
  #allocation0 [shape = 'u32[]', space=smem, size = 0x4, offset = 0x4, fixed_abs, tag = 'smem constant byte address 0x4 - core index']
  #allocation1 [shape = 'u32[144,128]{1,0:T(1,128)}', space=vmem, size = 0x12000, scoped, tag = 'internal scratch']
  %s0 = inlined_call_operand.vmem [shape: f32[16,16,4], index: 0, kind: input, shape index: {}]
  %s1 = inlined_call_operand.vmem [shape: s8[16,8,16], index: 1, kind: input, shape index: {}]
  %s2 = inlined_call_operand.vmem [shape: s8[16,16,8], index: 2, kind: input, shape index: {}]
  %s3 = inlined_call_operand.vmem [shape: bf16[4,32], index: 3, kind: input, shape index: {}]
  %s4 = inlined_call_operand.vmem [shape: f32[1,32], index: 4, kind: input, shape index: {}]
  %s5 = inlined_call_operand.vmem [shape: bf16[3,32,32], index: 5, kind: input, shape index: {}]
  %s6 = inlined_call_operand.vmem [shape: f32[3,1,32], index: 6, kind: input, shape index: {}]
  %s7 = inlined_call_operand.vmem [shape: bf16[3,32,32], index: 7, kind: input, shape index: {}]
  %s8 = inlined_call_operand.vmem [shape: bf16[3,32,32], index: 8, kind: input, shape index: {}]
  %s9 = inlined_call_operand.vmem [shape: f32[3,1,32], index: 9, kind: input, shape index: {}]
  %s10 = inlined_call_operand.hbm [shape: f32[16,16,32], index: 10, kind: output, shape index: {}]
  %s11 = sld [smem:[#allocation0]]
  $region73: #{tpu_custom_call.1} parent=0
    _
  %s13 = ssub.s32 1, %s11
  %s14 = scalar_select 0, %s13, %s11
  $region1: #{tpu_custom_call.1} parent=0
    #allocation2 [shape = 'u8[131072]{0}', space=vmem, size = 0x20000, scoped, tag = 'output window, operand 0']
    #allocation3 [shape = 's32[2]{0}', space=sflag, size = 0x8, scoped, tag = 'scoped memory for tpu_custom_call.1']
    %15 = vsyncpa [#allocation3], 0
    %s16 = scalar_lea.sflag [#allocation3], 1
    %17 = vsyncpa %s16, 0
    loop: start=0, step=1, limit=4
    $region2: #{tpu_custom_call.1} parent=1 // loop_pre_header
      _
    $region3: #{tpu_custom_call.1} parent=1 // loop_header
      %s19 = sphi 0, %s23
      %p20 = scmp.ge.s32.totalorder %s19, 4
      %s29 = sphi 0, %s31
      %s32 = sphi 0, %s29
      %s33 = sphi 0, %s32
      %s49 = sphi 0, %s33
      %s55 = sphi 0, %s57
      %s58 = sphi 0, %s55
      %s59 = sphi 0, %s58
      %s75 = sphi 0, %s59
      %s81 = sphi 0, %s83
      %s84 = sphi 0, %s81
      %s85 = sphi 0, %s84
      %s101 = sphi 0, %s85
      %s105 = sphi 0, %s105
      %s107 = sphi 0, %s105
      %s108 = sphi 0, %s107
      %s122 = sphi 0, %s108
      %s126 = sphi 0, %s126
      %s128 = sphi 0, %s126
      %s129 = sphi 0, %s128
      %s143 = sphi 0, %s129
      %s147 = sphi 0, %s147
      %s149 = sphi 0, %s147
      %s150 = sphi 0, %s149
      %s164 = sphi 0, %s150
      %s168 = sphi 0, %s168
      %s170 = sphi 0, %s168
      %s171 = sphi 0, %s170
      %s185 = sphi 0, %s171
      %s189 = sphi 0, %s189
      %s191 = sphi 0, %s189
      %s192 = sphi 0, %s191
      %s206 = sphi 0, %s192
      %s210 = sphi 0, %s210
      %s212 = sphi 0, %s210
      %s213 = sphi 0, %s212
      %s227 = sphi 0, %s213
      %s231 = sphi 0, %s231
      %s233 = sphi 0, %s231
      %s234 = sphi 0, %s233
      %s248 = sphi 0, %s234
      %s254 = sphi 0, %s256
      %s257 = sphi 0, %s254
      %s258 = sphi 0, %s257
      %s274 = sphi 0, %s258
    $region4: #{tpu_custom_call.1} parent=1 // loop_header_branch
      %22 = sbr.rel (%p20) target = $region8
    $region5: #{tpu_custom_call.1} parent=1 // loop_body
      %s24 = ssub.s32 %s19, 1
      %s25 = ssub.s32 %s19, 2
      %s26 = sadd.s32 %s19, 1
      %s27 = ssub.s32 %s19, %s26
      %p28 = scmp.eq.s32.totalorder %s27, 0
      %s30 = sadd.s32 %s29, 1
      %s31 = scalar_select %p28, %s29, %s30
      %p34 = pneg %p28
      %p35 = scmp.eq.s32.totalorder %s19, 1
      %p36 = por %p34, %p35
      %p37 = scmp.ne.s32.totalorder %s29, %s32
      %p38 = scmp.eq.s32.totalorder %s19, 0
      %p39 = por %p37, %p38
      %p40 = scmp.ne.s32.totalorder %s29, %s32
      %p41 = scmp.eq.s32.totalorder %s24, 1
      %p42 = por %p40, %p41
      %p43 = scmp.ne.s32.totalorder %s32, %s33
      %p44 = scmp.eq.s32.totalorder %s24, 0
      %p45 = por %p43, %p44
      %p46 = scmp.ne.s32.totalorder %s32, %s33
      %p47 = scmp.eq.s32.totalorder %s25, 1
      %p48 = por %p46, %p47
      %p50 = scmp.ne.s32.totalorder %s33, %s49
      %p51 = scmp.eq.s32.totalorder %s25, 0
      %p52 = por %p50, %p51
      %s53 = ssub.s32 %s19, %s26
      %p54 = scmp.eq.s32.totalorder %s53, 0
      %s56 = sadd.s32 %s55, 1
      %s57 = scalar_select %p54, %s55, %s56
      %p60 = pneg %p54
      %p61 = scmp.eq.s32.totalorder %s19, 1
      %p62 = por %p60, %p61
      %p63 = scmp.ne.s32.totalorder %s55, %s58
      %p64 = scmp.eq.s32.totalorder %s19, 0
      %p65 = por %p63, %p64
      %p66 = scmp.ne.s32.totalorder %s55, %s58
      %p67 = scmp.eq.s32.totalorder %s24, 1
      %p68 = por %p66, %p67
      %p69 = scmp.ne.s32.totalorder %s58, %s59
      %p70 = scmp.eq.s32.totalorder %s24, 0
      %p71 = por %p69, %p70
      %p72 = scmp.ne.s32.totalorder %s58, %s59
      %p73 = scmp.eq.s32.totalorder %s25, 1
      %p74 = por %p72, %p73
      %p76 = scmp.ne.s32.totalorder %s59, %s75
      %p77 = scmp.eq.s32.totalorder %s25, 0
      %p78 = por %p76, %p77
      %s79 = ssub.s32 %s19, %s26
      %p80 = scmp.eq.s32.totalorder %s79, 0
      %s82 = sadd.s32 %s81, 1
      %s83 = scalar_select %p80, %s81, %s82
      %p86 = pneg %p80
      %p87 = scmp.eq.s32.totalorder %s19, 1
      %p88 = por %p86, %p87
      %p89 = scmp.ne.s32.totalorder %s81, %s84
      %p90 = scmp.eq.s32.totalorder %s19, 0
      %p91 = por %p89, %p90
      %p92 = scmp.ne.s32.totalorder %s81, %s84
      %p93 = scmp.eq.s32.totalorder %s24, 1
      %p94 = por %p92, %p93
      %p95 = scmp.ne.s32.totalorder %s84, %s85
      %p96 = scmp.eq.s32.totalorder %s24, 0
      %p97 = por %p95, %p96
      %p98 = scmp.ne.s32.totalorder %s84, %s85
      %p99 = scmp.eq.s32.totalorder %s25, 1
      %p100 = por %p98, %p99
      %p102 = scmp.ne.s32.totalorder %s85, %s101
      %p103 = scmp.eq.s32.totalorder %s25, 0
      %p104 = por %p102, %p103
      %s106 = sadd.s32 %s105, 1
      %p109 = scmp.eq.s32.totalorder %s19, 1
      %p110 = scmp.ne.s32.totalorder %s105, %s107
      %p111 = scmp.eq.s32.totalorder %s19, 0
      %p112 = por %p110, %p111
      %p113 = scmp.ne.s32.totalorder %s105, %s107
      %p114 = scmp.eq.s32.totalorder %s24, 1
      %p115 = por %p113, %p114
      %p116 = scmp.ne.s32.totalorder %s107, %s108
      %p117 = scmp.eq.s32.totalorder %s24, 0
      %p118 = por %p116, %p117
      %p119 = scmp.ne.s32.totalorder %s107, %s108
      %p120 = scmp.eq.s32.totalorder %s25, 1
      %p121 = por %p119, %p120
      %p123 = scmp.ne.s32.totalorder %s108, %s122
      %p124 = scmp.eq.s32.totalorder %s25, 0
      %p125 = por %p123, %p124
      %s127 = sadd.s32 %s126, 1
      %p130 = scmp.eq.s32.totalorder %s19, 1
      %p131 = scmp.ne.s32.totalorder %s126, %s128
      %p132 = scmp.eq.s32.totalorder %s19, 0
      %p133 = por %p131, %p132
      %p134 = scmp.ne.s32.totalorder %s126, %s128
      %p135 = scmp.eq.s32.totalorder %s24, 1
      %p136 = por %p134, %p135
      %p137 = scmp.ne.s32.totalorder %s128, %s129
      %p138 = scmp.eq.s32.totalorder %s24, 0
      %p139 = por %p137, %p138
      %p140 = scmp.ne.s32.totalorder %s128, %s129
      %p141 = scmp.eq.s32.totalorder %s25, 1
      %p142 = por %p140, %p141
      %p144 = scmp.ne.s32.totalorder %s129, %s143
      %p145 = scmp.eq.s32.totalorder %s25, 0
      %p146 = por %p144, %p145
      %s148 = sadd.s32 %s147, 1
      %p151 = scmp.eq.s32.totalorder %s19, 1
      %p152 = scmp.ne.s32.totalorder %s147, %s149
      %p153 = scmp.eq.s32.totalorder %s19, 0
      %p154 = por %p152, %p153
      %p155 = scmp.ne.s32.totalorder %s147, %s149
      %p156 = scmp.eq.s32.totalorder %s24, 1
      %p157 = por %p155, %p156
      %p158 = scmp.ne.s32.totalorder %s149, %s150
      %p159 = scmp.eq.s32.totalorder %s24, 0
      %p160 = por %p158, %p159
      %p161 = scmp.ne.s32.totalorder %s149, %s150
      %p162 = scmp.eq.s32.totalorder %s25, 1
      %p163 = por %p161, %p162
      %p165 = scmp.ne.s32.totalorder %s150, %s164
      %p166 = scmp.eq.s32.totalorder %s25, 0
      %p167 = por %p165, %p166
      %s169 = sadd.s32 %s168, 1
      %p172 = scmp.eq.s32.totalorder %s19, 1
      %p173 = scmp.ne.s32.totalorder %s168, %s170
      %p174 = scmp.eq.s32.totalorder %s19, 0
      %p175 = por %p173, %p174
      %p176 = scmp.ne.s32.totalorder %s168, %s170
      %p177 = scmp.eq.s32.totalorder %s24, 1
      %p178 = por %p176, %p177
      %p179 = scmp.ne.s32.totalorder %s170, %s171
      %p180 = scmp.eq.s32.totalorder %s24, 0
      %p181 = por %p179, %p180
      %p182 = scmp.ne.s32.totalorder %s170, %s171
      %p183 = scmp.eq.s32.totalorder %s25, 1
      %p184 = por %p182, %p183
      %p186 = scmp.ne.s32.totalorder %s171, %s185
      %p187 = scmp.eq.s32.totalorder %s25, 0
      %p188 = por %p186, %p187
      %s190 = sadd.s32 %s189, 1
      %p193 = scmp.eq.s32.totalorder %s19, 1
      %p194 = scmp.ne.s32.totalorder %s189, %s191
      %p195 = scmp.eq.s32.totalorder %s19, 0
      %p196 = por %p194, %p195
      %p197 = scmp.ne.s32.totalorder %s189, %s191
      %p198 = scmp.eq.s32.totalorder %s24, 1
      %p199 = por %p197, %p198
      %p200 = scmp.ne.s32.totalorder %s191, %s192
      %p201 = scmp.eq.s32.totalorder %s24, 0
      %p202 = por %p200, %p201
      %p203 = scmp.ne.s32.totalorder %s191, %s192
      %p204 = scmp.eq.s32.totalorder %s25, 1
      %p205 = por %p203, %p204
      %p207 = scmp.ne.s32.totalorder %s192, %s206
      %p208 = scmp.eq.s32.totalorder %s25, 0
      %p209 = por %p207, %p208
      %s211 = sadd.s32 %s210, 1
      %p214 = scmp.eq.s32.totalorder %s19, 1
      %p215 = scmp.ne.s32.totalorder %s210, %s212
      %p216 = scmp.eq.s32.totalorder %s19, 0
      %p217 = por %p215, %p216
      %p218 = scmp.ne.s32.totalorder %s210, %s212
      %p219 = scmp.eq.s32.totalorder %s24, 1
      %p220 = por %p218, %p219
      %p221 = scmp.ne.s32.totalorder %s212, %s213
      %p222 = scmp.eq.s32.totalorder %s24, 0
      %p223 = por %p221, %p222
      %p224 = scmp.ne.s32.totalorder %s212, %s213
      %p225 = scmp.eq.s32.totalorder %s25, 1
      %p226 = por %p224, %p225
      %p228 = scmp.ne.s32.totalorder %s213, %s227
      %p229 = scmp.eq.s32.totalorder %s25, 0
      %p230 = por %p228, %p229
      %s232 = sadd.s32 %s231, 1
      %p235 = scmp.eq.s32.totalorder %s19, 1
      %p236 = scmp.ne.s32.totalorder %s231, %s233
      %p237 = scmp.eq.s32.totalorder %s19, 0
      %p238 = por %p236, %p237
      %p239 = scmp.ne.s32.totalorder %s231, %s233
      %p240 = scmp.eq.s32.totalorder %s24, 1
      %p241 = por %p239, %p240
      %p242 = scmp.ne.s32.totalorder %s233, %s234
      %p243 = scmp.eq.s32.totalorder %s24, 0
      %p244 = por %p242, %p243
      %p245 = scmp.ne.s32.totalorder %s233, %s234
      %p246 = scmp.eq.s32.totalorder %s25, 1
      %p247 = por %p245, %p246
      %p249 = scmp.ne.s32.totalorder %s234, %s248
      %p250 = scmp.eq.s32.totalorder %s25, 0
      %p251 = por %p249, %p250
      %s252 = ssub.s32 %s19, %s26
      %p253 = scmp.eq.s32.totalorder %s252, 0
      %s255 = sadd.s32 %s254, 1
      %s256 = scalar_select %p253, %s254, %s255
      %p259 = pneg %p253
      %p260 = scmp.eq.s32.totalorder %s19, 1
      %p261 = por %p259, %p260
      %p262 = scmp.ne.s32.totalorder %s254, %s257
      %p263 = scmp.eq.s32.totalorder %s19, 0
      %p264 = por %p262, %p263
      %p265 = scmp.ne.s32.totalorder %s254, %s257
      %p266 = scmp.eq.s32.totalorder %s24, 1
      %p267 = por %p265, %p266
      %p268 = scmp.ne.s32.totalorder %s257, %s258
      %p269 = scmp.eq.s32.totalorder %s24, 0
      %p270 = por %p268, %p269
      %p271 = scmp.ne.s32.totalorder %s257, %s258
      %p272 = scmp.eq.s32.totalorder %s25, 1
      %p273 = por %p271, %p272
      %p275 = scmp.ne.s32.totalorder %s258, %s274
      %p276 = scmp.eq.s32.totalorder %s25, 0
      %p277 = por %p275, %p276
      %p278 = scmp.le.s32.totalorder 1, %s19
      %p279 = scmp.lt.s32.totalorder %s19, 3
      %p280 = pnand %p278, %p279
      %p281 = pneg %p280
      // Predicated region
      $region9: #{tpu_custom_call.1} parent=5 // pred_check
        _
      $region10: #{tpu_custom_call.1} parent=5 // pred_check_branch
        %283 = sbr.rel (%p280) target = $region12
      $region11: #{tpu_custom_call.1} parent=5 // pred_region
        %s284 = ssub.s32 %s19, 1
        // Predicated region
        $region13: #{tpu_custom_call.1} parent=11 // pred_check
          %p285 = pneg %p118
        $region14: #{tpu_custom_call.1} parent=11 // pred_check_branch
          %287 = sbr.rel (%p285) target = $region16
        $region15: #{tpu_custom_call.1} parent=11 // pred_region
          _
        $region16: #{tpu_custom_call.1} parent=11 // pred_fallthru
          _
        // Predicated region
        $region17: #{tpu_custom_call.1} parent=11 // pred_check
          %p288 = pneg %p139
        $region18: #{tpu_custom_call.1} parent=11 // pred_check_branch
          %290 = sbr.rel (%p288) target = $region20
        $region19: #{tpu_custom_call.1} parent=11 // pred_region
          _
        $region20: #{tpu_custom_call.1} parent=11 // pred_fallthru
          _
        // Predicated region
        $region21: #{tpu_custom_call.1} parent=11 // pred_check
          %p291 = pneg %p160
        $region22: #{tpu_custom_call.1} parent=11 // pred_check_branch
          %293 = sbr.rel (%p291) target = $region24
        $region23: #{tpu_custom_call.1} parent=11 // pred_region
          _
        $region24: #{tpu_custom_call.1} parent=11 // pred_fallthru
          _
        // Predicated region
        $region25: #{tpu_custom_call.1} parent=11 // pred_check
          %p294 = pneg %p181
        $region26: #{tpu_custom_call.1} parent=11 // pred_check_branch
          %296 = sbr.rel (%p294) target = $region28
        $region27: #{tpu_custom_call.1} parent=11 // pred_region
          _
        $region28: #{tpu_custom_call.1} parent=11 // pred_fallthru
          _
        // Predicated region
        $region29: #{tpu_custom_call.1} parent=11 // pred_check
          %p297 = pneg %p202
        $region30: #{tpu_custom_call.1} parent=11 // pred_check_branch
          %299 = sbr.rel (%p297) target = $region32
        $region31: #{tpu_custom_call.1} parent=11 // pred_region
          _
        $region32: #{tpu_custom_call.1} parent=11 // pred_fallthru
          _
        // Predicated region
        $region33: #{tpu_custom_call.1} parent=11 // pred_check
          %p300 = pneg %p223
        $region34: #{tpu_custom_call.1} parent=11 // pred_check_branch
          %302 = sbr.rel (%p300) target = $region36
        $region35: #{tpu_custom_call.1} parent=11 // pred_region
          _
        $region36: #{tpu_custom_call.1} parent=11 // pred_fallthru
          _
        // Predicated region
        $region37: #{tpu_custom_call.1} parent=11 // pred_check
          %p303 = pneg %p244
        $region38: #{tpu_custom_call.1} parent=11 // pred_check_branch
          %305 = sbr.rel (%p303) target = $region40
        $region39: #{tpu_custom_call.1} parent=11 // pred_region
          _
        $region40: #{tpu_custom_call.1} parent=11 // pred_fallthru
          _
      $region12: #{tpu_custom_call.1} parent=5 // pred_fallthru
        _
      %p306 = scmp.lt.s32.totalorder %s19, 2
      // Predicated region
      $region41: #{tpu_custom_call.1} parent=5 // pred_check
        %p307 = pneg %p306
      $region42: #{tpu_custom_call.1} parent=5 // pred_check_branch
        %309 = sbr.rel (%p307) target = $region44
      $region43: #{tpu_custom_call.1} parent=5 // pred_region
        // Predicated region
        $region45: #{tpu_custom_call.1} parent=43 // pred_check
          %p310 = pneg %p39
        $region46: #{tpu_custom_call.1} parent=43 // pred_check_branch
          %312 = sbr.rel (%p310) target = $region48
        $region47: #{tpu_custom_call.1} parent=43 // pred_region
          %s313 = smul.u32 8, %s19
          %p314 = scmp.lt.s32.totalorder %s313, 15
          %s315 = scalar_select %p314, %s313, 15
          %s316 = smul.addr %s315, 2
          %s317 = smul.addr %s316, 8
          %s318 = scalar_lea.vmem %s0, %s317
          %s319 = smul.u32 8, %s19
        $region48: #{tpu_custom_call.1} parent=43 // pred_fallthru
          _
        // Predicated region
        $region49: #{tpu_custom_call.1} parent=43 // pred_check
          %p320 = pneg %p65
        $region50: #{tpu_custom_call.1} parent=43 // pred_check_branch
          %322 = sbr.rel (%p320) target = $region52
        $region51: #{tpu_custom_call.1} parent=43 // pred_region
          %s323 = smul.u32 8, %s19
          %p324 = scmp.lt.s32.totalorder %s323, 15
          %s325 = scalar_select %p324, %s323, 15
          %s326 = smul.addr %s325, 2
          %s327 = scalar_lea.vmem %s1, %s326
          %s328 = smul.u32 8, %s19
        $region52: #{tpu_custom_call.1} parent=43 // pred_fallthru
          _
        // Predicated region
        $region53: #{tpu_custom_call.1} parent=43 // pred_check
          %p329 = pneg %p91
        $region54: #{tpu_custom_call.1} parent=43 // pred_check_branch
          %331 = sbr.rel (%p329) target = $region56
        $region55: #{tpu_custom_call.1} parent=43 // pred_region
          %s332 = smul.u32 8, %s19
          %p333 = scmp.lt.s32.totalorder %s332, 15
          %s334 = scalar_select %p333, %s332, 15
          %s335 = smul.addr %s334, 2
          %s336 = smul.addr %s335, 2
          %s337 = scalar_lea.vmem %s2, %s336
          %s338 = smul.u32 8, %s19
        $region56: #{tpu_custom_call.1} parent=43 // pred_fallthru
          _
      $region44: #{tpu_custom_call.1} parent=5 // pred_fallthru
        _
      %p339 = scmp.le.s32.totalorder 1, %s19
      %p340 = scmp.lt.s32.totalorder %s19, 3
      %p341 = pnand %p339, %p340
      %p342 = pneg %p341
      // Predicated region
      $region57: #{tpu_custom_call.1} parent=5 // pred_check
        _
      $region58: #{tpu_custom_call.1} parent=5 // pred_check_branch
        %344 = sbr.rel (%p341) target = $region60
      $region59: #{tpu_custom_call.1} parent=5 // pred_region
        %s345 = ssub.s32 %s19, 1
        %s346 = smul.u32 8, %s24
        %p347 = scmp.lt.s32.totalorder %s346, 15
        %s348 = scalar_select %p347, %s346, 15
        %s349 = smul.addr %s348, 2
        %s350 = smul.addr %s349, 8
        %s351 = scalar_lea.vmem %s0, %s350
        %p352 = pneg %p45
        %p353 = pneg %p42
        %s354 = smul.u32 8, %s24
        %p355 = scmp.lt.s32.totalorder %s354, 15
        %s356 = scalar_select %p355, %s354, 15
        %s357 = smul.addr %s356, 2
        %s358 = scalar_lea.vmem %s1, %s357
        %p359 = pneg %p71
        %p360 = pneg %p68
        %s361 = smul.u32 8, %s24
        %p362 = scmp.lt.s32.totalorder %s361, 15
        %s363 = scalar_select %p362, %s361, 15
        %s364 = smul.addr %s363, 2
        %s365 = smul.addr %s364, 2
        %s366 = scalar_lea.vmem %s2, %s365
        %p367 = pneg %p97
        %p368 = pneg %p94
        %p369 = pneg %p118
        %p370 = pneg %p115
        %p371 = pneg %p139
        %p372 = pneg %p136
        %p373 = pneg %p160
        %p374 = pneg %p157
        %p375 = pneg %p181
        %p376 = pneg %p178
        %p377 = pneg %p202
        %p378 = pneg %p199
        %p379 = pneg %p223
        %p380 = pneg %p220
        %p381 = pneg %p244
        %p382 = pneg %p241
        %p383 = pneg %p270
        %p384 = pneg %p267
        %s385 = sand.u32 %s257, 1
        %s386 = scalar_lea.sflag [#allocation3], %s385
        %s387 = sand.u32 %s257, 1
        %s388 = smul.addr %s387, 128
        %s389 = scalar_lea.vmem [#allocation2], %s388
        %s390 = smul.u32 8, %s24
        %p391 = scmp.lt.s32.totalorder %s390, 15
        %s392 = scalar_select %p391, %s390, 15
        %s393 = smul.addr %s392, 2
        %s394 = smul.addr %s393, 8
        %s395 = scalar_lea.vmem %s0, %s394
        %s396 = smul.u32 8, %s24
        %s397 = smul.u32 8, %s24
        %p398 = scmp.lt.s32.totalorder %s397, 15
        %s399 = scalar_select %p398, %s397, 15
        %s400 = smul.addr %s399, 2
        %s401 = scalar_lea.vmem %s1, %s400
        %s402 = smul.u32 8, %s24
        %s403 = smul.u32 8, %s24
        %p404 = scmp.lt.s32.totalorder %s403, 15
        %s405 = scalar_select %p404, %s403, 15
        %s406 = smul.addr %s405, 2
        %s407 = smul.addr %s406, 2
        %s408 = scalar_lea.vmem %s2, %s407
        %s409 = smul.u32 8, %s24
        %s410 = smul.u32 8, %s24
        %v412 = vld [vmem:[%s401] sm:$0x3]
        %v413 = vld [vmem:[%s401 + $0x2] sm:$0x3]
        %v414 = vld [vmem:[%s401 + $0x4] sm:$0x3]
        %v415 = vld [vmem:[%s401 + $0x6] sm:$0x3]
        %v416 = vld [vmem:[%s401 + $0x8] sm:$0x3]
        %v417 = vld [vmem:[%s401 + $0xa] sm:$0x3]
        %v418 = vld [vmem:[%s401 + $0xc] sm:$0x3]
        %v419 = vld [vmem:[%s401 + $0xe] sm:$0x3]
        %v420 = vunpack.c.0.s8 %v412
        %v421 = vunpack.c.0.s8 %v413
        %v422 = vunpack.c.0.s8 %v414
        %v423 = vunpack.c.0.s8 %v415
        %v424 = vunpack.c.0.s8 %v416
        %v425 = vunpack.c.0.s8 %v417
        %v426 = vunpack.c.0.s8 %v418
        %v427 = vunpack.c.0.s8 %v419
        %v428 = vcvt.s32.f32 %v420
        %v429 = vcvt.s32.f32 %v421
        %v430 = vcvt.s32.f32 %v422
        %v431 = vcvt.s32.f32 %v423
        %v432 = vcvt.s32.f32 %v424
        %v433 = vcvt.s32.f32 %v425
        %v434 = vcvt.s32.f32 %v426
        %v435 = vcvt.s32.f32 %v427
        %v436 = vld [vmem:[%s408] sm:$0x3]
        %v437 = vld [vmem:[%s408 + $0x2] sm:$0x3]
        %v438 = vld [vmem:[%s408 + $0x4] sm:$0x3]
        %v439 = vld [vmem:[%s408 + $0x6] sm:$0x3]
        %v440 = vld [vmem:[%s408 + $0x8] sm:$0x3]
        %v441 = vld [vmem:[%s408 + $0xa] sm:$0x3]
        %v442 = vld [vmem:[%s408 + $0xc] sm:$0x3]
        %v443 = vld [vmem:[%s408 + $0xe] sm:$0x3]
        %v444 = vld [vmem:[%s408 + $0x10] sm:$0x3]
        %v445 = vld [vmem:[%s408 + $0x12] sm:$0x3]
        %v446 = vld [vmem:[%s408 + $0x14] sm:$0x3]
        %v447 = vld [vmem:[%s408 + $0x16] sm:$0x3]
        %v448 = vld [vmem:[%s408 + $0x18] sm:$0x3]
        %v449 = vld [vmem:[%s408 + $0x1a] sm:$0x3]
        %v450 = vld [vmem:[%s408 + $0x1c] sm:$0x3]
        %v451 = vld [vmem:[%s408 + $0x1e] sm:$0x3]
        %v452 = vunpack.c.0.s8 %v436
        %v453 = vunpack.c.0.s8 %v437
        %v454 = vunpack.c.0.s8 %v438
        %v455 = vunpack.c.0.s8 %v439
        %v456 = vunpack.c.0.s8 %v440
        %v457 = vunpack.c.0.s8 %v441
        %v458 = vunpack.c.0.s8 %v442
        %v459 = vunpack.c.0.s8 %v443
        %v460 = vunpack.c.0.s8 %v444
        %v461 = vunpack.c.0.s8 %v445
        %v462 = vunpack.c.0.s8 %v446
        %v463 = vunpack.c.0.s8 %v447
        %v464 = vunpack.c.0.s8 %v448
        %v465 = vunpack.c.0.s8 %v449
        %v466 = vunpack.c.0.s8 %v450
        %v467 = vunpack.c.0.s8 %v451
        %v468 = vcvt.s32.f32 %v452
        %v469 = vcvt.s32.f32 %v453
        %v470 = vcvt.s32.f32 %v454
        %v471 = vcvt.s32.f32 %v455
        %v472 = vcvt.s32.f32 %v456
        %v473 = vcvt.s32.f32 %v457
        %v474 = vcvt.s32.f32 %v458
        %v475 = vcvt.s32.f32 %v459
        %v476 = vcvt.s32.f32 %v460
        %v477 = vcvt.s32.f32 %v461
        %v478 = vcvt.s32.f32 %v462
        %v479 = vcvt.s32.f32 %v463
        %v480 = vcvt.s32.f32 %v464
        %v481 = vcvt.s32.f32 %v465
        %v482 = vcvt.s32.f32 %v466
        %v483 = vcvt.s32.f32 %v467
        %vm484 = vcmp.eq.f32.partialorder %v428, -1.0
        %vm485 = vcmp.eq.f32.partialorder %v429, -1.0
        %vm486 = vcmp.eq.f32.partialorder %v430, -1.0
        %vm487 = vcmp.eq.f32.partialorder %v431, -1.0
        %vm488 = vcmp.eq.f32.partialorder %v432, -1.0
        %vm489 = vcmp.eq.f32.partialorder %v433, -1.0
        %vm490 = vcmp.eq.f32.partialorder %v434, -1.0
        %vm491 = vcmp.eq.f32.partialorder %v435, -1.0
        %v492 = vsel %vm484, 1.0, 0.0
        %v493 = vsel %vm485, 1.0, 0.0
        %v494 = vsel %vm486, 1.0, 0.0
        %v495 = vsel %vm487, 1.0, 0.0
        %v496 = vsel %vm488, 1.0, 0.0
        %v497 = vsel %vm489, 1.0, 0.0
        %v498 = vsel %vm490, 1.0, 0.0
        %v499 = vsel %vm491, 1.0, 0.0
        %vm500 = vcmask 130048
        %v501 = vsel %vm500, %v492, 0.0
        %502 = vadd.xlane.f32.xlu0 %v501
        %v503 = vpop.xlane.xlu0 %502
        %v504 = vsel %vm500, %v493, 0.0
        %505 = vadd.xlane.f32.xlu0 %v504
        %v506 = vpop.xlane.xlu0 %505
        %v507 = vsel %vm500, %v494, 0.0
        %508 = vadd.xlane.f32.xlu0 %v507
        %v509 = vpop.xlane.xlu0 %508
        %v510 = vsel %vm500, %v495, 0.0
        %511 = vadd.xlane.f32.xlu0 %v510
        %v512 = vpop.xlane.xlu0 %511
        %v513 = vsel %vm500, %v496, 0.0
        %514 = vadd.xlane.f32.xlu0 %v513
        %v515 = vpop.xlane.xlu0 %514
        %v516 = vsel %vm500, %v497, 0.0
        %517 = vadd.xlane.f32.xlu0 %v516
        %v518 = vpop.xlane.xlu0 %517
        %v519 = vsel %vm500, %v498, 0.0
        %520 = vadd.xlane.f32.xlu0 %v519
        %v521 = vpop.xlane.xlu0 %520
        %v522 = vsel %vm500, %v499, 0.0
        %523 = vadd.xlane.f32.xlu0 %v522
        %v524 = vpop.xlane.xlu0 %523
        %vm525 = vcmp.eq.f32.partialorder %v503, 0.0
        %vm526 = vcmp.eq.f32.partialorder %v506, 0.0
        %vm527 = vcmp.eq.f32.partialorder %v509, 0.0
        %vm528 = vcmp.eq.f32.partialorder %v512, 0.0
        %vm529 = vcmp.eq.f32.partialorder %v515, 0.0
        %vm530 = vcmp.eq.f32.partialorder %v518, 0.0
        %vm531 = vcmp.eq.f32.partialorder %v521, 0.0
        %vm532 = vcmp.eq.f32.partialorder %v524, 0.0
        %v533 = vsel %vm525, 1.0, %v503
        %v534 = vsel %vm526, 1.0, %v506
        %v535 = vsel %vm527, 1.0, %v509
        %v536 = vsel %vm528, 1.0, %v512
        %v537 = vsel %vm529, 1.0, %v515
        %v538 = vsel %vm530, 1.0, %v518
        %v539 = vsel %vm531, 1.0, %v521
        %v540 = vsel %vm532, 1.0, %v524
        %v541 = vrcp.pop %v533
        %v542 = vrcp.pop %v534
        %v543 = vrcp.pop %v535
        %v544 = vrcp.pop %v536
        %v545 = vrcp.pop %v537
        %v546 = vrcp.pop %v538
        %v547 = vrcp.pop %v539
        %v548 = vrcp.pop %v540
        %v549 = vmul.f32 %v492, %v541
        %v550 = vmul.f32 %v493, %v542
        %v551 = vmul.f32 %v494, %v543
        %v552 = vmul.f32 %v495, %v544
        %v553 = vmul.f32 %v496, %v545
        %v554 = vmul.f32 %v497, %v546
        %v555 = vmul.f32 %v498, %v547
        %v556 = vmul.f32 %v499, %v548
        %v557 = vpack.c.bf16 %v549, %v549
        %v558 = vpack.c.bf16 %v550, %v550
        %v559 = vpack.c.bf16 %v551, %v551
        %v560 = vpack.c.bf16 %v552, %v552
        %v561 = vpack.c.bf16 %v553, %v553
        %v562 = vpack.c.bf16 %v554, %v554
        %v563 = vpack.c.bf16 %v555, %v555
        %v564 = vpack.c.bf16 %v556, %v556
        %vm565 = vcmp.eq.f32.partialorder %v468, 1.0
        %vm566 = vcmp.eq.f32.partialorder %v469, 1.0
        %vm567 = vcmp.eq.f32.partialorder %v470, 1.0
        %vm568 = vcmp.eq.f32.partialorder %v471, 1.0
        %vm569 = vcmp.eq.f32.partialorder %v472, 1.0
        %vm570 = vcmp.eq.f32.partialorder %v473, 1.0
        %vm571 = vcmp.eq.f32.partialorder %v474, 1.0
        %vm572 = vcmp.eq.f32.partialorder %v475, 1.0
        %vm573 = vcmp.eq.f32.partialorder %v476, 1.0
        %vm574 = vcmp.eq.f32.partialorder %v477, 1.0
        %vm575 = vcmp.eq.f32.partialorder %v478, 1.0
        %vm576 = vcmp.eq.f32.partialorder %v479, 1.0
        %vm577 = vcmp.eq.f32.partialorder %v480, 1.0
        %vm578 = vcmp.eq.f32.partialorder %v481, 1.0
        %vm579 = vcmp.eq.f32.partialorder %v482, 1.0
        %vm580 = vcmp.eq.f32.partialorder %v483, 1.0
        %v581 = vsel %vm565, 1.0, 0.0
        %v582 = vsel %vm566, 1.0, 0.0
        %v583 = vsel %vm567, 1.0, 0.0
        %v584 = vsel %vm568, 1.0, 0.0
        %v585 = vsel %vm569, 1.0, 0.0
        %v586 = vsel %vm570, 1.0, 0.0
        %v587 = vsel %vm571, 1.0, 0.0
        %v588 = vsel %vm572, 1.0, 0.0
        %v589 = vsel %vm573, 1.0, 0.0
        %v590 = vsel %vm574, 1.0, 0.0
        %v591 = vsel %vm575, 1.0, 0.0
        %v592 = vsel %vm576, 1.0, 0.0
        %v593 = vsel %vm577, 1.0, 0.0
        %v594 = vsel %vm578, 1.0, 0.0
        %v595 = vsel %vm579, 1.0, 0.0
        %v596 = vsel %vm580, 1.0, 0.0
        %v597 = vpack.c.bf16 %v582, %v581
        %v598 = vpack.c.bf16 %v584, %v583
        %v599 = vpack.c.bf16 %v586, %v585
        %v600 = vpack.c.bf16 %v588, %v587
        %v601 = vpack.c.bf16 %v590, %v589
        %v602 = vpack.c.bf16 %v592, %v591
        %v603 = vpack.c.bf16 %v594, %v593
        %v604 = vpack.c.bf16 %v596, %v595
        %v605 = vld [vmem:[%s395] sm:$0xff]
        %v606 = vld [vmem:[%s395 + $0x8] sm:$0xff]
        %v607 = vld [vmem:[%s395 + $0x10] sm:$0xff]
        %v608 = vld [vmem:[%s395 + $0x18] sm:$0xff]
        %v609 = vld [vmem:[%s395 + $0x20] sm:$0xff]
        %v610 = vld [vmem:[%s395 + $0x28] sm:$0xff]
        %v611 = vld [vmem:[%s395 + $0x30] sm:$0xff]
        %v612 = vld [vmem:[%s395 + $0x38] sm:$0xff]
        %v613 = vld [vmem:[%s395 + $0x40] sm:$0xff]
        %v614 = vld [vmem:[%s395 + $0x48] sm:$0xff]
        %v615 = vld [vmem:[%s395 + $0x50] sm:$0xff]
        %v616 = vld [vmem:[%s395 + $0x58] sm:$0xff]
        %v617 = vld [vmem:[%s395 + $0x60] sm:$0xff]
        %v618 = vld [vmem:[%s395 + $0x68] sm:$0xff]
        %v619 = vld [vmem:[%s395 + $0x70] sm:$0xff]
        %v620 = vld [vmem:[%s395 + $0x78] sm:$0xff]
        %v621 = vpack.c.bf16 %v606, %v605
        %v622 = vpack.c.bf16 %v608, %v607
        %v623 = vpack.c.bf16 %v610, %v609
        %v624 = vpack.c.bf16 %v612, %v611
        %v625 = vpack.c.bf16 %v614, %v613
        %v626 = vpack.c.bf16 %v616, %v615
        %v627 = vpack.c.bf16 %v618, %v617
        %v628 = vpack.c.bf16 %v620, %v619
        %v629 = vld [vmem:[%s3] sm:$0x3]
        %v630 = vld [vmem:[%s4] sm:$0x1]
        %v632 = vlaneseq
        %v633 = vshrl.u32 %v632, 7
        %v634 = vsub.s32 0, %v633
        %v635 = vrot.slane %v630, %v634
        %vm637 = vcmask 31744
        %v639 = vsel %vm637, %v621, 0
        %v642 = vsel %vm637, %v622, 0
        %v645 = vsel %vm637, %v623, 0
        %v648 = vsel %vm637, %v624, 0
        %v651 = vsel %vm637, %v625, 0
        %v654 = vsel %vm637, %v626, 0
        %v657 = vsel %vm637, %v627, 0
        %v660 = vsel %vm637, %v628, 0
        %vm662 = vcmask 1041408
        %v664 = vsel %vm662, %v629, 0
        %666 = vmatprep.subr.bf16.mxu0 0
        %667 = vmatpush1.bf16.msra.mxu0 %v664
        %668 = vmatprep.subr.bf16.mxu0 0
        %669 = vmatpush1.bf16.msra.mxu0 0
        %670 = vmatprep.subr.bf16.mxu0 0
        %671 = vmatpush1.bf16.msra.mxu0 0
        %672 = vmatprep.subr.bf16.mxu0 0
        %673 = vmatpush1.bf16.msra.mxu0 0
        %674 = vmatprep.subr.bf16.mxu0 0
        %675 = vmatpush1.bf16.msra.mxu0 0
        %676 = vmatprep.subr.bf16.mxu0 0
        %677 = vmatpush1.bf16.msra.mxu0 0
        %678 = vmatprep.subr.bf16.mxu0 0
        %679 = vmatpush1.bf16.msra.mxu0 0
        %680 = vmatprep.subr.bf16.mxu0 0
        %681 = vmatpush1.bf16.msra.mxu0 0
        %682 = vmatprep.subr.bf16.mxu0 0
        %683 = vmatpush1.bf16.msra.mxu0 0
        %684 = vmatprep.subr.bf16.mxu0 0
        %685 = vmatpush1.bf16.msra.mxu0 0
        %686 = vmatprep.subr.bf16.mxu0 0
        %687 = vmatpush1.bf16.msra.mxu0 0
        %688 = vmatprep.subr.bf16.mxu0 0
        %689 = vmatpush1.bf16.msra.mxu0 0
        %690 = vmatprep.subr.bf16.mxu0 0
        %691 = vmatpush1.bf16.msra.mxu0 0
        %692 = vmatprep.subr.bf16.mxu0 0
        %693 = vmatpush1.bf16.msra.mxu0 0
        %694 = vmatprep.subr.bf16.mxu0 0
        %695 = vmatpush1.bf16.msra.mxu0 0
        %696 = vmatprep.subr.bf16.mxu0 0
        %697 = vmatpush1.bf16.msra.mxu0 0
        %698 = vmatprep.mubr.bf16.mxu0 0
        %699 = vmatmul.mubr.bf16.gmra.mrb[0].mxu0 %v639
        %v700 = vpop.f32.mrb[0].mxu0
        %v701 = vadd.f32 %v635, %v700
        %v702 = vpop.f32.mrb[0].mxu0
        %v703 = vpop.f32.mrb[0].mxu0
        %v704 = vadd.f32 %v635, %v703
        %v705 = vpop.f32.mrb[0].mxu0
        %706 = vmatprep.mubr.bf16.mxu0 0
        %707 = vmatmul.mubr.bf16.gmra.mrb[0].mxu0 %v642
        %v708 = vpop.f32.mrb[0].mxu0
        %v709 = vadd.f32 %v635, %v708
        %v710 = vpop.f32.mrb[0].mxu0
        %v711 = vpop.f32.mrb[0].mxu0
        %v712 = vadd.f32 %v635, %v711
        %v713 = vpop.f32.mrb[0].mxu0
        %714 = vmatprep.mubr.bf16.mxu0 0
        %715 = vmatmul.mubr.bf16.gmra.mrb[0].mxu0 %v645
        %v716 = vpop.f32.mrb[0].mxu0
        %v717 = vadd.f32 %v635, %v716
        %v718 = vpop.f32.mrb[0].mxu0
        %v719 = vpop.f32.mrb[0].mxu0
        %v720 = vadd.f32 %v635, %v719
        %v721 = vpop.f32.mrb[0].mxu0
        %722 = vmatprep.mubr.bf16.mxu0 0
        %723 = vmatmul.mubr.bf16.gmra.mrb[0].mxu0 %v648
        %v724 = vpop.f32.mrb[0].mxu0
        %v725 = vadd.f32 %v635, %v724
        %v726 = vpop.f32.mrb[0].mxu0
        %v727 = vpop.f32.mrb[0].mxu0
        %v728 = vadd.f32 %v635, %v727
        %v729 = vpop.f32.mrb[0].mxu0
        %730 = vmatprep.mubr.bf16.mxu0 0
        %731 = vmatmul.mubr.bf16.gmra.mrb[0].mxu0 %v651
        %v732 = vpop.f32.mrb[0].mxu0
        %v733 = vadd.f32 %v635, %v732
        %v734 = vpop.f32.mrb[0].mxu0
        %v735 = vpop.f32.mrb[0].mxu0
        %v736 = vadd.f32 %v635, %v735
        %v737 = vpop.f32.mrb[0].mxu0
        %738 = vmatprep.mubr.bf16.mxu0 0
        %739 = vmatmul.mubr.bf16.gmra.mrb[0].mxu0 %v654
        %v740 = vpop.f32.mrb[0].mxu0
        %v741 = vadd.f32 %v635, %v740
        %v742 = vpop.f32.mrb[0].mxu0
        %v743 = vpop.f32.mrb[0].mxu0
        %v744 = vadd.f32 %v635, %v743
        %v745 = vpop.f32.mrb[0].mxu0
        %746 = vmatprep.mubr.bf16.mxu0 0
        %747 = vmatmul.mubr.bf16.gmra.mrb[0].mxu0 %v657
        %v748 = vpop.f32.mrb[0].mxu0
        %v749 = vadd.f32 %v635, %v748
        %v750 = vpop.f32.mrb[0].mxu0
        %v751 = vpop.f32.mrb[0].mxu0
        %v752 = vadd.f32 %v635, %v751
        %v753 = vpop.f32.mrb[0].mxu0
        %754 = vmatprep.mubr.bf16.mxu0 0
        %755 = vmatmul.mubr.bf16.gmra.mrb[0].mxu0 %v660
        %v756 = vpop.f32.mrb[0].mxu0
        %v757 = vadd.f32 %v635, %v756
        %v758 = vpop.f32.mrb[0].mxu0
        %v759 = vpop.f32.mrb[0].mxu0
        %v760 = vadd.f32 %v635, %v759
        %v761 = vpop.f32.mrb[0].mxu0
        %762 = vdwg.mxu0
        %v763 = vpack.c.bf16 %v704, %v701
        %v764 = vpack.c.bf16 %v712, %v709
        %v765 = vpack.c.bf16 %v720, %v717
        %v766 = vpack.c.bf16 %v728, %v725
        %v767 = vpack.c.bf16 %v736, %v733
        %v768 = vpack.c.bf16 %v744, %v741
        %v769 = vpack.c.bf16 %v752, %v749
        %v770 = vpack.c.bf16 %v760, %v757
        %v772 = vsel %vm500, %v557, 0
        %774 = vmatprep.subr.bf16.mxu0 0
        %775 = vmatpush1.bf16.msra.mxu0 %v763
        %776 = vmatprep.subr.bf16.mxu0 0
        %777 = vmatpush1.bf16.msra.mxu0 0
        %778 = vmatprep.subr.bf16.mxu0 0
        %779 = vmatpush1.bf16.msra.mxu0 0
        %780 = vmatprep.subr.bf16.mxu0 0
        %781 = vmatpush1.bf16.msra.mxu0 0
        %782 = vmatprep.subr.bf16.mxu0 0
        %783 = vmatpush1.bf16.msra.mxu0 0
        %784 = vmatprep.subr.bf16.mxu0 0
        %785 = vmatpush1.bf16.msra.mxu0 0
        %786 = vmatprep.subr.bf16.mxu0 0
        %787 = vmatpush1.bf16.msra.mxu0 0
        %788 = vmatprep.subr.bf16.mxu0 0
        %789 = vmatpush1.bf16.msra.mxu0 0
        %790 = vmatprep.subr.bf16.mxu0 0
        %791 = vmatpush1.bf16.msra.mxu0 0
        %792 = vmatprep.subr.bf16.mxu0 0
        %793 = vmatpush1.bf16.msra.mxu0 0
        %794 = vmatprep.subr.bf16.mxu0 0
        %795 = vmatpush1.bf16.msra.mxu0 0
        %796 = vmatprep.subr.bf16.mxu0 0
        %797 = vmatpush1.bf16.msra.mxu0 0
        %798 = vmatprep.subr.bf16.mxu0 0
        %799 = vmatpush1.bf16.msra.mxu0 0
        %800 = vmatprep.subr.bf16.mxu0 0
        %801 = vmatpush1.bf16.msra.mxu0 0
        %802 = vmatprep.subr.bf16.mxu0 0
        %803 = vmatpush1.bf16.msra.mxu0 0
        %804 = vmatprep.subr.bf16.mxu0 0
        %805 = vmatpush1.bf16.msra.mxu0 0
        %806 = vmatprep.mubr.bf16.mxu0 0
        %807 = vmatmul.mubr.bf16.gmra.mrb[0].mxu0 %v772
        %v808 = vpop.f32.mrb[0].mxu0
        %v809 = vadd.f32 0.0, %v808
        %v810 = vpop.f32.mrb[0].mxu0
        %v811 = vpop.f32.mrb[0].mxu0
        %v812 = vpop.f32.mrb[0].mxu0
        %813 = vdwg.mxu0
        %v815 = vsel %vm500, %v558, 0
        %817 = vmatprep.subr.bf16.mxu0 0
        %818 = vmatpush1.bf16.msra.mxu0 %v764
        %819 = vmatprep.subr.bf16.mxu0 0
        %820 = vmatpush1.bf16.msra.mxu0 0
        %821 = vmatprep.subr.bf16.mxu0 0
        %822 = vmatpush1.bf16.msra.mxu0 0
        %823 = vmatprep.subr.bf16.mxu0 0
        %824 = vmatpush1.bf16.msra.mxu0 0
        %825 = vmatprep.subr.bf16.mxu0 0
        %826 = vmatpush1.bf16.msra.mxu0 0
        %827 = vmatprep.subr.bf16.mxu0 0
        %828 = vmatpush1.bf16.msra.mxu0 0
        %829 = vmatprep.subr.bf16.mxu0 0
        %830 = vmatpush1.bf16.msra.mxu0 0
        %831 = vmatprep.subr.bf16.mxu0 0
        %832 = vmatpush1.bf16.msra.mxu0 0
        %833 = vmatprep.subr.bf16.mxu0 0
        %834 = vmatpush1.bf16.msra.mxu0 0
        %835 = vmatprep.subr.bf16.mxu0 0
        %836 = vmatpush1.bf16.msra.mxu0 0
        %837 = vmatprep.subr.bf16.mxu0 0
        %838 = vmatpush1.bf16.msra.mxu0 0
        %839 = vmatprep.subr.bf16.mxu0 0
        %840 = vmatpush1.bf16.msra.mxu0 0
        %841 = vmatprep.subr.bf16.mxu0 0
        %842 = vmatpush1.bf16.msra.mxu0 0
        %843 = vmatprep.subr.bf16.mxu0 0
        %844 = vmatpush1.bf16.msra.mxu0 0
        %845 = vmatprep.subr.bf16.mxu0 0
        %846 = vmatpush1.bf16.msra.mxu0 0
        %847 = vmatprep.subr.bf16.mxu0 0
        %848 = vmatpush1.bf16.msra.mxu0 0
        %849 = vmatprep.mubr.bf16.mxu0 0
        %850 = vmatmul.mubr.bf16.gmra.mrb[0].mxu0 %v815
        %v851 = vpop.f32.mrb[0].mxu0
        %v852 = vadd.f32 0.0, %v851
        %v853 = vpop.f32.mrb[0].mxu0
        %v854 = vpop.f32.mrb[0].mxu0
        %v855 = vpop.f32.mrb[0].mxu0
        %856 = vdwg.mxu0
        %v858 = vsel %vm500, %v559, 0
        %860 = vmatprep.subr.bf16.mxu0 0
        %861 = vmatpush1.bf16.msra.mxu0 %v765
        %862 = vmatprep.subr.bf16.mxu0 0
        %863 = vmatpush1.bf16.msra.mxu0 0
        %864 = vmatprep.subr.bf16.mxu0 0
        %865 = vmatpush1.bf16.msra.mxu0 0
        %866 = vmatprep.subr.bf16.mxu0 0
        %867 = vmatpush1.bf16.msra.mxu0 0
        %868 = vmatprep.subr.bf16.mxu0 0
        %869 = vmatpush1.bf16.msra.mxu0 0
        %870 = vmatprep.subr.bf16.mxu0 0
        %871 = vmatpush1.bf16.msra.mxu0 0
        %872 = vmatprep.subr.bf16.mxu0 0
        %873 = vmatpush1.bf16.msra.mxu0 0
        %874 = vmatprep.subr.bf16.mxu0 0
        %875 = vmatpush1.bf16.msra.mxu0 0
        %876 = vmatprep.subr.bf16.mxu0 0
        %877 = vmatpush1.bf16.msra.mxu0 0
        %878 = vmatprep.subr.bf16.mxu0 0
        %879 = vmatpush1.bf16.msra.mxu0 0
        %880 = vmatprep.subr.bf16.mxu0 0
        %881 = vmatpush1.bf16.msra.mxu0 0
        %882 = vmatprep.subr.bf16.mxu0 0
        %883 = vmatpush1.bf16.msra.mxu0 0
        %884 = vmatprep.subr.bf16.mxu0 0
        %885 = vmatpush1.bf16.msra.mxu0 0
        %886 = vmatprep.subr.bf16.mxu0 0
        %887 = vmatpush1.bf16.msra.mxu0 0
        %888 = vmatprep.subr.bf16.mxu0 0
        %889 = vmatpush1.bf16.msra.mxu0 0
        %890 = vmatprep.subr.bf16.mxu0 0
        %891 = vmatpush1.bf16.msra.mxu0 0
        %892 = vmatprep.mubr.bf16.mxu0 0
        %893 = vmatmul.mubr.bf16.gmra.mrb[0].mxu0 %v858
        %v894 = vpop.f32.mrb[0].mxu0
        %v895 = vadd.f32 0.0, %v894
        %v896 = vpop.f32.mrb[0].mxu0
        %v897 = vpop.f32.mrb[0].mxu0
        %v898 = vpop.f32.mrb[0].mxu0
        %899 = vdwg.mxu0
        %v901 = vsel %vm500, %v560, 0
        %903 = vmatprep.subr.bf16.mxu0 0
        %904 = vmatpush1.bf16.msra.mxu0 %v766
        %905 = vmatprep.subr.bf16.mxu0 0
        %906 = vmatpush1.bf16.msra.mxu0 0
        %907 = vmatprep.subr.bf16.mxu0 0
        %908 = vmatpush1.bf16.msra.mxu0 0
        %909 = vmatprep.subr.bf16.mxu0 0
        %910 = vmatpush1.bf16.msra.mxu0 0
        %911 = vmatprep.subr.bf16.mxu0 0
        %912 = vmatpush1.bf16.msra.mxu0 0
        %913 = vmatprep.subr.bf16.mxu0 0
        %914 = vmatpush1.bf16.msra.mxu0 0
        %915 = vmatprep.subr.bf16.mxu0 0
        %916 = vmatpush1.bf16.msra.mxu0 0
        %917 = vmatprep.subr.bf16.mxu0 0
        %918 = vmatpush1.bf16.msra.mxu0 0
        %919 = vmatprep.subr.bf16.mxu0 0
        %920 = vmatpush1.bf16.msra.mxu0 0
        %921 = vmatprep.subr.bf16.mxu0 0
        %922 = vmatpush1.bf16.msra.mxu0 0
        %923 = vmatprep.subr.bf16.mxu0 0
        %924 = vmatpush1.bf16.msra.mxu0 0
        %925 = vmatprep.subr.bf16.mxu0 0
        %926 = vmatpush1.bf16.msra.mxu0 0
        %927 = vmatprep.subr.bf16.mxu0 0
        %928 = vmatpush1.bf16.msra.mxu0 0
        %929 = vmatprep.subr.bf16.mxu0 0
        %930 = vmatpush1.bf16.msra.mxu0 0
        %931 = vmatprep.subr.bf16.mxu0 0
        %932 = vmatpush1.bf16.msra.mxu0 0
        %933 = vmatprep.subr.bf16.mxu0 0
        %934 = vmatpush1.bf16.msra.mxu0 0
        %935 = vmatprep.mubr.bf16.mxu0 0
        %936 = vmatmul.mubr.bf16.gmra.mrb[0].mxu0 %v901
        %v937 = vpop.f32.mrb[0].mxu0
        %v938 = vadd.f32 0.0, %v937
        %v939 = vpop.f32.mrb[0].mxu0
        %v940 = vpop.f32.mrb[0].mxu0
        %v941 = vpop.f32.mrb[0].mxu0
        %942 = vdwg.mxu0
        %v944 = vsel %vm500, %v561, 0
        %946 = vmatprep.subr.bf16.mxu0 0
        %947 = vmatpush1.bf16.msra.mxu0 %v767
        %948 = vmatprep.subr.bf16.mxu0 0
        %949 = vmatpush1.bf16.msra.mxu0 0
        %950 = vmatprep.subr.bf16.mxu0 0
        %951 = vmatpush1.bf16.msra.mxu0 0
        %952 = vmatprep.subr.bf16.mxu0 0
        %953 = vmatpush1.bf16.msra.mxu0 0
        %954 = vmatprep.subr.bf16.mxu0 0
        %955 = vmatpush1.bf16.msra.mxu0 0
        %956 = vmatprep.subr.bf16.mxu0 0
        %957 = vmatpush1.bf16.msra.mxu0 0
        %958 = vmatprep.subr.bf16.mxu0 0
        %959 = vmatpush1.bf16.msra.mxu0 0
        %960 = vmatprep.subr.bf16.mxu0 0
        %961 = vmatpush1.bf16.msra.mxu0 0
        %962 = vmatprep.subr.bf16.mxu0 0
        %963 = vmatpush1.bf16.msra.mxu0 0
        %964 = vmatprep.subr.bf16.mxu0 0
        %965 = vmatpush1.bf16.msra.mxu0 0
        %966 = vmatprep.subr.bf16.mxu0 0
        %967 = vmatpush1.bf16.msra.mxu0 0
        %968 = vmatprep.subr.bf16.mxu0 0
        %969 = vmatpush1.bf16.msra.mxu0 0
        %970 = vmatprep.subr.bf16.mxu0 0
        %971 = vmatpush1.bf16.msra.mxu0 0
        %972 = vmatprep.subr.bf16.mxu0 0
        %973 = vmatpush1.bf16.msra.mxu0 0
        %974 = vmatprep.subr.bf16.mxu0 0
        %975 = vmatpush1.bf16.msra.mxu0 0
        %976 = vmatprep.subr.bf16.mxu0 0
        %977 = vmatpush1.bf16.msra.mxu0 0
        %978 = vmatprep.mubr.bf16.mxu0 0
        %979 = vmatmul.mubr.bf16.gmra.mrb[0].mxu0 %v944
        %v980 = vpop.f32.mrb[0].mxu0
        %v981 = vadd.f32 0.0, %v980
        %v982 = vpop.f32.mrb[0].mxu0
        %v983 = vpop.f32.mrb[0].mxu0
        %v984 = vpop.f32.mrb[0].mxu0
        %985 = vdwg.mxu0
        %v987 = vsel %vm500, %v562, 0
        %989 = vmatprep.subr.bf16.mxu0 0
        %990 = vmatpush1.bf16.msra.mxu0 %v768
        %991 = vmatprep.subr.bf16.mxu0 0
        %992 = vmatpush1.bf16.msra.mxu0 0
        %993 = vmatprep.subr.bf16.mxu0 0
        %994 = vmatpush1.bf16.msra.mxu0 0
        %995 = vmatprep.subr.bf16.mxu0 0
        %996 = vmatpush1.bf16.msra.mxu0 0
        %997 = vmatprep.subr.bf16.mxu0 0
        %998 = vmatpush1.bf16.msra.mxu0 0
        %999 = vmatprep.subr.bf16.mxu0 0
        %1000 = vmatpush1.bf16.msra.mxu0 0
        %1001 = vmatprep.subr.bf16.mxu0 0
        %1002 = vmatpush1.bf16.msra.mxu0 0
        %1003 = vmatprep.subr.bf16.mxu0 0
        %1004 = vmatpush1.bf16.msra.mxu0 0
        %1005 = vmatprep.subr.bf16.mxu0 0
        %1006 = vmatpush1.bf16.msra.mxu0 0
        %1007 = vmatprep.subr.bf16.mxu0 0
        %1008 = vmatpush1.bf16.msra.mxu0 0
        %1009 = vmatprep.subr.bf16.mxu0 0
        %1010 = vmatpush1.bf16.msra.mxu0 0
        %1011 = vmatprep.subr.bf16.mxu0 0
        %1012 = vmatpush1.bf16.msra.mxu0 0
        %1013 = vmatprep.subr.bf16.mxu0 0
        %1014 = vmatpush1.bf16.msra.mxu0 0
        %1015 = vmatprep.subr.bf16.mxu0 0
        %1016 = vmatpush1.bf16.msra.mxu0 0
        %1017 = vmatprep.subr.bf16.mxu0 0
        %1018 = vmatpush1.bf16.msra.mxu0 0
        %1019 = vmatprep.subr.bf16.mxu0 0
        %1020 = vmatpush1.bf16.msra.mxu0 0
        %1021 = vmatprep.mubr.bf16.mxu0 0
        %1022 = vmatmul.mubr.bf16.gmra.mrb[0].mxu0 %v987
        %v1023 = vpop.f32.mrb[0].mxu0
        %v1024 = vadd.f32 0.0, %v1023
        %v1025 = vpop.f32.mrb[0].mxu0
        %v1026 = vpop.f32.mrb[0].mxu0
        %v1027 = vpop.f32.mrb[0].mxu0
        %1028 = vdwg.mxu0
        %v1030 = vsel %vm500, %v563, 0
        %1032 = vmatprep.subr.bf16.mxu0 0
        %1033 = vmatpush1.bf16.msra.mxu0 %v769
        %1034 = vmatprep.subr.bf16.mxu0 0
        %1035 = vmatpush1.bf16.msra.mxu0 0
        %1036 = vmatprep.subr.bf16.mxu0 0
        %1037 = vmatpush1.bf16.msra.mxu0 0
        %1038 = vmatprep.subr.bf16.mxu0 0
        %1039 = vmatpush1.bf16.msra.mxu0 0
        %1040 = vmatprep.subr.bf16.mxu0 0
        %1041 = vmatpush1.bf16.msra.mxu0 0
        %1042 = vmatprep.subr.bf16.mxu0 0
        %1043 = vmatpush1.bf16.msra.mxu0 0
        %1044 = vmatprep.subr.bf16.mxu0 0
        %1045 = vmatpush1.bf16.msra.mxu0 0
        %1046 = vmatprep.subr.bf16.mxu0 0
        %1047 = vmatpush1.bf16.msra.mxu0 0
        %1048 = vmatprep.subr.bf16.mxu0 0
        %1049 = vmatpush1.bf16.msra.mxu0 0
        %1050 = vmatprep.subr.bf16.mxu0 0
        %1051 = vmatpush1.bf16.msra.mxu0 0
        %1052 = vmatprep.subr.bf16.mxu0 0
        %1053 = vmatpush1.bf16.msra.mxu0 0
        %1054 = vmatprep.subr.bf16.mxu0 0
        %1055 = vmatpush1.bf16.msra.mxu0 0
        %1056 = vmatprep.subr.bf16.mxu0 0
        %1057 = vmatpush1.bf16.msra.mxu0 0
        %1058 = vmatprep.subr.bf16.mxu0 0
        %1059 = vmatpush1.bf16.msra.mxu0 0
        %1060 = vmatprep.subr.bf16.mxu0 0
        %1061 = vmatpush1.bf16.msra.mxu0 0
        %1062 = vmatprep.subr.bf16.mxu0 0
        %1063 = vmatpush1.bf16.msra.mxu0 0
        %1064 = vmatprep.mubr.bf16.mxu0 0
        %1065 = vmatmul.mubr.bf16.gmra.mrb[0].mxu0 %v1030
        %v1066 = vpop.f32.mrb[0].mxu0
        %v1067 = vadd.f32 0.0, %v1066
        %v1068 = vpop.f32.mrb[0].mxu0
        %v1069 = vpop.f32.mrb[0].mxu0
        %v1070 = vpop.f32.mrb[0].mxu0
        %1071 = vdwg.mxu0
        %v1073 = vsel %vm500, %v564, 0
        %1075 = vmatprep.subr.bf16.mxu0 0
        %1076 = vmatpush1.bf16.msra.mxu0 %v770
        %1077 = vmatprep.subr.bf16.mxu0 0
        %1078 = vmatpush1.bf16.msra.mxu0 0
        %1079 = vmatprep.subr.bf16.mxu0 0
        %1080 = vmatpush1.bf16.msra.mxu0 0
        %1081 = vmatprep.subr.bf16.mxu0 0
        %1082 = vmatpush1.bf16.msra.mxu0 0
        %1083 = vmatprep.subr.bf16.mxu0 0
        %1084 = vmatpush1.bf16.msra.mxu0 0
        %1085 = vmatprep.subr.bf16.mxu0 0
        %1086 = vmatpush1.bf16.msra.mxu0 0
        %1087 = vmatprep.subr.bf16.mxu0 0
        %1088 = vmatpush1.bf16.msra.mxu0 0
        %1089 = vmatprep.subr.bf16.mxu0 0
        %1090 = vmatpush1.bf16.msra.mxu0 0
        %1091 = vmatprep.subr.bf16.mxu0 0
        %1092 = vmatpush1.bf16.msra.mxu0 0
        %1093 = vmatprep.subr.bf16.mxu0 0
        %1094 = vmatpush1.bf16.msra.mxu0 0
        %1095 = vmatprep.subr.bf16.mxu0 0
        %1096 = vmatpush1.bf16.msra.mxu0 0
        %1097 = vmatprep.subr.bf16.mxu0 0
        %1098 = vmatpush1.bf16.msra.mxu0 0
        %1099 = vmatprep.subr.bf16.mxu0 0
        %1100 = vmatpush1.bf16.msra.mxu0 0
        %1101 = vmatprep.subr.bf16.mxu0 0
        %1102 = vmatpush1.bf16.msra.mxu0 0
        %1103 = vmatprep.subr.bf16.mxu0 0
        %1104 = vmatpush1.bf16.msra.mxu0 0
        %1105 = vmatprep.subr.bf16.mxu0 0
        %1106 = vmatpush1.bf16.msra.mxu0 0
        %1107 = vmatprep.mubr.bf16.mxu0 0
        %1108 = vmatmul.mubr.bf16.gmra.mrb[0].mxu0 %v1073
        %v1109 = vpop.f32.mrb[0].mxu0
        %v1110 = vadd.f32 0.0, %v1109
        %v1111 = vpop.f32.mrb[0].mxu0
        %v1112 = vpop.f32.mrb[0].mxu0
        %v1113 = vpop.f32.mrb[0].mxu0
        %1114 = vdwg.mxu0
        %v1115 = vpack.c.bf16 %v852, %v809
        %v1116 = vpack.c.bf16 %v938, %v895
        %v1117 = vpack.c.bf16 %v1024, %v981
        %v1118 = vpack.c.bf16 %v1110, %v1067
        %v1119 = vld [vmem:[%s5] sm:$0xf]
        %v1120 = vld [vmem:[%s5 + $0x4] sm:$0xf]
        %v1121 = vld [vmem:[%s5 + $0x8] sm:$0xf]
        %v1122 = vld [vmem:[%s5 + $0xc] sm:$0xf]
        %v1123 = vld [vmem:[%s6] sm:$0x1]
        %v1125 = vlaneseq
        %v1126 = vshrl.u32 %v1125, 7
        %v1127 = vsub.s32 0, %v1126
        %v1128 = vrot.slane %v1123, %v1127
        %v1134 = vunpack.c.l.b16 %v1119
        %v1135 = vunpack.c.l.b16 %v1120
        %v1136 = vunpack.c.l.b16 %v1121
        %v1137 = vunpack.c.l.b16 %v1122
        %v1138 = vpack.c.b16 %v1135, %v1134
        %v1139 = vpack.c.b16 %v1137, %v1136
        %vm1142 = vcmask 261120
        %v1144 = vsel %vm1142, %v1115, 0
        %v1147 = vsel %vm1142, %v1116, 0
        %v1150 = vsel %vm1142, %v1117, 0
        %v1153 = vsel %vm1142, %v1118, 0
        %1155 = vmatprep.subr.bf16.mxu0 0
        %1156 = vmatpush1.bf16.msra.mxu0 %v1138
        %1157 = vmatprep.subr.bf16.mxu0 0
        %1158 = vmatpush1.bf16.msra.mxu0 %v1139
        %1159 = vmatprep.subr.bf16.mxu0 0
        %1160 = vmatpush1.bf16.msra.mxu0 0
        %1161 = vmatprep.subr.bf16.mxu0 0
        %1162 = vmatpush1.bf16.msra.mxu0 0
        %1163 = vmatprep.subr.bf16.mxu0 0
        %1164 = vmatpush1.bf16.msra.mxu0 0
        %1165 = vmatprep.subr.bf16.mxu0 0
        %1166 = vmatpush1.bf16.msra.mxu0 0
        %1167 = vmatprep.subr.bf16.mxu0 0
        %1168 = vmatpush1.bf16.msra.mxu0 0
        %1169 = vmatprep.subr.bf16.mxu0 0
        %1170 = vmatpush1.bf16.msra.mxu0 0
        %1171 = vmatprep.subr.bf16.mxu0 0
        %1172 = vmatpush1.bf16.msra.mxu0 0
        %1173 = vmatprep.subr.bf16.mxu0 0
        %1174 = vmatpush1.bf16.msra.mxu0 0
        %1175 = vmatprep.subr.bf16.mxu0 0
        %1176 = vmatpush1.bf16.msra.mxu0 0
        %1177 = vmatprep.subr.bf16.mxu0 0
        %1178 = vmatpush1.bf16.msra.mxu0 0
        %1179 = vmatprep.subr.bf16.mxu0 0
        %1180 = vmatpush1.bf16.msra.mxu0 0
        %1181 = vmatprep.subr.bf16.mxu0 0
        %1182 = vmatpush1.bf16.msra.mxu0 0
        %1183 = vmatprep.subr.bf16.mxu0 0
        %1184 = vmatpush1.bf16.msra.mxu0 0
        %1185 = vmatprep.subr.bf16.mxu0 0
        %1186 = vmatpush1.bf16.msra.mxu0 0
        %1187 = vmatprep.mubr.bf16.mxu0 0
        %1188 = vmatmul.mubr.bf16.gmra.mrb[0].mxu0 %v1144
        %v1189 = vpop.f32.mrb[0].mxu0
        %v1190 = vadd.f32 %v1128, %v1189
        %v1191 = vpop.f32.mrb[0].mxu0
        %v1192 = vpop.f32.mrb[0].mxu0
        %v1193 = vadd.f32 %v1128, %v1192
        %v1194 = vpop.f32.mrb[0].mxu0
        %1195 = vmatprep.mubr.bf16.mxu0 0
        %1196 = vmatmul.mubr.bf16.gmra.mrb[0].mxu0 %v1147
        %v1197 = vpop.f32.mrb[0].mxu0
        %v1198 = vadd.f32 %v1128, %v1197
        %v1199 = vpop.f32.mrb[0].mxu0
        %v1200 = vpop.f32.mrb[0].mxu0
        %v1201 = vadd.f32 %v1128, %v1200
        %v1202 = vpop.f32.mrb[0].mxu0
        %1203 = vmatprep.mubr.bf16.mxu0 0
        %1204 = vmatmul.mubr.bf16.gmra.mrb[0].mxu0 %v1150
        %v1205 = vpop.f32.mrb[0].mxu0
        %v1206 = vadd.f32 %v1128, %v1205
        %v1207 = vpop.f32.mrb[0].mxu0
        %v1208 = vpop.f32.mrb[0].mxu0
        %v1209 = vadd.f32 %v1128, %v1208
        %v1210 = vpop.f32.mrb[0].mxu0
        %1211 = vmatprep.mubr.bf16.mxu0 0
        %1212 = vmatmul.mubr.bf16.gmra.mrb[0].mxu0 %v1153
        %v1213 = vpop.f32.mrb[0].mxu0
        %v1214 = vadd.f32 %v1128, %v1213
        %v1215 = vpop.f32.mrb[0].mxu0
        %v1216 = vpop.f32.mrb[0].mxu0
        %v1217 = vadd.f32 %v1128, %v1216
        %v1218 = vpop.f32.mrb[0].mxu0
        %1219 = vdwg.mxu0
        %v1220 = vmax.f32 %v1190, 0.0
        %v1221 = vmax.f32 %v1193, 0.0
        %v1222 = vmax.f32 %v1198, 0.0
        %v1223 = vmax.f32 %v1201, 0.0
        %v1224 = vmax.f32 %v1206, 0.0
        %v1225 = vmax.f32 %v1209, 0.0
        %v1226 = vmax.f32 %v1214, 0.0
        %v1227 = vmax.f32 %v1217, 0.0
        %v1228 = vpack.c.bf16 %v1220, %v1220
        %v1229 = vpack.c.bf16 %v1221, %v1221
        %v1230 = vpack.c.bf16 %v1222, %v1222
        %v1231 = vpack.c.bf16 %v1223, %v1223
        %v1232 = vpack.c.bf16 %v1224, %v1224
        %v1233 = vpack.c.bf16 %v1225, %v1225
        %v1234 = vpack.c.bf16 %v1226, %v1226
        %v1235 = vpack.c.bf16 %v1227, %v1227
        %vm1236 = vcmask 64512
        %v1238 = vsel %vm1236, %v597, 0
        %vm1240 = vcmask 1043456
        %v1242 = vsel %vm1240, %v1228, 0
        %1244 = vmatprep.subr.bf16.mxu0 0
        %1245 = vmatpush1.bf16.msra.mxu0 %v1242
        %1246 = vmatprep.subr.bf16.mxu0 0
        %1247 = vmatpush1.bf16.msra.mxu0 0
        %1248 = vmatprep.subr.bf16.mxu0 0
        %1249 = vmatpush1.bf16.msra.mxu0 0
        %1250 = vmatprep.subr.bf16.mxu0 0
        %1251 = vmatpush1.bf16.msra.mxu0 0
        %1252 = vmatprep.subr.bf16.mxu0 0
        %1253 = vmatpush1.bf16.msra.mxu0 0
        %1254 = vmatprep.subr.bf16.mxu0 0
        %1255 = vmatpush1.bf16.msra.mxu0 0
        %1256 = vmatprep.subr.bf16.mxu0 0
        %1257 = vmatpush1.bf16.msra.mxu0 0
        %1258 = vmatprep.subr.bf16.mxu0 0
        %1259 = vmatpush1.bf16.msra.mxu0 0
        %1260 = vmatprep.subr.bf16.mxu0 0
        %1261 = vmatpush1.bf16.msra.mxu0 0
        %1262 = vmatprep.subr.bf16.mxu0 0
        %1263 = vmatpush1.bf16.msra.mxu0 0
        %1264 = vmatprep.subr.bf16.mxu0 0
        %1265 = vmatpush1.bf16.msra.mxu0 0
        %1266 = vmatprep.subr.bf16.mxu0 0
        %1267 = vmatpush1.bf16.msra.mxu0 0
        %1268 = vmatprep.subr.bf16.mxu0 0
        %1269 = vmatpush1.bf16.msra.mxu0 0
        %1270 = vmatprep.subr.bf16.mxu0 0
        %1271 = vmatpush1.bf16.msra.mxu0 0
        %1272 = vmatprep.subr.bf16.mxu0 0
        %1273 = vmatpush1.bf16.msra.mxu0 0
        %1274 = vmatprep.subr.bf16.mxu0 0
        %1275 = vmatpush1.bf16.msra.mxu0 0
        %1276 = vmatprep.mubr.bf16.mxu0 0
        %1277 = vmatmul.mubr.bf16.gmra.mrb[0].mxu0 %v1238
        %v1278 = vpop.f32.mrb[0].mxu0
        %v1279 = vadd.f32 0.0, %v1278
        %v1280 = vpop.f32.mrb[0].mxu0
        %v1281 = vpop.f32.mrb[0].mxu0
        %v1282 = vadd.f32 0.0, %v1281
        %v1283 = vpop.f32.mrb[0].mxu0
        %1284 = vdwg.mxu0
        %v1286 = vsel %vm1236, %v598, 0
        %v1289 = vsel %vm1240, %v1229, 0
        %1291 = vmatprep.subr.bf16.mxu0 0
        %1292 = vmatpush1.bf16.msra.mxu0 %v1289
        %1293 = vmatprep.subr.bf16.mxu0 0
        %1294 = vmatpush1.bf16.msra.mxu0 0
        %1295 = vmatprep.subr.bf16.mxu0 0
        %1296 = vmatpush1.bf16.msra.mxu0 0
        %1297 = vmatprep.subr.bf16.mxu0 0
        %1298 = vmatpush1.bf16.msra.mxu0 0
        %1299 = vmatprep.subr.bf16.mxu0 0
        %1300 = vmatpush1.bf16.msra.mxu0 0
        %1301 = vmatprep.subr.bf16.mxu0 0
        %1302 = vmatpush1.bf16.msra.mxu0 0
        %1303 = vmatprep.subr.bf16.mxu0 0
        %1304 = vmatpush1.bf16.msra.mxu0 0
        %1305 = vmatprep.subr.bf16.mxu0 0
        %1306 = vmatpush1.bf16.msra.mxu0 0
        %1307 = vmatprep.subr.bf16.mxu0 0
        %1308 = vmatpush1.bf16.msra.mxu0 0
        %1309 = vmatprep.subr.bf16.mxu0 0
        %1310 = vmatpush1.bf16.msra.mxu0 0
        %1311 = vmatprep.subr.bf16.mxu0 0
        %1312 = vmatpush1.bf16.msra.mxu0 0
        %1313 = vmatprep.subr.bf16.mxu0 0
        %1314 = vmatpush1.bf16.msra.mxu0 0
        %1315 = vmatprep.subr.bf16.mxu0 0
        %1316 = vmatpush1.bf16.msra.mxu0 0
        %1317 = vmatprep.subr.bf16.mxu0 0
        %1318 = vmatpush1.bf16.msra.mxu0 0
        %1319 = vmatprep.subr.bf16.mxu0 0
        %1320 = vmatpush1.bf16.msra.mxu0 0
        %1321 = vmatprep.subr.bf16.mxu0 0
        %1322 = vmatpush1.bf16.msra.mxu0 0
        %1323 = vmatprep.mubr.bf16.mxu0 0
        %1324 = vmatmul.mubr.bf16.gmra.mrb[0].mxu0 %v1286
        %v1325 = vpop.f32.mrb[0].mxu0
        %v1326 = vadd.f32 0.0, %v1325
        %v1327 = vpop.f32.mrb[0].mxu0
        %v1328 = vpop.f32.mrb[0].mxu0
        %v1329 = vadd.f32 0.0, %v1328
        %v1330 = vpop.f32.mrb[0].mxu0
        %1331 = vdwg.mxu0
        %v1333 = vsel %vm1236, %v599, 0
        %v1336 = vsel %vm1240, %v1230, 0
        %1338 = vmatprep.subr.bf16.mxu0 0
        %1339 = vmatpush1.bf16.msra.mxu0 %v1336
        %1340 = vmatprep.subr.bf16.mxu0 0
        %1341 = vmatpush1.bf16.msra.mxu0 0
        %1342 = vmatprep.subr.bf16.mxu0 0
        %1343 = vmatpush1.bf16.msra.mxu0 0
        %1344 = vmatprep.subr.bf16.mxu0 0
        %1345 = vmatpush1.bf16.msra.mxu0 0
        %1346 = vmatprep.subr.bf16.mxu0 0
        %1347 = vmatpush1.bf16.msra.mxu0 0
        %1348 = vmatprep.subr.bf16.mxu0 0
        %1349 = vmatpush1.bf16.msra.mxu0 0
        %1350 = vmatprep.subr.bf16.mxu0 0
        %1351 = vmatpush1.bf16.msra.mxu0 0
        %1352 = vmatprep.subr.bf16.mxu0 0
        %1353 = vmatpush1.bf16.msra.mxu0 0
        %1354 = vmatprep.subr.bf16.mxu0 0
        %1355 = vmatpush1.bf16.msra.mxu0 0
        %1356 = vmatprep.subr.bf16.mxu0 0
        %1357 = vmatpush1.bf16.msra.mxu0 0
        %1358 = vmatprep.subr.bf16.mxu0 0
        %1359 = vmatpush1.bf16.msra.mxu0 0
        %1360 = vmatprep.subr.bf16.mxu0 0
        %1361 = vmatpush1.bf16.msra.mxu0 0
        %1362 = vmatprep.subr.bf16.mxu0 0
        %1363 = vmatpush1.bf16.msra.mxu0 0
        %1364 = vmatprep.subr.bf16.mxu0 0
        %1365 = vmatpush1.bf16.msra.mxu0 0
        %1366 = vmatprep.subr.bf16.mxu0 0
        %1367 = vmatpush1.bf16.msra.mxu0 0
        %1368 = vmatprep.subr.bf16.mxu0 0
        %1369 = vmatpush1.bf16.msra.mxu0 0
        %1370 = vmatprep.mubr.bf16.mxu0 0
        %1371 = vmatmul.mubr.bf16.gmra.mrb[0].mxu0 %v1333
        %v1372 = vpop.f32.mrb[0].mxu0
        %v1373 = vadd.f32 0.0, %v1372
        %v1374 = vpop.f32.mrb[0].mxu0
        %v1375 = vpop.f32.mrb[0].mxu0
        %v1376 = vadd.f32 0.0, %v1375
        %v1377 = vpop.f32.mrb[0].mxu0
        %1378 = vdwg.mxu0
        %v1380 = vsel %vm1236, %v600, 0
        %v1383 = vsel %vm1240, %v1231, 0
        %1385 = vmatprep.subr.bf16.mxu0 0
        %1386 = vmatpush1.bf16.msra.mxu0 %v1383
        %1387 = vmatprep.subr.bf16.mxu0 0
        %1388 = vmatpush1.bf16.msra.mxu0 0
        %1389 = vmatprep.subr.bf16.mxu0 0
        %1390 = vmatpush1.bf16.msra.mxu0 0
        %1391 = vmatprep.subr.bf16.mxu0 0
        %1392 = vmatpush1.bf16.msra.mxu0 0
        %1393 = vmatprep.subr.bf16.mxu0 0
        %1394 = vmatpush1.bf16.msra.mxu0 0
        %1395 = vmatprep.subr.bf16.mxu0 0
        %1396 = vmatpush1.bf16.msra.mxu0 0
        %1397 = vmatprep.subr.bf16.mxu0 0
        %1398 = vmatpush1.bf16.msra.mxu0 0
        %1399 = vmatprep.subr.bf16.mxu0 0
        %1400 = vmatpush1.bf16.msra.mxu0 0
        %1401 = vmatprep.subr.bf16.mxu0 0
        %1402 = vmatpush1.bf16.msra.mxu0 0
        %1403 = vmatprep.subr.bf16.mxu0 0
        %1404 = vmatpush1.bf16.msra.mxu0 0
        %1405 = vmatprep.subr.bf16.mxu0 0
        %1406 = vmatpush1.bf16.msra.mxu0 0
        %1407 = vmatprep.subr.bf16.mxu0 0
        %1408 = vmatpush1.bf16.msra.mxu0 0
        %1409 = vmatprep.subr.bf16.mxu0 0
        %1410 = vmatpush1.bf16.msra.mxu0 0
        %1411 = vmatprep.subr.bf16.mxu0 0
        %1412 = vmatpush1.bf16.msra.mxu0 0
        %1413 = vmatprep.subr.bf16.mxu0 0
        %1414 = vmatpush1.bf16.msra.mxu0 0
        %1415 = vmatprep.subr.bf16.mxu0 0
        %1416 = vmatpush1.bf16.msra.mxu0 0
        %1417 = vmatprep.mubr.bf16.mxu0 0
        %1418 = vmatmul.mubr.bf16.gmra.mrb[0].mxu0 %v1380
        %v1419 = vpop.f32.mrb[0].mxu0
        %v1420 = vadd.f32 0.0, %v1419
        %v1421 = vpop.f32.mrb[0].mxu0
        %v1422 = vpop.f32.mrb[0].mxu0
        %v1423 = vadd.f32 0.0, %v1422
        %v1424 = vpop.f32.mrb[0].mxu0
        %1425 = vdwg.mxu0
        %v1427 = vsel %vm1236, %v601, 0
        %v1430 = vsel %vm1240, %v1232, 0
        %1432 = vmatprep.subr.bf16.mxu0 0
        %1433 = vmatpush1.bf16.msra.mxu0 %v1430
        %1434 = vmatprep.subr.bf16.mxu0 0
        %1435 = vmatpush1.bf16.msra.mxu0 0
        %1436 = vmatprep.subr.bf16.mxu0 0
        %1437 = vmatpush1.bf16.msra.mxu0 0
        %1438 = vmatprep.subr.bf16.mxu0 0
        %1439 = vmatpush1.bf16.msra.mxu0 0
        %1440 = vmatprep.subr.bf16.mxu0 0
        %1441 = vmatpush1.bf16.msra.mxu0 0
        %1442 = vmatprep.subr.bf16.mxu0 0
        %1443 = vmatpush1.bf16.msra.mxu0 0
        %1444 = vmatprep.subr.bf16.mxu0 0
        %1445 = vmatpush1.bf16.msra.mxu0 0
        %1446 = vmatprep.subr.bf16.mxu0 0
        %1447 = vmatpush1.bf16.msra.mxu0 0
        %1448 = vmatprep.subr.bf16.mxu0 0
        %1449 = vmatpush1.bf16.msra.mxu0 0
        %1450 = vmatprep.subr.bf16.mxu0 0
        %1451 = vmatpush1.bf16.msra.mxu0 0
        %1452 = vmatprep.subr.bf16.mxu0 0
        %1453 = vmatpush1.bf16.msra.mxu0 0
        %1454 = vmatprep.subr.bf16.mxu0 0
        %1455 = vmatpush1.bf16.msra.mxu0 0
        %1456 = vmatprep.subr.bf16.mxu0 0
        %1457 = vmatpush1.bf16.msra.mxu0 0
        %1458 = vmatprep.subr.bf16.mxu0 0
        %1459 = vmatpush1.bf16.msra.mxu0 0
        %1460 = vmatprep.subr.bf16.mxu0 0
        %1461 = vmatpush1.bf16.msra.mxu0 0
        %1462 = vmatprep.subr.bf16.mxu0 0
        %1463 = vmatpush1.bf16.msra.mxu0 0
        %1464 = vmatprep.mubr.bf16.mxu0 0
        %1465 = vmatmul.mubr.bf16.gmra.mrb[0].mxu0 %v1427
        %v1466 = vpop.f32.mrb[0].mxu0
        %v1467 = vadd.f32 0.0, %v1466
        %v1468 = vpop.f32.mrb[0].mxu0
        %v1469 = vpop.f32.mrb[0].mxu0
        %v1470 = vadd.f32 0.0, %v1469
        %v1471 = vpop.f32.mrb[0].mxu0
        %1472 = vdwg.mxu0
        %v1474 = vsel %vm1236, %v602, 0
        %v1477 = vsel %vm1240, %v1233, 0
        %1479 = vmatprep.subr.bf16.mxu0 0
        %1480 = vmatpush1.bf16.msra.mxu0 %v1477
        %1481 = vmatprep.subr.bf16.mxu0 0
        %1482 = vmatpush1.bf16.msra.mxu0 0
        %1483 = vmatprep.subr.bf16.mxu0 0
        %1484 = vmatpush1.bf16.msra.mxu0 0
        %1485 = vmatprep.subr.bf16.mxu0 0
        %1486 = vmatpush1.bf16.msra.mxu0 0
        %1487 = vmatprep.subr.bf16.mxu0 0
        %1488 = vmatpush1.bf16.msra.mxu0 0
        %1489 = vmatprep.subr.bf16.mxu0 0
        %1490 = vmatpush1.bf16.msra.mxu0 0
        %1491 = vmatprep.subr.bf16.mxu0 0
        %1492 = vmatpush1.bf16.msra.mxu0 0
        %1493 = vmatprep.subr.bf16.mxu0 0
        %1494 = vmatpush1.bf16.msra.mxu0 0
        %1495 = vmatprep.subr.bf16.mxu0 0
        %1496 = vmatpush1.bf16.msra.mxu0 0
        %1497 = vmatprep.subr.bf16.mxu0 0
        %1498 = vmatpush1.bf16.msra.mxu0 0
        %1499 = vmatprep.subr.bf16.mxu0 0
        %1500 = vmatpush1.bf16.msra.mxu0 0
        %1501 = vmatprep.subr.bf16.mxu0 0
        %1502 = vmatpush1.bf16.msra.mxu0 0
        %1503 = vmatprep.subr.bf16.mxu0 0
        %1504 = vmatpush1.bf16.msra.mxu0 0
        %1505 = vmatprep.subr.bf16.mxu0 0
        %1506 = vmatpush1.bf16.msra.mxu0 0
        %1507 = vmatprep.subr.bf16.mxu0 0
        %1508 = vmatpush1.bf16.msra.mxu0 0
        %1509 = vmatprep.subr.bf16.mxu0 0
        %1510 = vmatpush1.bf16.msra.mxu0 0
        %1511 = vmatprep.mubr.bf16.mxu0 0
        %1512 = vmatmul.mubr.bf16.gmra.mrb[0].mxu0 %v1474
        %v1513 = vpop.f32.mrb[0].mxu0
        %v1514 = vadd.f32 0.0, %v1513
        %v1515 = vpop.f32.mrb[0].mxu0
        %v1516 = vpop.f32.mrb[0].mxu0
        %v1517 = vadd.f32 0.0, %v1516
        %v1518 = vpop.f32.mrb[0].mxu0
        %1519 = vdwg.mxu0
        %v1521 = vsel %vm1236, %v603, 0
        %v1524 = vsel %vm1240, %v1234, 0
        %1526 = vmatprep.subr.bf16.mxu0 0
        %1527 = vmatpush1.bf16.msra.mxu0 %v1524
        %1528 = vmatprep.subr.bf16.mxu0 0
        %1529 = vmatpush1.bf16.msra.mxu0 0
        %1530 = vmatprep.subr.bf16.mxu0 0
        %1531 = vmatpush1.bf16.msra.mxu0 0
        %1532 = vmatprep.subr.bf16.mxu0 0
        %1533 = vmatpush1.bf16.msra.mxu0 0
        %1534 = vmatprep.subr.bf16.mxu0 0
        %1535 = vmatpush1.bf16.msra.mxu0 0
        %1536 = vmatprep.subr.bf16.mxu0 0
        %1537 = vmatpush1.bf16.msra.mxu0 0
        %1538 = vmatprep.subr.bf16.mxu0 0
        %1539 = vmatpush1.bf16.msra.mxu0 0
        %1540 = vmatprep.subr.bf16.mxu0 0
        %1541 = vmatpush1.bf16.msra.mxu0 0
        %1542 = vmatprep.subr.bf16.mxu0 0
        %1543 = vmatpush1.bf16.msra.mxu0 0
        %1544 = vmatprep.subr.bf16.mxu0 0
        %1545 = vmatpush1.bf16.msra.mxu0 0
        %1546 = vmatprep.subr.bf16.mxu0 0
        %1547 = vmatpush1.bf16.msra.mxu0 0
        %1548 = vmatprep.subr.bf16.mxu0 0
        %1549 = vmatpush1.bf16.msra.mxu0 0
        %1550 = vmatprep.subr.bf16.mxu0 0
        %1551 = vmatpush1.bf16.msra.mxu0 0
        %1552 = vmatprep.subr.bf16.mxu0 0
        %1553 = vmatpush1.bf16.msra.mxu0 0
        %1554 = vmatprep.subr.bf16.mxu0 0
        %1555 = vmatpush1.bf16.msra.mxu0 0
        %1556 = vmatprep.subr.bf16.mxu0 0
        %1557 = vmatpush1.bf16.msra.mxu0 0
        %1558 = vmatprep.mubr.bf16.mxu0 0
        %1559 = vmatmul.mubr.bf16.gmra.mrb[0].mxu0 %v1521
        %v1560 = vpop.f32.mrb[0].mxu0
        %v1561 = vadd.f32 0.0, %v1560
        %v1562 = vpop.f32.mrb[0].mxu0
        %v1563 = vpop.f32.mrb[0].mxu0
        %v1564 = vadd.f32 0.0, %v1563
        %v1565 = vpop.f32.mrb[0].mxu0
        %1566 = vdwg.mxu0
        %v1568 = vsel %vm1236, %v604, 0
        %v1571 = vsel %vm1240, %v1235, 0
        %1573 = vmatprep.subr.bf16.mxu0 0
        %1574 = vmatpush1.bf16.msra.mxu0 %v1571
        %1575 = vmatprep.subr.bf16.mxu0 0
        %1576 = vmatpush1.bf16.msra.mxu0 0
        %1577 = vmatprep.subr.bf16.mxu0 0
        %1578 = vmatpush1.bf16.msra.mxu0 0
        %1579 = vmatprep.subr.bf16.mxu0 0
        %1580 = vmatpush1.bf16.msra.mxu0 0
        %1581 = vmatprep.subr.bf16.mxu0 0
        %1582 = vmatpush1.bf16.msra.mxu0 0
        %1583 = vmatprep.subr.bf16.mxu0 0
        %1584 = vmatpush1.bf16.msra.mxu0 0
        %1585 = vmatprep.subr.bf16.mxu0 0
        %1586 = vmatpush1.bf16.msra.mxu0 0
        %1587 = vmatprep.subr.bf16.mxu0 0
        %1588 = vmatpush1.bf16.msra.mxu0 0
        %1589 = vmatprep.subr.bf16.mxu0 0
        %1590 = vmatpush1.bf16.msra.mxu0 0
        %1591 = vmatprep.subr.bf16.mxu0 0
        %1592 = vmatpush1.bf16.msra.mxu0 0
        %1593 = vmatprep.subr.bf16.mxu0 0
        %1594 = vmatpush1.bf16.msra.mxu0 0
        %1595 = vmatprep.subr.bf16.mxu0 0
        %1596 = vmatpush1.bf16.msra.mxu0 0
        %1597 = vmatprep.subr.bf16.mxu0 0
        %1598 = vmatpush1.bf16.msra.mxu0 0
        %1599 = vmatprep.subr.bf16.mxu0 0
        %1600 = vmatpush1.bf16.msra.mxu0 0
        %1601 = vmatprep.subr.bf16.mxu0 0
        %1602 = vmatpush1.bf16.msra.mxu0 0
        %1603 = vmatprep.subr.bf16.mxu0 0
        %1604 = vmatpush1.bf16.msra.mxu0 0
        %1605 = vmatprep.mubr.bf16.mxu0 0
        %1606 = vmatmul.mubr.bf16.gmra.mrb[0].mxu0 %v1568
        %v1607 = vpop.f32.mrb[0].mxu0
        %v1608 = vadd.f32 0.0, %v1607
        %v1609 = vpop.f32.mrb[0].mxu0
        %v1610 = vpop.f32.mrb[0].mxu0
        %v1611 = vadd.f32 0.0, %v1610
        %v1612 = vpop.f32.mrb[0].mxu0
        %1613 = vdwg.mxu0
        %v1614 = vld [vmem:[%s7] sm:$0xf]
        %v1615 = vld [vmem:[%s7 + $0x4] sm:$0xf]
        %v1616 = vld [vmem:[%s7 + $0x8] sm:$0xf]
        %v1617 = vld [vmem:[%s7 + $0xc] sm:$0xf]
        %v1618 = vpack.c.bf16 %v1282, %v1279
        %v1619 = vpack.c.bf16 %v1329, %v1326
        %v1620 = vpack.c.bf16 %v1376, %v1373
        %v1621 = vpack.c.bf16 %v1423, %v1420
        %v1622 = vpack.c.bf16 %v1470, %v1467
        %v1623 = vpack.c.bf16 %v1517, %v1514
        %v1624 = vpack.c.bf16 %v1564, %v1561
        %v1625 = vpack.c.bf16 %v1611, %v1608
        %v1626 = vld [vmem:[%s8] sm:$0xf]
        %v1627 = vld [vmem:[%s8 + $0x4] sm:$0xf]
        %v1628 = vld [vmem:[%s8 + $0x8] sm:$0xf]
        %v1629 = vld [vmem:[%s8 + $0xc] sm:$0xf]
        %v1634 = vunpack.c.l.b16 %v1626
        %v1635 = vunpack.c.l.b16 %v1627
        %v1636 = vunpack.c.l.b16 %v1628
        %v1637 = vunpack.c.l.b16 %v1629
        %v1638 = vpack.c.b16 %v1635, %v1634
        %v1639 = vpack.c.b16 %v1637, %v1636
        %v1643 = vsel %vm1142, %v1618, 0
        %v1646 = vsel %vm1142, %v1619, 0
        %v1649 = vsel %vm1142, %v1620, 0
        %v1652 = vsel %vm1142, %v1621, 0
        %v1655 = vsel %vm1142, %v1622, 0
        %v1658 = vsel %vm1142, %v1623, 0
        %v1661 = vsel %vm1142, %v1624, 0
        %v1664 = vsel %vm1142, %v1625, 0
        %1666 = vmatprep.subr.bf16.mxu0 0
        %1667 = vmatpush1.bf16.msra.mxu0 %v1638
        %1668 = vmatprep.subr.bf16.mxu0 0
        %1669 = vmatpush1.bf16.msra.mxu0 %v1639
        %1670 = vmatprep.subr.bf16.mxu0 0
        %1671 = vmatpush1.bf16.msra.mxu0 0
        %1672 = vmatprep.subr.bf16.mxu0 0
        %1673 = vmatpush1.bf16.msra.mxu0 0
        %1674 = vmatprep.subr.bf16.mxu0 0
        %1675 = vmatpush1.bf16.msra.mxu0 0
        %1676 = vmatprep.subr.bf16.mxu0 0
        %1677 = vmatpush1.bf16.msra.mxu0 0
        %1678 = vmatprep.subr.bf16.mxu0 0
        %1679 = vmatpush1.bf16.msra.mxu0 0
        %1680 = vmatprep.subr.bf16.mxu0 0
        %1681 = vmatpush1.bf16.msra.mxu0 0
        %1682 = vmatprep.subr.bf16.mxu0 0
        %1683 = vmatpush1.bf16.msra.mxu0 0
        %1684 = vmatprep.subr.bf16.mxu0 0
        %1685 = vmatpush1.bf16.msra.mxu0 0
        %1686 = vmatprep.subr.bf16.mxu0 0
        %1687 = vmatpush1.bf16.msra.mxu0 0
        %1688 = vmatprep.subr.bf16.mxu0 0
        %1689 = vmatpush1.bf16.msra.mxu0 0
        %1690 = vmatprep.subr.bf16.mxu0 0
        %1691 = vmatpush1.bf16.msra.mxu0 0
        %1692 = vmatprep.subr.bf16.mxu0 0
        %1693 = vmatpush1.bf16.msra.mxu0 0
        %1694 = vmatprep.subr.bf16.mxu0 0
        %1695 = vmatpush1.bf16.msra.mxu0 0
        %1696 = vmatprep.subr.bf16.mxu0 0
        %1697 = vmatpush1.bf16.msra.mxu0 0
        %1698 = vmatprep.mubr.bf16.mxu0 0
        %1699 = vmatmul.mubr.bf16.gmra.mrb[0].mxu0 %v1643
        %v1700 = vpop.f32.mrb[0].mxu0
        %v1701 = vadd.f32 0.0, %v1700
        %v1702 = vpop.f32.mrb[0].mxu0
        %v1703 = vpop.f32.mrb[0].mxu0
        %v1704 = vadd.f32 0.0, %v1703
        %v1705 = vpop.f32.mrb[0].mxu0
        %1706 = vmatprep.mubr.bf16.mxu0 0
        %1707 = vmatmul.mubr.bf16.gmra.mrb[0].mxu0 %v1646
        %v1708 = vpop.f32.mrb[0].mxu0
        %v1709 = vadd.f32 0.0, %v1708
        %v1710 = vpop.f32.mrb[0].mxu0
        %v1711 = vpop.f32.mrb[0].mxu0
        %v1712 = vadd.f32 0.0, %v1711
        %v1713 = vpop.f32.mrb[0].mxu0
        %1714 = vmatprep.mubr.bf16.mxu0 0
        %1715 = vmatmul.mubr.bf16.gmra.mrb[0].mxu0 %v1649
        %v1716 = vpop.f32.mrb[0].mxu0
        %v1717 = vadd.f32 0.0, %v1716
        %v1718 = vpop.f32.mrb[0].mxu0
        %v1719 = vpop.f32.mrb[0].mxu0
        %v1720 = vadd.f32 0.0, %v1719
        %v1721 = vpop.f32.mrb[0].mxu0
        %1722 = vmatprep.mubr.bf16.mxu0 0
        %1723 = vmatmul.mubr.bf16.gmra.mrb[0].mxu0 %v1652
        %v1724 = vpop.f32.mrb[0].mxu0
        %v1725 = vadd.f32 0.0, %v1724
        %v1726 = vpop.f32.mrb[0].mxu0
        %v1727 = vpop.f32.mrb[0].mxu0
        %v1728 = vadd.f32 0.0, %v1727
        %v1729 = vpop.f32.mrb[0].mxu0
        %1730 = vmatprep.mubr.bf16.mxu0 0
        %1731 = vmatmul.mubr.bf16.gmra.mrb[0].mxu0 %v1655
        %v1732 = vpop.f32.mrb[0].mxu0
        %v1733 = vadd.f32 0.0, %v1732
        %v1734 = vpop.f32.mrb[0].mxu0
        %v1735 = vpop.f32.mrb[0].mxu0
        %v1736 = vadd.f32 0.0, %v1735
        %v1737 = vpop.f32.mrb[0].mxu0
        %1738 = vmatprep.mubr.bf16.mxu0 0
        %1739 = vmatmul.mubr.bf16.gmra.mrb[0].mxu0 %v1658
        %v1740 = vpop.f32.mrb[0].mxu0
        %v1741 = vadd.f32 0.0, %v1740
        %v1742 = vpop.f32.mrb[0].mxu0
        %v1743 = vpop.f32.mrb[0].mxu0
        %v1744 = vadd.f32 0.0, %v1743
        %v1745 = vpop.f32.mrb[0].mxu0
        %1746 = vmatprep.mubr.bf16.mxu0 0
        %1747 = vmatmul.mubr.bf16.gmra.mrb[0].mxu0 %v1661
        %v1748 = vpop.f32.mrb[0].mxu0
        %v1749 = vadd.f32 0.0, %v1748
        %v1750 = vpop.f32.mrb[0].mxu0
        %v1751 = vpop.f32.mrb[0].mxu0
        %v1752 = vadd.f32 0.0, %v1751
        %v1753 = vpop.f32.mrb[0].mxu0
        %1754 = vmatprep.mubr.bf16.mxu0 0
        %1755 = vmatmul.mubr.bf16.gmra.mrb[0].mxu0 %v1664
        %v1756 = vpop.f32.mrb[0].mxu0
        %v1757 = vadd.f32 0.0, %v1756
        %v1758 = vpop.f32.mrb[0].mxu0
        %v1759 = vpop.f32.mrb[0].mxu0
        %v1760 = vadd.f32 0.0, %v1759
        %v1761 = vpop.f32.mrb[0].mxu0
        %1762 = vdwg.mxu0
        %v1767 = vunpack.c.l.b16 %v1614
        %v1768 = vunpack.c.l.b16 %v1615
        %v1769 = vunpack.c.l.b16 %v1616
        %v1770 = vunpack.c.l.b16 %v1617
        %v1771 = vpack.c.b16 %v1768, %v1767
        %v1772 = vpack.c.b16 %v1770, %v1769
        %v1776 = vsel %vm1142, %v763, 0
        %v1779 = vsel %vm1142, %v764, 0
        %v1782 = vsel %vm1142, %v765, 0
        %v1785 = vsel %vm1142, %v766, 0
        %v1788 = vsel %vm1142, %v767, 0
        %v1791 = vsel %vm1142, %v768, 0
        %v1794 = vsel %vm1142, %v769, 0
        %v1797 = vsel %vm1142, %v770, 0
        %1799 = vmatprep.subr.bf16.mxu0 0
        %1800 = vmatpush1.bf16.msra.mxu0 %v1771
        %1801 = vmatprep.subr.bf16.mxu0 0
        %1802 = vmatpush1.bf16.msra.mxu0 %v1772
        %1803 = vmatprep.subr.bf16.mxu0 0
        %1804 = vmatpush1.bf16.msra.mxu0 0
        %1805 = vmatprep.subr.bf16.mxu0 0
        %1806 = vmatpush1.bf16.msra.mxu0 0
        %1807 = vmatprep.subr.bf16.mxu0 0
        %1808 = vmatpush1.bf16.msra.mxu0 0
        %1809 = vmatprep.subr.bf16.mxu0 0
        %1810 = vmatpush1.bf16.msra.mxu0 0
        %1811 = vmatprep.subr.bf16.mxu0 0
        %1812 = vmatpush1.bf16.msra.mxu0 0
        %1813 = vmatprep.subr.bf16.mxu0 0
        %1814 = vmatpush1.bf16.msra.mxu0 0
        %1815 = vmatprep.subr.bf16.mxu0 0
        %1816 = vmatpush1.bf16.msra.mxu0 0
        %1817 = vmatprep.subr.bf16.mxu0 0
        %1818 = vmatpush1.bf16.msra.mxu0 0
        %1819 = vmatprep.subr.bf16.mxu0 0
        %1820 = vmatpush1.bf16.msra.mxu0 0
        %1821 = vmatprep.subr.bf16.mxu0 0
        %1822 = vmatpush1.bf16.msra.mxu0 0
        %1823 = vmatprep.subr.bf16.mxu0 0
        %1824 = vmatpush1.bf16.msra.mxu0 0
        %1825 = vmatprep.subr.bf16.mxu0 0
        %1826 = vmatpush1.bf16.msra.mxu0 0
        %1827 = vmatprep.subr.bf16.mxu0 0
        %1828 = vmatpush1.bf16.msra.mxu0 0
        %1829 = vmatprep.subr.bf16.mxu0 0
        %1830 = vmatpush1.bf16.msra.mxu0 0
        %1831 = vmatprep.mubr.bf16.mxu0 0
        %1832 = vmatmul.mubr.bf16.gmra.mrb[0].mxu0 %v1776
        %v1833 = vpop.f32.mrb[0].mxu0
        %v1834 = vadd.f32 %v1701, %v1833
        %v1835 = vpop.f32.mrb[0].mxu0
        %v1836 = vpop.f32.mrb[0].mxu0
        %v1837 = vadd.f32 %v1704, %v1836
        %v1838 = vpop.f32.mrb[0].mxu0
        %1839 = vmatprep.mubr.bf16.mxu0 0
        %1840 = vmatmul.mubr.bf16.gmra.mrb[0].mxu0 %v1779
        %v1841 = vpop.f32.mrb[0].mxu0
        %v1842 = vadd.f32 %v1709, %v1841
        %v1843 = vpop.f32.mrb[0].mxu0
        %v1844 = vpop.f32.mrb[0].mxu0
        %v1845 = vadd.f32 %v1712, %v1844
        %v1846 = vpop.f32.mrb[0].mxu0
        %1847 = vmatprep.mubr.bf16.mxu0 0
        %1848 = vmatmul.mubr.bf16.gmra.mrb[0].mxu0 %v1782
        %v1849 = vpop.f32.mrb[0].mxu0
        %v1850 = vadd.f32 %v1717, %v1849
        %v1851 = vpop.f32.mrb[0].mxu0
        %v1852 = vpop.f32.mrb[0].mxu0
        %v1853 = vadd.f32 %v1720, %v1852
        %v1854 = vpop.f32.mrb[0].mxu0
        %1855 = vmatprep.mubr.bf16.mxu0 0
        %1856 = vmatmul.mubr.bf16.gmra.mrb[0].mxu0 %v1785
        %v1857 = vpop.f32.mrb[0].mxu0
        %v1858 = vadd.f32 %v1725, %v1857
        %v1859 = vpop.f32.mrb[0].mxu0
        %v1860 = vpop.f32.mrb[0].mxu0
        %v1861 = vadd.f32 %v1728, %v1860
        %v1862 = vpop.f32.mrb[0].mxu0
        %1863 = vmatprep.mubr.bf16.mxu0 0
        %1864 = vmatmul.mubr.bf16.gmra.mrb[0].mxu0 %v1788
        %v1865 = vpop.f32.mrb[0].mxu0
        %v1866 = vadd.f32 %v1733, %v1865
        %v1867 = vpop.f32.mrb[0].mxu0
        %v1868 = vpop.f32.mrb[0].mxu0
        %v1869 = vadd.f32 %v1736, %v1868
        %v1870 = vpop.f32.mrb[0].mxu0
        %1871 = vmatprep.mubr.bf16.mxu0 0
        %1872 = vmatmul.mubr.bf16.gmra.mrb[0].mxu0 %v1791
        %v1873 = vpop.f32.mrb[0].mxu0
        %v1874 = vadd.f32 %v1741, %v1873
        %v1875 = vpop.f32.mrb[0].mxu0
        %v1876 = vpop.f32.mrb[0].mxu0
        %v1877 = vadd.f32 %v1744, %v1876
        %v1878 = vpop.f32.mrb[0].mxu0
        %1879 = vmatprep.mubr.bf16.mxu0 0
        %1880 = vmatmul.mubr.bf16.gmra.mrb[0].mxu0 %v1794
        %v1881 = vpop.f32.mrb[0].mxu0
        %v1882 = vadd.f32 %v1749, %v1881
        %v1883 = vpop.f32.mrb[0].mxu0
        %v1884 = vpop.f32.mrb[0].mxu0
        %v1885 = vadd.f32 %v1752, %v1884
        %v1886 = vpop.f32.mrb[0].mxu0
        %1887 = vmatprep.mubr.bf16.mxu0 0
        %1888 = vmatmul.mubr.bf16.gmra.mrb[0].mxu0 %v1797
        %v1889 = vpop.f32.mrb[0].mxu0
        %v1890 = vadd.f32 %v1757, %v1889
        %v1891 = vpop.f32.mrb[0].mxu0
        %v1892 = vpop.f32.mrb[0].mxu0
        %v1893 = vadd.f32 %v1760, %v1892
        %v1894 = vpop.f32.mrb[0].mxu0
        %1895 = vdwg.mxu0
        %v1896 = vld [vmem:[%s9] sm:$0x1]
        %v1898 = vlaneseq
        %v1899 = vshrl.u32 %v1898, 7
        %v1900 = vsub.s32 0, %v1899
        %v1901 = vrot.slane %v1896, %v1900
        %v1903 = vadd.f32 %v1834, %v1901
        %v1904 = vadd.f32 %v1837, %v1901
        %v1905 = vadd.f32 %v1842, %v1901
        %v1906 = vadd.f32 %v1845, %v1901
        %v1907 = vadd.f32 %v1850, %v1901
        %v1908 = vadd.f32 %v1853, %v1901
        %v1909 = vadd.f32 %v1858, %v1901
        %v1910 = vadd.f32 %v1861, %v1901
        %v1911 = vadd.f32 %v1866, %v1901
        %v1912 = vadd.f32 %v1869, %v1901
        %v1913 = vadd.f32 %v1874, %v1901
        %v1914 = vadd.f32 %v1877, %v1901
        %v1915 = vadd.f32 %v1882, %v1901
        %v1916 = vadd.f32 %v1885, %v1901
        %v1917 = vadd.f32 %v1890, %v1901
        %v1918 = vadd.f32 %v1893, %v1901
        %v1919 = vmax.f32 %v1903, 0.0
        %v1920 = vmax.f32 %v1904, 0.0
        %v1921 = vmax.f32 %v1905, 0.0
        %v1922 = vmax.f32 %v1906, 0.0
        %v1923 = vmax.f32 %v1907, 0.0
        %v1924 = vmax.f32 %v1908, 0.0
        %v1925 = vmax.f32 %v1909, 0.0
        %v1926 = vmax.f32 %v1910, 0.0
        %v1927 = vmax.f32 %v1911, 0.0
        %v1928 = vmax.f32 %v1912, 0.0
        %v1929 = vmax.f32 %v1913, 0.0
        %v1930 = vmax.f32 %v1914, 0.0
        %v1931 = vmax.f32 %v1915, 0.0
        %v1932 = vmax.f32 %v1916, 0.0
        %v1933 = vmax.f32 %v1917, 0.0
        %v1934 = vmax.f32 %v1918, 0.0
        %v1935 = vpack.c.bf16 %v1920, %v1919
        %v1936 = vpack.c.bf16 %v1922, %v1921
        %v1937 = vpack.c.bf16 %v1924, %v1923
        %v1938 = vpack.c.bf16 %v1926, %v1925
        %v1939 = vpack.c.bf16 %v1928, %v1927
        %v1940 = vpack.c.bf16 %v1930, %v1929
        %v1941 = vpack.c.bf16 %v1932, %v1931
        %v1942 = vpack.c.bf16 %v1934, %v1933
        %1943 = vmatprep.subr.bf16.mxu0 0
        %1944 = vmatpush1.bf16.msra.mxu0 %v1935
        %1945 = vmatprep.subr.bf16.mxu0 0
        %1946 = vmatpush1.bf16.msra.mxu0 0
        %1947 = vmatprep.subr.bf16.mxu0 0
        %1948 = vmatpush1.bf16.msra.mxu0 0
        %1949 = vmatprep.subr.bf16.mxu0 0
        %1950 = vmatpush1.bf16.msra.mxu0 0
        %1951 = vmatprep.subr.bf16.mxu0 0
        %1952 = vmatpush1.bf16.msra.mxu0 0
        %1953 = vmatprep.subr.bf16.mxu0 0
        %1954 = vmatpush1.bf16.msra.mxu0 0
        %1955 = vmatprep.subr.bf16.mxu0 0
        %1956 = vmatpush1.bf16.msra.mxu0 0
        %1957 = vmatprep.subr.bf16.mxu0 0
        %1958 = vmatpush1.bf16.msra.mxu0 0
        %1959 = vmatprep.subr.bf16.mxu0 0
        %1960 = vmatpush1.bf16.msra.mxu0 0
        %1961 = vmatprep.subr.bf16.mxu0 0
        %1962 = vmatpush1.bf16.msra.mxu0 0
        %1963 = vmatprep.subr.bf16.mxu0 0
        %1964 = vmatpush1.bf16.msra.mxu0 0
        %1965 = vmatprep.subr.bf16.mxu0 0
        %1966 = vmatpush1.bf16.msra.mxu0 0
        %1967 = vmatprep.subr.bf16.mxu0 0
        %1968 = vmatpush1.bf16.msra.mxu0 0
        %1969 = vmatprep.subr.bf16.mxu0 0
        %1970 = vmatpush1.bf16.msra.mxu0 0
        %1971 = vmatprep.subr.bf16.mxu0 0
        %1972 = vmatpush1.bf16.msra.mxu0 0
        %1973 = vmatprep.subr.bf16.mxu0 0
        %1974 = vmatpush1.bf16.msra.mxu0 0
        %1975 = vmatprep.mubr.bf16.mxu0 0
        %1976 = vmatmul.mubr.bf16.gmra.mrb[0].mxu0 %v772
        %v1977 = vpop.f32.mrb[0].mxu0
        %v1978 = vadd.f32 0.0, %v1977
        %v1979 = vpop.f32.mrb[0].mxu0
        %v1980 = vpop.f32.mrb[0].mxu0
        %v1981 = vpop.f32.mrb[0].mxu0
        %1982 = vdwg.mxu0
        %1983 = vmatprep.subr.bf16.mxu0 0
        %1984 = vmatpush1.bf16.msra.mxu0 %v1936
        %1985 = vmatprep.subr.bf16.mxu0 0
        %1986 = vmatpush1.bf16.msra.mxu0 0
        %1987 = vmatprep.subr.bf16.mxu0 0
        %1988 = vmatpush1.bf16.msra.mxu0 0
        %1989 = vmatprep.subr.bf16.mxu0 0
        %1990 = vmatpush1.bf16.msra.mxu0 0
        %1991 = vmatprep.subr.bf16.mxu0 0
        %1992 = vmatpush1.bf16.msra.mxu0 0
        %1993 = vmatprep.subr.bf16.mxu0 0
        %1994 = vmatpush1.bf16.msra.mxu0 0
        %1995 = vmatprep.subr.bf16.mxu0 0
        %1996 = vmatpush1.bf16.msra.mxu0 0
        %1997 = vmatprep.subr.bf16.mxu0 0
        %1998 = vmatpush1.bf16.msra.mxu0 0
        %1999 = vmatprep.subr.bf16.mxu0 0
        %2000 = vmatpush1.bf16.msra.mxu0 0
        %2001 = vmatprep.subr.bf16.mxu0 0
        %2002 = vmatpush1.bf16.msra.mxu0 0
        %2003 = vmatprep.subr.bf16.mxu0 0
        %2004 = vmatpush1.bf16.msra.mxu0 0
        %2005 = vmatprep.subr.bf16.mxu0 0
        %2006 = vmatpush1.bf16.msra.mxu0 0
        %2007 = vmatprep.subr.bf16.mxu0 0
        %2008 = vmatpush1.bf16.msra.mxu0 0
        %2009 = vmatprep.subr.bf16.mxu0 0
        %2010 = vmatpush1.bf16.msra.mxu0 0
        %2011 = vmatprep.subr.bf16.mxu0 0
        %2012 = vmatpush1.bf16.msra.mxu0 0
        %2013 = vmatprep.subr.bf16.mxu0 0
        %2014 = vmatpush1.bf16.msra.mxu0 0
        %2015 = vmatprep.mubr.bf16.mxu0 0
        %2016 = vmatmul.mubr.bf16.gmra.mrb[0].mxu0 %v815
        %v2017 = vpop.f32.mrb[0].mxu0
        %v2018 = vadd.f32 0.0, %v2017
        %v2019 = vpop.f32.mrb[0].mxu0
        %v2020 = vpop.f32.mrb[0].mxu0
        %v2021 = vpop.f32.mrb[0].mxu0
        %2022 = vdwg.mxu0
        %2023 = vmatprep.subr.bf16.mxu0 0
        %2024 = vmatpush1.bf16.msra.mxu0 %v1937
        %2025 = vmatprep.subr.bf16.mxu0 0
        %2026 = vmatpush1.bf16.msra.mxu0 0
        %2027 = vmatprep.subr.bf16.mxu0 0
        %2028 = vmatpush1.bf16.msra.mxu0 0
        %2029 = vmatprep.subr.bf16.mxu0 0
        %2030 = vmatpush1.bf16.msra.mxu0 0
        %2031 = vmatprep.subr.bf16.mxu0 0
        %2032 = vmatpush1.bf16.msra.mxu0 0
        %2033 = vmatprep.subr.bf16.mxu0 0
        %2034 = vmatpush1.bf16.msra.mxu0 0
        %2035 = vmatprep.subr.bf16.mxu0 0
        %2036 = vmatpush1.bf16.msra.mxu0 0
        %2037 = vmatprep.subr.bf16.mxu0 0
        %2038 = vmatpush1.bf16.msra.mxu0 0
        %2039 = vmatprep.subr.bf16.mxu0 0
        %2040 = vmatpush1.bf16.msra.mxu0 0
        %2041 = vmatprep.subr.bf16.mxu0 0
        %2042 = vmatpush1.bf16.msra.mxu0 0
        %2043 = vmatprep.subr.bf16.mxu0 0
        %2044 = vmatpush1.bf16.msra.mxu0 0
        %2045 = vmatprep.subr.bf16.mxu0 0
        %2046 = vmatpush1.bf16.msra.mxu0 0
        %2047 = vmatprep.subr.bf16.mxu0 0
        %2048 = vmatpush1.bf16.msra.mxu0 0
        %2049 = vmatprep.subr.bf16.mxu0 0
        %2050 = vmatpush1.bf16.msra.mxu0 0
        %2051 = vmatprep.subr.bf16.mxu0 0
        %2052 = vmatpush1.bf16.msra.mxu0 0
        %2053 = vmatprep.subr.bf16.mxu0 0
        %2054 = vmatpush1.bf16.msra.mxu0 0
        %2055 = vmatprep.mubr.bf16.mxu0 0
        %2056 = vmatmul.mubr.bf16.gmra.mrb[0].mxu0 %v858
        %v2057 = vpop.f32.mrb[0].mxu0
        %v2058 = vadd.f32 0.0, %v2057
        %v2059 = vpop.f32.mrb[0].mxu0
        %v2060 = vpop.f32.mrb[0].mxu0
        %v2061 = vpop.f32.mrb[0].mxu0
        %2062 = vdwg.mxu0
        %2063 = vmatprep.subr.bf16.mxu0 0
        %2064 = vmatpush1.bf16.msra.mxu0 %v1938
        %2065 = vmatprep.subr.bf16.mxu0 0
        %2066 = vmatpush1.bf16.msra.mxu0 0
        %2067 = vmatprep.subr.bf16.mxu0 0
        %2068 = vmatpush1.bf16.msra.mxu0 0
        %2069 = vmatprep.subr.bf16.mxu0 0
        %2070 = vmatpush1.bf16.msra.mxu0 0
        %2071 = vmatprep.subr.bf16.mxu0 0
        %2072 = vmatpush1.bf16.msra.mxu0 0
        %2073 = vmatprep.subr.bf16.mxu0 0
        %2074 = vmatpush1.bf16.msra.mxu0 0
        %2075 = vmatprep.subr.bf16.mxu0 0
        %2076 = vmatpush1.bf16.msra.mxu0 0
        %2077 = vmatprep.subr.bf16.mxu0 0
        %2078 = vmatpush1.bf16.msra.mxu0 0
        %2079 = vmatprep.subr.bf16.mxu0 0
        %2080 = vmatpush1.bf16.msra.mxu0 0
        %2081 = vmatprep.subr.bf16.mxu0 0
        %2082 = vmatpush1.bf16.msra.mxu0 0
        %2083 = vmatprep.subr.bf16.mxu0 0
        %2084 = vmatpush1.bf16.msra.mxu0 0
        %2085 = vmatprep.subr.bf16.mxu0 0
        %2086 = vmatpush1.bf16.msra.mxu0 0
        %2087 = vmatprep.subr.bf16.mxu0 0
        %2088 = vmatpush1.bf16.msra.mxu0 0
        %2089 = vmatprep.subr.bf16.mxu0 0
        %2090 = vmatpush1.bf16.msra.mxu0 0
        %2091 = vmatprep.subr.bf16.mxu0 0
        %2092 = vmatpush1.bf16.msra.mxu0 0
        %2093 = vmatprep.subr.bf16.mxu0 0
        %2094 = vmatpush1.bf16.msra.mxu0 0
        %2095 = vmatprep.mubr.bf16.mxu0 0
        %2096 = vmatmul.mubr.bf16.gmra.mrb[0].mxu0 %v901
        %v2097 = vpop.f32.mrb[0].mxu0
        %v2098 = vadd.f32 0.0, %v2097
        %v2099 = vpop.f32.mrb[0].mxu0
        %v2100 = vpop.f32.mrb[0].mxu0
        %v2101 = vpop.f32.mrb[0].mxu0
        %2102 = vdwg.mxu0
        %2103 = vmatprep.subr.bf16.mxu0 0
        %2104 = vmatpush1.bf16.msra.mxu0 %v1939
        %2105 = vmatprep.subr.bf16.mxu0 0
        %2106 = vmatpush1.bf16.msra.mxu0 0
        %2107 = vmatprep.subr.bf16.mxu0 0
        %2108 = vmatpush1.bf16.msra.mxu0 0
        %2109 = vmatprep.subr.bf16.mxu0 0
        %2110 = vmatpush1.bf16.msra.mxu0 0
        %2111 = vmatprep.subr.bf16.mxu0 0
        %2112 = vmatpush1.bf16.msra.mxu0 0
        %2113 = vmatprep.subr.bf16.mxu0 0
        %2114 = vmatpush1.bf16.msra.mxu0 0
        %2115 = vmatprep.subr.bf16.mxu0 0
        %2116 = vmatpush1.bf16.msra.mxu0 0
        %2117 = vmatprep.subr.bf16.mxu0 0
        %2118 = vmatpush1.bf16.msra.mxu0 0
        %2119 = vmatprep.subr.bf16.mxu0 0
        %2120 = vmatpush1.bf16.msra.mxu0 0
        %2121 = vmatprep.subr.bf16.mxu0 0
        %2122 = vmatpush1.bf16.msra.mxu0 0
        %2123 = vmatprep.subr.bf16.mxu0 0
        %2124 = vmatpush1.bf16.msra.mxu0 0
        %2125 = vmatprep.subr.bf16.mxu0 0
        %2126 = vmatpush1.bf16.msra.mxu0 0
        %2127 = vmatprep.subr.bf16.mxu0 0
        %2128 = vmatpush1.bf16.msra.mxu0 0
        %2129 = vmatprep.subr.bf16.mxu0 0
        %2130 = vmatpush1.bf16.msra.mxu0 0
        %2131 = vmatprep.subr.bf16.mxu0 0
        %2132 = vmatpush1.bf16.msra.mxu0 0
        %2133 = vmatprep.subr.bf16.mxu0 0
        %2134 = vmatpush1.bf16.msra.mxu0 0
        %2135 = vmatprep.mubr.bf16.mxu0 0
        %2136 = vmatmul.mubr.bf16.gmra.mrb[0].mxu0 %v944
        %v2137 = vpop.f32.mrb[0].mxu0
        %v2138 = vadd.f32 0.0, %v2137
        %v2139 = vpop.f32.mrb[0].mxu0
        %v2140 = vpop.f32.mrb[0].mxu0
        %v2141 = vpop.f32.mrb[0].mxu0
        %2142 = vdwg.mxu0
        %2143 = vmatprep.subr.bf16.mxu0 0
        %2144 = vmatpush1.bf16.msra.mxu0 %v1940
        %2145 = vmatprep.subr.bf16.mxu0 0
        %2146 = vmatpush1.bf16.msra.mxu0 0
        %2147 = vmatprep.subr.bf16.mxu0 0
        %2148 = vmatpush1.bf16.msra.mxu0 0
        %2149 = vmatprep.subr.bf16.mxu0 0
        %2150 = vmatpush1.bf16.msra.mxu0 0
        %2151 = vmatprep.subr.bf16.mxu0 0
        %2152 = vmatpush1.bf16.msra.mxu0 0
        %2153 = vmatprep.subr.bf16.mxu0 0
        %2154 = vmatpush1.bf16.msra.mxu0 0
        %2155 = vmatprep.subr.bf16.mxu0 0
        %2156 = vmatpush1.bf16.msra.mxu0 0
        %2157 = vmatprep.subr.bf16.mxu0 0
        %2158 = vmatpush1.bf16.msra.mxu0 0
        %2159 = vmatprep.subr.bf16.mxu0 0
        %2160 = vmatpush1.bf16.msra.mxu0 0
        %2161 = vmatprep.subr.bf16.mxu0 0
        %2162 = vmatpush1.bf16.msra.mxu0 0
        %2163 = vmatprep.subr.bf16.mxu0 0
        %2164 = vmatpush1.bf16.msra.mxu0 0
        %2165 = vmatprep.subr.bf16.mxu0 0
        %2166 = vmatpush1.bf16.msra.mxu0 0
        %2167 = vmatprep.subr.bf16.mxu0 0
        %2168 = vmatpush1.bf16.msra.mxu0 0
        %2169 = vmatprep.subr.bf16.mxu0 0
        %2170 = vmatpush1.bf16.msra.mxu0 0
        %2171 = vmatprep.subr.bf16.mxu0 0
        %2172 = vmatpush1.bf16.msra.mxu0 0
        %2173 = vmatprep.subr.bf16.mxu0 0
        %2174 = vmatpush1.bf16.msra.mxu0 0
        %2175 = vmatprep.mubr.bf16.mxu0 0
        %2176 = vmatmul.mubr.bf16.gmra.mrb[0].mxu0 %v987
        %v2177 = vpop.f32.mrb[0].mxu0
        %v2178 = vadd.f32 0.0, %v2177
        %v2179 = vpop.f32.mrb[0].mxu0
        %v2180 = vpop.f32.mrb[0].mxu0
        %v2181 = vpop.f32.mrb[0].mxu0
        %2182 = vdwg.mxu0
        %2183 = vmatprep.subr.bf16.mxu0 0
        %2184 = vmatpush1.bf16.msra.mxu0 %v1941
        %2185 = vmatprep.subr.bf16.mxu0 0
        %2186 = vmatpush1.bf16.msra.mxu0 0
        %2187 = vmatprep.subr.bf16.mxu0 0
        %2188 = vmatpush1.bf16.msra.mxu0 0
        %2189 = vmatprep.subr.bf16.mxu0 0
        %2190 = vmatpush1.bf16.msra.mxu0 0
        %2191 = vmatprep.subr.bf16.mxu0 0
        %2192 = vmatpush1.bf16.msra.mxu0 0
        %2193 = vmatprep.subr.bf16.mxu0 0
        %2194 = vmatpush1.bf16.msra.mxu0 0
        %2195 = vmatprep.subr.bf16.mxu0 0
        %2196 = vmatpush1.bf16.msra.mxu0 0
        %2197 = vmatprep.subr.bf16.mxu0 0
        %2198 = vmatpush1.bf16.msra.mxu0 0
        %2199 = vmatprep.subr.bf16.mxu0 0
        %2200 = vmatpush1.bf16.msra.mxu0 0
        %2201 = vmatprep.subr.bf16.mxu0 0
        %2202 = vmatpush1.bf16.msra.mxu0 0
        %2203 = vmatprep.subr.bf16.mxu0 0
        %2204 = vmatpush1.bf16.msra.mxu0 0
        %2205 = vmatprep.subr.bf16.mxu0 0
        %2206 = vmatpush1.bf16.msra.mxu0 0
        %2207 = vmatprep.subr.bf16.mxu0 0
        %2208 = vmatpush1.bf16.msra.mxu0 0
        %2209 = vmatprep.subr.bf16.mxu0 0
        %2210 = vmatpush1.bf16.msra.mxu0 0
        %2211 = vmatprep.subr.bf16.mxu0 0
        %2212 = vmatpush1.bf16.msra.mxu0 0
        %2213 = vmatprep.subr.bf16.mxu0 0
        %2214 = vmatpush1.bf16.msra.mxu0 0
        %2215 = vmatprep.mubr.bf16.mxu0 0
        %2216 = vmatmul.mubr.bf16.gmra.mrb[0].mxu0 %v1030
        %v2217 = vpop.f32.mrb[0].mxu0
        %v2218 = vadd.f32 0.0, %v2217
        %v2219 = vpop.f32.mrb[0].mxu0
        %v2220 = vpop.f32.mrb[0].mxu0
        %v2221 = vpop.f32.mrb[0].mxu0
        %2222 = vdwg.mxu0
        %2223 = vmatprep.subr.bf16.mxu0 0
        %2224 = vmatpush1.bf16.msra.mxu0 %v1942
        %2225 = vmatprep.subr.bf16.mxu0 0
        %2226 = vmatpush1.bf16.msra.mxu0 0
        %2227 = vmatprep.subr.bf16.mxu0 0
        %2228 = vmatpush1.bf16.msra.mxu0 0
        %2229 = vmatprep.subr.bf16.mxu0 0
        %2230 = vmatpush1.bf16.msra.mxu0 0
        %2231 = vmatprep.subr.bf16.mxu0 0
        %2232 = vmatpush1.bf16.msra.mxu0 0
        %2233 = vmatprep.subr.bf16.mxu0 0
        %2234 = vmatpush1.bf16.msra.mxu0 0
        %2235 = vmatprep.subr.bf16.mxu0 0
        %2236 = vmatpush1.bf16.msra.mxu0 0
        %2237 = vmatprep.subr.bf16.mxu0 0
        %2238 = vmatpush1.bf16.msra.mxu0 0
        %2239 = vmatprep.subr.bf16.mxu0 0
        %2240 = vmatpush1.bf16.msra.mxu0 0
        %2241 = vmatprep.subr.bf16.mxu0 0
        %2242 = vmatpush1.bf16.msra.mxu0 0
        %2243 = vmatprep.subr.bf16.mxu0 0
        %2244 = vmatpush1.bf16.msra.mxu0 0
        %2245 = vmatprep.subr.bf16.mxu0 0
        %2246 = vmatpush1.bf16.msra.mxu0 0
        %2247 = vmatprep.subr.bf16.mxu0 0
        %2248 = vmatpush1.bf16.msra.mxu0 0
        %2249 = vmatprep.subr.bf16.mxu0 0
        %2250 = vmatpush1.bf16.msra.mxu0 0
        %2251 = vmatprep.subr.bf16.mxu0 0
        %2252 = vmatpush1.bf16.msra.mxu0 0
        %2253 = vmatprep.subr.bf16.mxu0 0
        %2254 = vmatpush1.bf16.msra.mxu0 0
        %2255 = vmatprep.mubr.bf16.mxu0 0
        %2256 = vmatmul.mubr.bf16.gmra.mrb[0].mxu0 %v1073
        %v2257 = vpop.f32.mrb[0].mxu0
        %v2258 = vadd.f32 0.0, %v2257
        %v2259 = vpop.f32.mrb[0].mxu0
        %v2260 = vpop.f32.mrb[0].mxu0
        %v2261 = vpop.f32.mrb[0].mxu0
        %2262 = vdwg.mxu0
        %v2263 = vpack.c.bf16 %v2018, %v1978
        %v2264 = vpack.c.bf16 %v2098, %v2058
        %v2265 = vpack.c.bf16 %v2178, %v2138
        %v2266 = vpack.c.bf16 %v2258, %v2218
        %s2267 = scalar_lea.vmem %s5, 16
        %v2268 = vld [vmem:[%s2267] sm:$0xf]
        %v2269 = vld [vmem:[%s2267 + $0x4] sm:$0xf]
        %v2270 = vld [vmem:[%s2267 + $0x8] sm:$0xf]
        %v2271 = vld [vmem:[%s2267 + $0xc] sm:$0xf]
        %s2272 = scalar_lea.vmem %s6, 1
        %v2273 = vld [vmem:[%s2272] sm:$0x1]
        %v2275 = vlaneseq
        %v2276 = vshrl.u32 %v2275, 7
        %v2277 = vsub.s32 0, %v2276
        %v2278 = vrot.slane %v2273, %v2277
        %v2284 = vunpack.c.l.b16 %v2268
        %v2285 = vunpack.c.l.b16 %v2269
        %v2286 = vunpack.c.l.b16 %v2270
        %v2287 = vunpack.c.l.b16 %v2271
        %v2288 = vpack.c.b16 %v2285, %v2284
        %v2289 = vpack.c.b16 %v2287, %v2286
        %v2293 = vsel %vm1142, %v2263, 0
        %v2296 = vsel %vm1142, %v2264, 0
        %v2299 = vsel %vm1142, %v2265, 0
        %v2302 = vsel %vm1142, %v2266, 0
        %2304 = vmatprep.subr.bf16.mxu0 0
        %2305 = vmatpush1.bf16.msra.mxu0 %v2288
        %2306 = vmatprep.subr.bf16.mxu0 0
        %2307 = vmatpush1.bf16.msra.mxu0 %v2289
        %2308 = vmatprep.subr.bf16.mxu0 0
        %2309 = vmatpush1.bf16.msra.mxu0 0
        %2310 = vmatprep.subr.bf16.mxu0 0
        %2311 = vmatpush1.bf16.msra.mxu0 0
        %2312 = vmatprep.subr.bf16.mxu0 0
        %2313 = vmatpush1.bf16.msra.mxu0 0
        %2314 = vmatprep.subr.bf16.mxu0 0
        %2315 = vmatpush1.bf16.msra.mxu0 0
        %2316 = vmatprep.subr.bf16.mxu0 0
        %2317 = vmatpush1.bf16.msra.mxu0 0
        %2318 = vmatprep.subr.bf16.mxu0 0
        %2319 = vmatpush1.bf16.msra.mxu0 0
        %2320 = vmatprep.subr.bf16.mxu0 0
        %2321 = vmatpush1.bf16.msra.mxu0 0
        %2322 = vmatprep.subr.bf16.mxu0 0
        %2323 = vmatpush1.bf16.msra.mxu0 0
        %2324 = vmatprep.subr.bf16.mxu0 0
        %2325 = vmatpush1.bf16.msra.mxu0 0
        %2326 = vmatprep.subr.bf16.mxu0 0
        %2327 = vmatpush1.bf16.msra.mxu0 0
        %2328 = vmatprep.subr.bf16.mxu0 0
        %2329 = vmatpush1.bf16.msra.mxu0 0
        %2330 = vmatprep.subr.bf16.mxu0 0
        %2331 = vmatpush1.bf16.msra.mxu0 0
        %2332 = vmatprep.subr.bf16.mxu0 0
        %2333 = vmatpush1.bf16.msra.mxu0 0
        %2334 = vmatprep.subr.bf16.mxu0 0
        %2335 = vmatpush1.bf16.msra.mxu0 0
        %2336 = vmatprep.mubr.bf16.mxu0 0
        %2337 = vmatmul.mubr.bf16.gmra.mrb[0].mxu0 %v2293
        %v2338 = vpop.f32.mrb[0].mxu0
        %v2339 = vadd.f32 %v2278, %v2338
        %v2340 = vpop.f32.mrb[0].mxu0
        %v2341 = vpop.f32.mrb[0].mxu0
        %v2342 = vadd.f32 %v2278, %v2341
        %v2343 = vpop.f32.mrb[0].mxu0
        %2344 = vmatprep.mubr.bf16.mxu0 0
        %2345 = vmatmul.mubr.bf16.gmra.mrb[0].mxu0 %v2296
        %v2346 = vpop.f32.mrb[0].mxu0
        %v2347 = vadd.f32 %v2278, %v2346
        %v2348 = vpop.f32.mrb[0].mxu0
        %v2349 = vpop.f32.mrb[0].mxu0
        %v2350 = vadd.f32 %v2278, %v2349
        %v2351 = vpop.f32.mrb[0].mxu0
        %2352 = vmatprep.mubr.bf16.mxu0 0
        %2353 = vmatmul.mubr.bf16.gmra.mrb[0].mxu0 %v2299
        %v2354 = vpop.f32.mrb[0].mxu0
        %v2355 = vadd.f32 %v2278, %v2354
        %v2356 = vpop.f32.mrb[0].mxu0
        %v2357 = vpop.f32.mrb[0].mxu0
        %v2358 = vadd.f32 %v2278, %v2357
        %v2359 = vpop.f32.mrb[0].mxu0
        %2360 = vmatprep.mubr.bf16.mxu0 0
        %2361 = vmatmul.mubr.bf16.gmra.mrb[0].mxu0 %v2302
        %v2362 = vpop.f32.mrb[0].mxu0
        %v2363 = vadd.f32 %v2278, %v2362
        %v2364 = vpop.f32.mrb[0].mxu0
        %v2365 = vpop.f32.mrb[0].mxu0
        %v2366 = vadd.f32 %v2278, %v2365
        %v2367 = vpop.f32.mrb[0].mxu0
        %2368 = vdwg.mxu0
        %v2369 = vmax.f32 %v2339, 0.0
        %v2370 = vmax.f32 %v2342, 0.0
        %v2371 = vmax.f32 %v2347, 0.0
        %v2372 = vmax.f32 %v2350, 0.0
        %v2373 = vmax.f32 %v2355, 0.0
        %v2374 = vmax.f32 %v2358, 0.0
        %v2375 = vmax.f32 %v2363, 0.0
        %v2376 = vmax.f32 %v2366, 0.0
        %v2377 = vpack.c.bf16 %v2369, %v2369
        %v2378 = vpack.c.bf16 %v2370, %v2370
        %v2379 = vpack.c.bf16 %v2371, %v2371
        %v2380 = vpack.c.bf16 %v2372, %v2372
        %v2381 = vpack.c.bf16 %v2373, %v2373
        %v2382 = vpack.c.bf16 %v2374, %v2374
        %v2383 = vpack.c.bf16 %v2375, %v2375
        %v2384 = vpack.c.bf16 %v2376, %v2376
        %v2386 = vsel %vm1240, %v2377, 0
        %2388 = vmatprep.subr.bf16.mxu0 0
        %2389 = vmatpush1.bf16.msra.mxu0 %v2386
        %2390 = vmatprep.subr.bf16.mxu0 0
        %2391 = vmatpush1.bf16.msra.mxu0 0
        %2392 = vmatprep.subr.bf16.mxu0 0
        %2393 = vmatpush1.bf16.msra.mxu0 0
        %2394 = vmatprep.subr.bf16.mxu0 0
        %2395 = vmatpush1.bf16.msra.mxu0 0
        %2396 = vmatprep.subr.bf16.mxu0 0
        %2397 = vmatpush1.bf16.msra.mxu0 0
        %2398 = vmatprep.subr.bf16.mxu0 0
        %2399 = vmatpush1.bf16.msra.mxu0 0
        %2400 = vmatprep.subr.bf16.mxu0 0
        %2401 = vmatpush1.bf16.msra.mxu0 0
        %2402 = vmatprep.subr.bf16.mxu0 0
        %2403 = vmatpush1.bf16.msra.mxu0 0
        %2404 = vmatprep.subr.bf16.mxu0 0
        %2405 = vmatpush1.bf16.msra.mxu0 0
        %2406 = vmatprep.subr.bf16.mxu0 0
        %2407 = vmatpush1.bf16.msra.mxu0 0
        %2408 = vmatprep.subr.bf16.mxu0 0
        %2409 = vmatpush1.bf16.msra.mxu0 0
        %2410 = vmatprep.subr.bf16.mxu0 0
        %2411 = vmatpush1.bf16.msra.mxu0 0
        %2412 = vmatprep.subr.bf16.mxu0 0
        %2413 = vmatpush1.bf16.msra.mxu0 0
        %2414 = vmatprep.subr.bf16.mxu0 0
        %2415 = vmatpush1.bf16.msra.mxu0 0
        %2416 = vmatprep.subr.bf16.mxu0 0
        %2417 = vmatpush1.bf16.msra.mxu0 0
        %2418 = vmatprep.subr.bf16.mxu0 0
        %2419 = vmatpush1.bf16.msra.mxu0 0
        %2420 = vmatprep.mubr.bf16.mxu0 0
        %2421 = vmatmul.mubr.bf16.gmra.mrb[0].mxu0 %v1238
        %v2422 = vpop.f32.mrb[0].mxu0
        %v2423 = vadd.f32 0.0, %v2422
        %v2424 = vpop.f32.mrb[0].mxu0
        %v2425 = vpop.f32.mrb[0].mxu0
        %v2426 = vadd.f32 0.0, %v2425
        %v2427 = vpop.f32.mrb[0].mxu0
        %2428 = vdwg.mxu0
        %v2430 = vsel %vm1240, %v2378, 0
        %2432 = vmatprep.subr.bf16.mxu0 0
        %2433 = vmatpush1.bf16.msra.mxu0 %v2430
        %2434 = vmatprep.subr.bf16.mxu0 0
        %2435 = vmatpush1.bf16.msra.mxu0 0
        %2436 = vmatprep.subr.bf16.mxu0 0
        %2437 = vmatpush1.bf16.msra.mxu0 0
        %2438 = vmatprep.subr.bf16.mxu0 0
        %2439 = vmatpush1.bf16.msra.mxu0 0
        %2440 = vmatprep.subr.bf16.mxu0 0
        %2441 = vmatpush1.bf16.msra.mxu0 0
        %2442 = vmatprep.subr.bf16.mxu0 0
        %2443 = vmatpush1.bf16.msra.mxu0 0
        %2444 = vmatprep.subr.bf16.mxu0 0
        %2445 = vmatpush1.bf16.msra.mxu0 0
        %2446 = vmatprep.subr.bf16.mxu0 0
        %2447 = vmatpush1.bf16.msra.mxu0 0
        %2448 = vmatprep.subr.bf16.mxu0 0
        %2449 = vmatpush1.bf16.msra.mxu0 0
        %2450 = vmatprep.subr.bf16.mxu0 0
        %2451 = vmatpush1.bf16.msra.mxu0 0
        %2452 = vmatprep.subr.bf16.mxu0 0
        %2453 = vmatpush1.bf16.msra.mxu0 0
        %2454 = vmatprep.subr.bf16.mxu0 0
        %2455 = vmatpush1.bf16.msra.mxu0 0
        %2456 = vmatprep.subr.bf16.mxu0 0
        %2457 = vmatpush1.bf16.msra.mxu0 0
        %2458 = vmatprep.subr.bf16.mxu0 0
        %2459 = vmatpush1.bf16.msra.mxu0 0
        %2460 = vmatprep.subr.bf16.mxu0 0
        %2461 = vmatpush1.bf16.msra.mxu0 0
        %2462 = vmatprep.subr.bf16.mxu0 0
        %2463 = vmatpush1.bf16.msra.mxu0 0
        %2464 = vmatprep.mubr.bf16.mxu0 0
        %2465 = vmatmul.mubr.bf16.gmra.mrb[0].mxu0 %v1286
        %v2466 = vpop.f32.mrb[0].mxu0
        %v2467 = vadd.f32 0.0, %v2466
        %v2468 = vpop.f32.mrb[0].mxu0
        %v2469 = vpop.f32.mrb[0].mxu0
        %v2470 = vadd.f32 0.0, %v2469
        %v2471 = vpop.f32.mrb[0].mxu0
        %2472 = vdwg.mxu0
        %v2474 = vsel %vm1240, %v2379, 0
        %2476 = vmatprep.subr.bf16.mxu0 0
        %2477 = vmatpush1.bf16.msra.mxu0 %v2474
        %2478 = vmatprep.subr.bf16.mxu0 0
        %2479 = vmatpush1.bf16.msra.mxu0 0
        %2480 = vmatprep.subr.bf16.mxu0 0
        %2481 = vmatpush1.bf16.msra.mxu0 0
        %2482 = vmatprep.subr.bf16.mxu0 0
        %2483 = vmatpush1.bf16.msra.mxu0 0
        %2484 = vmatprep.subr.bf16.mxu0 0
        %2485 = vmatpush1.bf16.msra.mxu0 0
        %2486 = vmatprep.subr.bf16.mxu0 0
        %2487 = vmatpush1.bf16.msra.mxu0 0
        %2488 = vmatprep.subr.bf16.mxu0 0
        %2489 = vmatpush1.bf16.msra.mxu0 0
        %2490 = vmatprep.subr.bf16.mxu0 0
        %2491 = vmatpush1.bf16.msra.mxu0 0
        %2492 = vmatprep.subr.bf16.mxu0 0
        %2493 = vmatpush1.bf16.msra.mxu0 0
        %2494 = vmatprep.subr.bf16.mxu0 0
        %2495 = vmatpush1.bf16.msra.mxu0 0
        %2496 = vmatprep.subr.bf16.mxu0 0
        %2497 = vmatpush1.bf16.msra.mxu0 0
        %2498 = vmatprep.subr.bf16.mxu0 0
        %2499 = vmatpush1.bf16.msra.mxu0 0
        %2500 = vmatprep.subr.bf16.mxu0 0
        %2501 = vmatpush1.bf16.msra.mxu0 0
        %2502 = vmatprep.subr.bf16.mxu0 0
        %2503 = vmatpush1.bf16.msra.mxu0 0
        %2504 = vmatprep.subr.bf16.mxu0 0
        %2505 = vmatpush1.bf16.msra.mxu0 0
        %2506 = vmatprep.subr.bf16.mxu0 0
        %2507 = vmatpush1.bf16.msra.mxu0 0
        %2508 = vmatprep.mubr.bf16.mxu0 0
        %2509 = vmatmul.mubr.bf16.gmra.mrb[0].mxu0 %v1333
        %v2510 = vpop.f32.mrb[0].mxu0
        %v2511 = vadd.f32 0.0, %v2510
        %v2512 = vpop.f32.mrb[0].mxu0
        %v2513 = vpop.f32.mrb[0].mxu0
        %v2514 = vadd.f32 0.0, %v2513
        %v2515 = vpop.f32.mrb[0].mxu0
        %2516 = vdwg.mxu0
        %v2518 = vsel %vm1240, %v2380, 0
        %2520 = vmatprep.subr.bf16.mxu0 0
        %2521 = vmatpush1.bf16.msra.mxu0 %v2518
        %2522 = vmatprep.subr.bf16.mxu0 0
        %2523 = vmatpush1.bf16.msra.mxu0 0
        %2524 = vmatprep.subr.bf16.mxu0 0
        %2525 = vmatpush1.bf16.msra.mxu0 0
        %2526 = vmatprep.subr.bf16.mxu0 0
        %2527 = vmatpush1.bf16.msra.mxu0 0
        %2528 = vmatprep.subr.bf16.mxu0 0
        %2529 = vmatpush1.bf16.msra.mxu0 0
        %2530 = vmatprep.subr.bf16.mxu0 0
        %2531 = vmatpush1.bf16.msra.mxu0 0
        %2532 = vmatprep.subr.bf16.mxu0 0
        %2533 = vmatpush1.bf16.msra.mxu0 0
        %2534 = vmatprep.subr.bf16.mxu0 0
        %2535 = vmatpush1.bf16.msra.mxu0 0
        %2536 = vmatprep.subr.bf16.mxu0 0
        %2537 = vmatpush1.bf16.msra.mxu0 0
        %2538 = vmatprep.subr.bf16.mxu0 0
        %2539 = vmatpush1.bf16.msra.mxu0 0
        %2540 = vmatprep.subr.bf16.mxu0 0
        %2541 = vmatpush1.bf16.msra.mxu0 0
        %2542 = vmatprep.subr.bf16.mxu0 0
        %2543 = vmatpush1.bf16.msra.mxu0 0
        %2544 = vmatprep.subr.bf16.mxu0 0
        %2545 = vmatpush1.bf16.msra.mxu0 0
        %2546 = vmatprep.subr.bf16.mxu0 0
        %2547 = vmatpush1.bf16.msra.mxu0 0
        %2548 = vmatprep.subr.bf16.mxu0 0
        %2549 = vmatpush1.bf16.msra.mxu0 0
        %2550 = vmatprep.subr.bf16.mxu0 0
        %2551 = vmatpush1.bf16.msra.mxu0 0
        %2552 = vmatprep.mubr.bf16.mxu0 0
        %2553 = vmatmul.mubr.bf16.gmra.mrb[0].mxu0 %v1380
        %v2554 = vpop.f32.mrb[0].mxu0
        %v2555 = vadd.f32 0.0, %v2554
        %v2556 = vpop.f32.mrb[0].mxu0
        %v2557 = vpop.f32.mrb[0].mxu0
        %v2558 = vadd.f32 0.0, %v2557
        %v2559 = vpop.f32.mrb[0].mxu0
        %2560 = vdwg.mxu0
        %v2562 = vsel %vm1240, %v2381, 0
        %2564 = vmatprep.subr.bf16.mxu0 0
        %2565 = vmatpush1.bf16.msra.mxu0 %v2562
        %2566 = vmatprep.subr.bf16.mxu0 0
        %2567 = vmatpush1.bf16.msra.mxu0 0
        %2568 = vmatprep.subr.bf16.mxu0 0
        %2569 = vmatpush1.bf16.msra.mxu0 0
        %2570 = vmatprep.subr.bf16.mxu0 0
        %2571 = vmatpush1.bf16.msra.mxu0 0
        %2572 = vmatprep.subr.bf16.mxu0 0
        %2573 = vmatpush1.bf16.msra.mxu0 0
        %2574 = vmatprep.subr.bf16.mxu0 0
        %2575 = vmatpush1.bf16.msra.mxu0 0
        %2576 = vmatprep.subr.bf16.mxu0 0
        %2577 = vmatpush1.bf16.msra.mxu0 0
        %2578 = vmatprep.subr.bf16.mxu0 0
        %2579 = vmatpush1.bf16.msra.mxu0 0
        %2580 = vmatprep.subr.bf16.mxu0 0
        %2581 = vmatpush1.bf16.msra.mxu0 0
        %2582 = vmatprep.subr.bf16.mxu0 0
        %2583 = vmatpush1.bf16.msra.mxu0 0
        %2584 = vmatprep.subr.bf16.mxu0 0
        %2585 = vmatpush1.bf16.msra.mxu0 0
        %2586 = vmatprep.subr.bf16.mxu0 0
        %2587 = vmatpush1.bf16.msra.mxu0 0
        %2588 = vmatprep.subr.bf16.mxu0 0
        %2589 = vmatpush1.bf16.msra.mxu0 0
        %2590 = vmatprep.subr.bf16.mxu0 0
        %2591 = vmatpush1.bf16.msra.mxu0 0
        %2592 = vmatprep.subr.bf16.mxu0 0
        %2593 = vmatpush1.bf16.msra.mxu0 0
        %2594 = vmatprep.subr.bf16.mxu0 0
        %2595 = vmatpush1.bf16.msra.mxu0 0
        %2596 = vmatprep.mubr.bf16.mxu0 0
        %2597 = vmatmul.mubr.bf16.gmra.mrb[0].mxu0 %v1427
        %v2598 = vpop.f32.mrb[0].mxu0
        %v2599 = vadd.f32 0.0, %v2598
        %v2600 = vpop.f32.mrb[0].mxu0
        %v2601 = vpop.f32.mrb[0].mxu0
        %v2602 = vadd.f32 0.0, %v2601
        %v2603 = vpop.f32.mrb[0].mxu0
        %2604 = vdwg.mxu0
        %v2606 = vsel %vm1240, %v2382, 0
        %2608 = vmatprep.subr.bf16.mxu0 0
        %2609 = vmatpush1.bf16.msra.mxu0 %v2606
        %2610 = vmatprep.subr.bf16.mxu0 0
        %2611 = vmatpush1.bf16.msra.mxu0 0
        %2612 = vmatprep.subr.bf16.mxu0 0
        %2613 = vmatpush1.bf16.msra.mxu0 0
        %2614 = vmatprep.subr.bf16.mxu0 0
        %2615 = vmatpush1.bf16.msra.mxu0 0
        %2616 = vmatprep.subr.bf16.mxu0 0
        %2617 = vmatpush1.bf16.msra.mxu0 0
        %2618 = vmatprep.subr.bf16.mxu0 0
        %2619 = vmatpush1.bf16.msra.mxu0 0
        %2620 = vmatprep.subr.bf16.mxu0 0
        %2621 = vmatpush1.bf16.msra.mxu0 0
        %2622 = vmatprep.subr.bf16.mxu0 0
        %2623 = vmatpush1.bf16.msra.mxu0 0
        %2624 = vmatprep.subr.bf16.mxu0 0
        %2625 = vmatpush1.bf16.msra.mxu0 0
        %2626 = vmatprep.subr.bf16.mxu0 0
        %2627 = vmatpush1.bf16.msra.mxu0 0
        %2628 = vmatprep.subr.bf16.mxu0 0
        %2629 = vmatpush1.bf16.msra.mxu0 0
        %2630 = vmatprep.subr.bf16.mxu0 0
        %2631 = vmatpush1.bf16.msra.mxu0 0
        %2632 = vmatprep.subr.bf16.mxu0 0
        %2633 = vmatpush1.bf16.msra.mxu0 0
        %2634 = vmatprep.subr.bf16.mxu0 0
        %2635 = vmatpush1.bf16.msra.mxu0 0
        %2636 = vmatprep.subr.bf16.mxu0 0
        %2637 = vmatpush1.bf16.msra.mxu0 0
        %2638 = vmatprep.subr.bf16.mxu0 0
        %2639 = vmatpush1.bf16.msra.mxu0 0
        %2640 = vmatprep.mubr.bf16.mxu0 0
        %2641 = vmatmul.mubr.bf16.gmra.mrb[0].mxu0 %v1474
        %v2642 = vpop.f32.mrb[0].mxu0
        %v2643 = vadd.f32 0.0, %v2642
        %v2644 = vpop.f32.mrb[0].mxu0
        %v2645 = vpop.f32.mrb[0].mxu0
        %v2646 = vadd.f32 0.0, %v2645
        %v2647 = vpop.f32.mrb[0].mxu0
        %2648 = vdwg.mxu0
        %v2650 = vsel %vm1240, %v2383, 0
        %2652 = vmatprep.subr.bf16.mxu0 0
        %2653 = vmatpush1.bf16.msra.mxu0 %v2650
        %2654 = vmatprep.subr.bf16.mxu0 0
        %2655 = vmatpush1.bf16.msra.mxu0 0
        %2656 = vmatprep.subr.bf16.mxu0 0
        %2657 = vmatpush1.bf16.msra.mxu0 0
        %2658 = vmatprep.subr.bf16.mxu0 0
        %2659 = vmatpush1.bf16.msra.mxu0 0
        %2660 = vmatprep.subr.bf16.mxu0 0
        %2661 = vmatpush1.bf16.msra.mxu0 0
        %2662 = vmatprep.subr.bf16.mxu0 0
        %2663 = vmatpush1.bf16.msra.mxu0 0
        %2664 = vmatprep.subr.bf16.mxu0 0
        %2665 = vmatpush1.bf16.msra.mxu0 0
        %2666 = vmatprep.subr.bf16.mxu0 0
        %2667 = vmatpush1.bf16.msra.mxu0 0
        %2668 = vmatprep.subr.bf16.mxu0 0
        %2669 = vmatpush1.bf16.msra.mxu0 0
        %2670 = vmatprep.subr.bf16.mxu0 0
        %2671 = vmatpush1.bf16.msra.mxu0 0
        %2672 = vmatprep.subr.bf16.mxu0 0
        %2673 = vmatpush1.bf16.msra.mxu0 0
        %2674 = vmatprep.subr.bf16.mxu0 0
        %2675 = vmatpush1.bf16.msra.mxu0 0
        %2676 = vmatprep.subr.bf16.mxu0 0
        %2677 = vmatpush1.bf16.msra.mxu0 0
        %2678 = vmatprep.subr.bf16.mxu0 0
        %2679 = vmatpush1.bf16.msra.mxu0 0
        %2680 = vmatprep.subr.bf16.mxu0 0
        %2681 = vmatpush1.bf16.msra.mxu0 0
        %2682 = vmatprep.subr.bf16.mxu0 0
        %2683 = vmatpush1.bf16.msra.mxu0 0
        %2684 = vmatprep.mubr.bf16.mxu0 0
        %2685 = vmatmul.mubr.bf16.gmra.mrb[0].mxu0 %v1521
        %v2686 = vpop.f32.mrb[0].mxu0
        %v2687 = vadd.f32 0.0, %v2686
        %v2688 = vpop.f32.mrb[0].mxu0
        %v2689 = vpop.f32.mrb[0].mxu0
        %v2690 = vadd.f32 0.0, %v2689
        %v2691 = vpop.f32.mrb[0].mxu0
        %2692 = vdwg.mxu0
        %v2694 = vsel %vm1240, %v2384, 0
        %2696 = vmatprep.subr.bf16.mxu0 0
        %2697 = vmatpush1.bf16.msra.mxu0 %v2694
        %2698 = vmatprep.subr.bf16.mxu0 0
        %2699 = vmatpush1.bf16.msra.mxu0 0
        %2700 = vmatprep.subr.bf16.mxu0 0
        %2701 = vmatpush1.bf16.msra.mxu0 0
        %2702 = vmatprep.subr.bf16.mxu0 0
        %2703 = vmatpush1.bf16.msra.mxu0 0
        %2704 = vmatprep.subr.bf16.mxu0 0
        %2705 = vmatpush1.bf16.msra.mxu0 0
        %2706 = vmatprep.subr.bf16.mxu0 0
        %2707 = vmatpush1.bf16.msra.mxu0 0
        %2708 = vmatprep.subr.bf16.mxu0 0
        %2709 = vmatpush1.bf16.msra.mxu0 0
        %2710 = vmatprep.subr.bf16.mxu0 0
        %2711 = vmatpush1.bf16.msra.mxu0 0
        %2712 = vmatprep.subr.bf16.mxu0 0
        %2713 = vmatpush1.bf16.msra.mxu0 0
        %2714 = vmatprep.subr.bf16.mxu0 0
        %2715 = vmatpush1.bf16.msra.mxu0 0
        %2716 = vmatprep.subr.bf16.mxu0 0
        %2717 = vmatpush1.bf16.msra.mxu0 0
        %2718 = vmatprep.subr.bf16.mxu0 0
        %2719 = vmatpush1.bf16.msra.mxu0 0
        %2720 = vmatprep.subr.bf16.mxu0 0
        %2721 = vmatpush1.bf16.msra.mxu0 0
        %2722 = vmatprep.subr.bf16.mxu0 0
        %2723 = vmatpush1.bf16.msra.mxu0 0
        %2724 = vmatprep.subr.bf16.mxu0 0
        %2725 = vmatpush1.bf16.msra.mxu0 0
        %2726 = vmatprep.subr.bf16.mxu0 0
        %2727 = vmatpush1.bf16.msra.mxu0 0
        %2728 = vmatprep.mubr.bf16.mxu0 0
        %2729 = vmatmul.mubr.bf16.gmra.mrb[0].mxu0 %v1568
        %v2730 = vpop.f32.mrb[0].mxu0
        %v2731 = vadd.f32 0.0, %v2730
        %v2732 = vpop.f32.mrb[0].mxu0
        %v2733 = vpop.f32.mrb[0].mxu0
        %v2734 = vadd.f32 0.0, %v2733
        %v2735 = vpop.f32.mrb[0].mxu0
        %2736 = vdwg.mxu0
        %s2737 = scalar_lea.vmem %s7, 16
        %v2738 = vld [vmem:[%s2737] sm:$0xf]
        %v2739 = vld [vmem:[%s2737 + $0x4] sm:$0xf]
        %v2740 = vld [vmem:[%s2737 + $0x8] sm:$0xf]
        %v2741 = vld [vmem:[%s2737 + $0xc] sm:$0xf]
        %v2742 = vpack.c.bf16 %v2426, %v2423
        %v2743 = vpack.c.bf16 %v2470, %v2467
        %v2744 = vpack.c.bf16 %v2514, %v2511
        %v2745 = vpack.c.bf16 %v2558, %v2555
        %v2746 = vpack.c.bf16 %v2602, %v2599
        %v2747 = vpack.c.bf16 %v2646, %v2643
        %v2748 = vpack.c.bf16 %v2690, %v2687
        %v2749 = vpack.c.bf16 %v2734, %v2731
        %s2750 = scalar_lea.vmem %s8, 16
        %v2751 = vld [vmem:[%s2750] sm:$0xf]
        %v2752 = vld [vmem:[%s2750 + $0x4] sm:$0xf]
        %v2753 = vld [vmem:[%s2750 + $0x8] sm:$0xf]
        %v2754 = vld [vmem:[%s2750 + $0xc] sm:$0xf]
        %v2759 = vunpack.c.l.b16 %v2751
        %v2760 = vunpack.c.l.b16 %v2752
        %v2761 = vunpack.c.l.b16 %v2753
        %v2762 = vunpack.c.l.b16 %v2754
        %v2763 = vpack.c.b16 %v2760, %v2759
        %v2764 = vpack.c.b16 %v2762, %v2761
        %v2768 = vsel %vm1142, %v2742, 0
        %v2771 = vsel %vm1142, %v2743, 0
        %v2774 = vsel %vm1142, %v2744, 0
        %v2777 = vsel %vm1142, %v2745, 0
        %v2780 = vsel %vm1142, %v2746, 0
        %v2783 = vsel %vm1142, %v2747, 0
        %v2786 = vsel %vm1142, %v2748, 0
        %v2789 = vsel %vm1142, %v2749, 0
        %2791 = vmatprep.subr.bf16.mxu0 0
        %2792 = vmatpush1.bf16.msra.mxu0 %v2763
        %2793 = vmatprep.subr.bf16.mxu0 0
        %2794 = vmatpush1.bf16.msra.mxu0 %v2764
        %2795 = vmatprep.subr.bf16.mxu0 0
        %2796 = vmatpush1.bf16.msra.mxu0 0
        %2797 = vmatprep.subr.bf16.mxu0 0
        %2798 = vmatpush1.bf16.msra.mxu0 0
        %2799 = vmatprep.subr.bf16.mxu0 0
        %2800 = vmatpush1.bf16.msra.mxu0 0
        %2801 = vmatprep.subr.bf16.mxu0 0
        %2802 = vmatpush1.bf16.msra.mxu0 0
        %2803 = vmatprep.subr.bf16.mxu0 0
        %2804 = vmatpush1.bf16.msra.mxu0 0
        %2805 = vmatprep.subr.bf16.mxu0 0
        %2806 = vmatpush1.bf16.msra.mxu0 0
        %2807 = vmatprep.subr.bf16.mxu0 0
        %2808 = vmatpush1.bf16.msra.mxu0 0
        %2809 = vmatprep.subr.bf16.mxu0 0
        %2810 = vmatpush1.bf16.msra.mxu0 0
        %2811 = vmatprep.subr.bf16.mxu0 0
        %2812 = vmatpush1.bf16.msra.mxu0 0
        %2813 = vmatprep.subr.bf16.mxu0 0
        %2814 = vmatpush1.bf16.msra.mxu0 0
        %2815 = vmatprep.subr.bf16.mxu0 0
        %2816 = vmatpush1.bf16.msra.mxu0 0
        %2817 = vmatprep.subr.bf16.mxu0 0
        %2818 = vmatpush1.bf16.msra.mxu0 0
        %2819 = vmatprep.subr.bf16.mxu0 0
        %2820 = vmatpush1.bf16.msra.mxu0 0
        %2821 = vmatprep.subr.bf16.mxu0 0
        %2822 = vmatpush1.bf16.msra.mxu0 0
        %2823 = vmatprep.mubr.bf16.mxu0 0
        %2824 = vmatmul.mubr.bf16.gmra.mrb[0].mxu0 %v2768
        %v2825 = vpop.f32.mrb[0].mxu0
        %v2826 = vadd.f32 0.0, %v2825
        %v2827 = vpop.f32.mrb[0].mxu0
        %v2828 = vpop.f32.mrb[0].mxu0
        %v2829 = vadd.f32 0.0, %v2828
        %v2830 = vpop.f32.mrb[0].mxu0
        %2831 = vmatprep.mubr.bf16.mxu0 0
        %2832 = vmatmul.mubr.bf16.gmra.mrb[0].mxu0 %v2771
        %v2833 = vpop.f32.mrb[0].mxu0
        %v2834 = vadd.f32 0.0, %v2833
        %v2835 = vpop.f32.mrb[0].mxu0
        %v2836 = vpop.f32.mrb[0].mxu0
        %v2837 = vadd.f32 0.0, %v2836
        %v2838 = vpop.f32.mrb[0].mxu0
        %2839 = vmatprep.mubr.bf16.mxu0 0
        %2840 = vmatmul.mubr.bf16.gmra.mrb[0].mxu0 %v2774
        %v2841 = vpop.f32.mrb[0].mxu0
        %v2842 = vadd.f32 0.0, %v2841
        %v2843 = vpop.f32.mrb[0].mxu0
        %v2844 = vpop.f32.mrb[0].mxu0
        %v2845 = vadd.f32 0.0, %v2844
        %v2846 = vpop.f32.mrb[0].mxu0
        %2847 = vmatprep.mubr.bf16.mxu0 0
        %2848 = vmatmul.mubr.bf16.gmra.mrb[0].mxu0 %v2777
        %v2849 = vpop.f32.mrb[0].mxu0
        %v2850 = vadd.f32 0.0, %v2849
        %v2851 = vpop.f32.mrb[0].mxu0
        %v2852 = vpop.f32.mrb[0].mxu0
        %v2853 = vadd.f32 0.0, %v2852
        %v2854 = vpop.f32.mrb[0].mxu0
        %2855 = vmatprep.mubr.bf16.mxu0 0
        %2856 = vmatmul.mubr.bf16.gmra.mrb[0].mxu0 %v2780
        %v2857 = vpop.f32.mrb[0].mxu0
        %v2858 = vadd.f32 0.0, %v2857
        %v2859 = vpop.f32.mrb[0].mxu0
        %v2860 = vpop.f32.mrb[0].mxu0
        %v2861 = vadd.f32 0.0, %v2860
        %v2862 = vpop.f32.mrb[0].mxu0
        %2863 = vmatprep.mubr.bf16.mxu0 0
        %2864 = vmatmul.mubr.bf16.gmra.mrb[0].mxu0 %v2783
        %v2865 = vpop.f32.mrb[0].mxu0
        %v2866 = vadd.f32 0.0, %v2865
        %v2867 = vpop.f32.mrb[0].mxu0
        %v2868 = vpop.f32.mrb[0].mxu0
        %v2869 = vadd.f32 0.0, %v2868
        %v2870 = vpop.f32.mrb[0].mxu0
        %2871 = vmatprep.mubr.bf16.mxu0 0
        %2872 = vmatmul.mubr.bf16.gmra.mrb[0].mxu0 %v2786
        %v2873 = vpop.f32.mrb[0].mxu0
        %v2874 = vadd.f32 0.0, %v2873
        %v2875 = vpop.f32.mrb[0].mxu0
        %v2876 = vpop.f32.mrb[0].mxu0
        %v2877 = vadd.f32 0.0, %v2876
        %v2878 = vpop.f32.mrb[0].mxu0
        %2879 = vmatprep.mubr.bf16.mxu0 0
        %2880 = vmatmul.mubr.bf16.gmra.mrb[0].mxu0 %v2789
        %v2881 = vpop.f32.mrb[0].mxu0
        %v2882 = vadd.f32 0.0, %v2881
        %v2883 = vpop.f32.mrb[0].mxu0
        %v2884 = vpop.f32.mrb[0].mxu0
        %v2885 = vadd.f32 0.0, %v2884
        %v2886 = vpop.f32.mrb[0].mxu0
        %2887 = vdwg.mxu0
        %v2892 = vunpack.c.l.b16 %v2738
        %v2893 = vunpack.c.l.b16 %v2739
        %v2894 = vunpack.c.l.b16 %v2740
        %v2895 = vunpack.c.l.b16 %v2741
        %v2896 = vpack.c.b16 %v2893, %v2892
        %v2897 = vpack.c.b16 %v2895, %v2894
        %v2901 = vsel %vm1142, %v1935, 0
        %v2904 = vsel %vm1142, %v1936, 0
        %v2907 = vsel %vm1142, %v1937, 0
        %v2910 = vsel %vm1142, %v1938, 0
        %v2913 = vsel %vm1142, %v1939, 0
        %v2916 = vsel %vm1142, %v1940, 0
        %v2919 = vsel %vm1142, %v1941, 0
        %v2922 = vsel %vm1142, %v1942, 0
        %2924 = vmatprep.subr.bf16.mxu0 0
        %2925 = vmatpush1.bf16.msra.mxu0 %v2896
        %2926 = vmatprep.subr.bf16.mxu0 0
        %2927 = vmatpush1.bf16.msra.mxu0 %v2897
        %2928 = vmatprep.subr.bf16.mxu0 0
        %2929 = vmatpush1.bf16.msra.mxu0 0
        %2930 = vmatprep.subr.bf16.mxu0 0
        %2931 = vmatpush1.bf16.msra.mxu0 0
        %2932 = vmatprep.subr.bf16.mxu0 0
        %2933 = vmatpush1.bf16.msra.mxu0 0
        %2934 = vmatprep.subr.bf16.mxu0 0
        %2935 = vmatpush1.bf16.msra.mxu0 0
        %2936 = vmatprep.subr.bf16.mxu0 0
        %2937 = vmatpush1.bf16.msra.mxu0 0
        %2938 = vmatprep.subr.bf16.mxu0 0
        %2939 = vmatpush1.bf16.msra.mxu0 0
        %2940 = vmatprep.subr.bf16.mxu0 0
        %2941 = vmatpush1.bf16.msra.mxu0 0
        %2942 = vmatprep.subr.bf16.mxu0 0
        %2943 = vmatpush1.bf16.msra.mxu0 0
        %2944 = vmatprep.subr.bf16.mxu0 0
        %2945 = vmatpush1.bf16.msra.mxu0 0
        %2946 = vmatprep.subr.bf16.mxu0 0
        %2947 = vmatpush1.bf16.msra.mxu0 0
        %2948 = vmatprep.subr.bf16.mxu0 0
        %2949 = vmatpush1.bf16.msra.mxu0 0
        %2950 = vmatprep.subr.bf16.mxu0 0
        %2951 = vmatpush1.bf16.msra.mxu0 0
        %2952 = vmatprep.subr.bf16.mxu0 0
        %2953 = vmatpush1.bf16.msra.mxu0 0
        %2954 = vmatprep.subr.bf16.mxu0 0
        %2955 = vmatpush1.bf16.msra.mxu0 0
        %2956 = vmatprep.mubr.bf16.mxu0 0
        %2957 = vmatmul.mubr.bf16.gmra.mrb[0].mxu0 %v2901
        %v2958 = vpop.f32.mrb[0].mxu0
        %v2959 = vadd.f32 %v2826, %v2958
        %v2960 = vpop.f32.mrb[0].mxu0
        %v2961 = vpop.f32.mrb[0].mxu0
        %v2962 = vadd.f32 %v2829, %v2961
        %v2963 = vpop.f32.mrb[0].mxu0
        %2964 = vmatprep.mubr.bf16.mxu0 0
        %2965 = vmatmul.mubr.bf16.gmra.mrb[0].mxu0 %v2904
        %v2966 = vpop.f32.mrb[0].mxu0
        %v2967 = vadd.f32 %v2834, %v2966
        %v2968 = vpop.f32.mrb[0].mxu0
        %v2969 = vpop.f32.mrb[0].mxu0
        %v2970 = vadd.f32 %v2837, %v2969
        %v2971 = vpop.f32.mrb[0].mxu0
        %2972 = vmatprep.mubr.bf16.mxu0 0
        %2973 = vmatmul.mubr.bf16.gmra.mrb[0].mxu0 %v2907
        %v2974 = vpop.f32.mrb[0].mxu0
        %v2975 = vadd.f32 %v2842, %v2974
        %v2976 = vpop.f32.mrb[0].mxu0
        %v2977 = vpop.f32.mrb[0].mxu0
        %v2978 = vadd.f32 %v2845, %v2977
        %v2979 = vpop.f32.mrb[0].mxu0
        %2980 = vmatprep.mubr.bf16.mxu0 0
        %2981 = vmatmul.mubr.bf16.gmra.mrb[0].mxu0 %v2910
        %v2982 = vpop.f32.mrb[0].mxu0
        %v2983 = vadd.f32 %v2850, %v2982
        %v2984 = vpop.f32.mrb[0].mxu0
        %v2985 = vpop.f32.mrb[0].mxu0
        %v2986 = vadd.f32 %v2853, %v2985
        %v2987 = vpop.f32.mrb[0].mxu0
        %2988 = vmatprep.mubr.bf16.mxu0 0
        %2989 = vmatmul.mubr.bf16.gmra.mrb[0].mxu0 %v2913
        %v2990 = vpop.f32.mrb[0].mxu0
        %v2991 = vadd.f32 %v2858, %v2990
        %v2992 = vpop.f32.mrb[0].mxu0
        %v2993 = vpop.f32.mrb[0].mxu0
        %v2994 = vadd.f32 %v2861, %v2993
        %v2995 = vpop.f32.mrb[0].mxu0
        %2996 = vmatprep.mubr.bf16.mxu0 0
        %2997 = vmatmul.mubr.bf16.gmra.mrb[0].mxu0 %v2916
        %v2998 = vpop.f32.mrb[0].mxu0
        %v2999 = vadd.f32 %v2866, %v2998
        %v3000 = vpop.f32.mrb[0].mxu0
        %v3001 = vpop.f32.mrb[0].mxu0
        %v3002 = vadd.f32 %v2869, %v3001
        %v3003 = vpop.f32.mrb[0].mxu0
        %3004 = vmatprep.mubr.bf16.mxu0 0
        %3005 = vmatmul.mubr.bf16.gmra.mrb[0].mxu0 %v2919
        %v3006 = vpop.f32.mrb[0].mxu0
        %v3007 = vadd.f32 %v2874, %v3006
        %v3008 = vpop.f32.mrb[0].mxu0
        %v3009 = vpop.f32.mrb[0].mxu0
        %v3010 = vadd.f32 %v2877, %v3009
        %v3011 = vpop.f32.mrb[0].mxu0
        %3012 = vmatprep.mubr.bf16.mxu0 0
        %3013 = vmatmul.mubr.bf16.gmra.mrb[0].mxu0 %v2922
        %v3014 = vpop.f32.mrb[0].mxu0
        %v3015 = vadd.f32 %v2882, %v3014
        %v3016 = vpop.f32.mrb[0].mxu0
        %v3017 = vpop.f32.mrb[0].mxu0
        %v3018 = vadd.f32 %v2885, %v3017
        %v3019 = vpop.f32.mrb[0].mxu0
        %3020 = vdwg.mxu0
        %s3021 = scalar_lea.vmem %s9, 1
        %v3022 = vld [vmem:[%s3021] sm:$0x1]
        %v3024 = vlaneseq
        %v3025 = vshrl.u32 %v3024, 7
        %v3026 = vsub.s32 0, %v3025
        %v3027 = vrot.slane %v3022, %v3026
        %v3029 = vadd.f32 %v2959, %v3027
        %v3030 = vadd.f32 %v2962, %v3027
        %v3031 = vadd.f32 %v2967, %v3027
        %v3032 = vadd.f32 %v2970, %v3027
        %v3033 = vadd.f32 %v2975, %v3027
        %v3034 = vadd.f32 %v2978, %v3027
        %v3035 = vadd.f32 %v2983, %v3027
        %v3036 = vadd.f32 %v2986, %v3027
        %v3037 = vadd.f32 %v2991, %v3027
        %v3038 = vadd.f32 %v2994, %v3027
        %v3039 = vadd.f32 %v2999, %v3027
        %v3040 = vadd.f32 %v3002, %v3027
        %v3041 = vadd.f32 %v3007, %v3027
        %v3042 = vadd.f32 %v3010, %v3027
        %v3043 = vadd.f32 %v3015, %v3027
        %v3044 = vadd.f32 %v3018, %v3027
        %v3045 = vmax.f32 %v3029, 0.0
        %v3046 = vmax.f32 %v3030, 0.0
        %v3047 = vmax.f32 %v3031, 0.0
        %v3048 = vmax.f32 %v3032, 0.0
        %v3049 = vmax.f32 %v3033, 0.0
        %v3050 = vmax.f32 %v3034, 0.0
        %v3051 = vmax.f32 %v3035, 0.0
        %v3052 = vmax.f32 %v3036, 0.0
        %v3053 = vmax.f32 %v3037, 0.0
        %v3054 = vmax.f32 %v3038, 0.0
        %v3055 = vmax.f32 %v3039, 0.0
        %v3056 = vmax.f32 %v3040, 0.0
        %v3057 = vmax.f32 %v3041, 0.0
        %v3058 = vmax.f32 %v3042, 0.0
        %v3059 = vmax.f32 %v3043, 0.0
        %v3060 = vmax.f32 %v3044, 0.0
        %v3061 = vpack.c.bf16 %v3046, %v3045
        %v3062 = vpack.c.bf16 %v3048, %v3047
        %v3063 = vpack.c.bf16 %v3050, %v3049
        %v3064 = vpack.c.bf16 %v3052, %v3051
        %v3065 = vpack.c.bf16 %v3054, %v3053
        %v3066 = vpack.c.bf16 %v3056, %v3055
        %v3067 = vpack.c.bf16 %v3058, %v3057
        %v3068 = vpack.c.bf16 %v3060, %v3059
        %3069 = vmatprep.subr.bf16.mxu0 0
        %3070 = vmatpush1.bf16.msra.mxu0 %v3061
        %3071 = vmatprep.subr.bf16.mxu0 0
        %3072 = vmatpush1.bf16.msra.mxu0 0
        %3073 = vmatprep.subr.bf16.mxu0 0
        %3074 = vmatpush1.bf16.msra.mxu0 0
        %3075 = vmatprep.subr.bf16.mxu0 0
        %3076 = vmatpush1.bf16.msra.mxu0 0
        %3077 = vmatprep.subr.bf16.mxu0 0
        %3078 = vmatpush1.bf16.msra.mxu0 0
        %3079 = vmatprep.subr.bf16.mxu0 0
        %3080 = vmatpush1.bf16.msra.mxu0 0
        %3081 = vmatprep.subr.bf16.mxu0 0
        %3082 = vmatpush1.bf16.msra.mxu0 0
        %3083 = vmatprep.subr.bf16.mxu0 0
        %3084 = vmatpush1.bf16.msra.mxu0 0
        %3085 = vmatprep.subr.bf16.mxu0 0
        %3086 = vmatpush1.bf16.msra.mxu0 0
        %3087 = vmatprep.subr.bf16.mxu0 0
        %3088 = vmatpush1.bf16.msra.mxu0 0
        %3089 = vmatprep.subr.bf16.mxu0 0
        %3090 = vmatpush1.bf16.msra.mxu0 0
        %3091 = vmatprep.subr.bf16.mxu0 0
        %3092 = vmatpush1.bf16.msra.mxu0 0
        %3093 = vmatprep.subr.bf16.mxu0 0
        %3094 = vmatpush1.bf16.msra.mxu0 0
        %3095 = vmatprep.subr.bf16.mxu0 0
        %3096 = vmatpush1.bf16.msra.mxu0 0
        %3097 = vmatprep.subr.bf16.mxu0 0
        %3098 = vmatpush1.bf16.msra.mxu0 0
        %3099 = vmatprep.subr.bf16.mxu0 0
        %3100 = vmatpush1.bf16.msra.mxu0 0
        %3101 = vmatprep.mubr.bf16.mxu0 0
        %3102 = vmatmul.mubr.bf16.gmra.mrb[0].mxu0 %v772
        %v3103 = vpop.f32.mrb[0].mxu0
        %v3104 = vadd.f32 0.0, %v3103
        %v3105 = vpop.f32.mrb[0].mxu0
        %v3106 = vpop.f32.mrb[0].mxu0
        %v3107 = vpop.f32.mrb[0].mxu0
        %3108 = vdwg.mxu0
        %3109 = vmatprep.subr.bf16.mxu0 0
        %3110 = vmatpush1.bf16.msra.mxu0 %v3062
        %3111 = vmatprep.subr.bf16.mxu0 0
        %3112 = vmatpush1.bf16.msra.mxu0 0
        %3113 = vmatprep.subr.bf16.mxu0 0
        %3114 = vmatpush1.bf16.msra.mxu0 0
        %3115 = vmatprep.subr.bf16.mxu0 0
        %3116 = vmatpush1.bf16.msra.mxu0 0
        %3117 = vmatprep.subr.bf16.mxu0 0
        %3118 = vmatpush1.bf16.msra.mxu0 0
        %3119 = vmatprep.subr.bf16.mxu0 0
        %3120 = vmatpush1.bf16.msra.mxu0 0
        %3121 = vmatprep.subr.bf16.mxu0 0
        %3122 = vmatpush1.bf16.msra.mxu0 0
        %3123 = vmatprep.subr.bf16.mxu0 0
        %3124 = vmatpush1.bf16.msra.mxu0 0
        %3125 = vmatprep.subr.bf16.mxu0 0
        %3126 = vmatpush1.bf16.msra.mxu0 0
        %3127 = vmatprep.subr.bf16.mxu0 0
        %3128 = vmatpush1.bf16.msra.mxu0 0
        %3129 = vmatprep.subr.bf16.mxu0 0
        %3130 = vmatpush1.bf16.msra.mxu0 0
        %3131 = vmatprep.subr.bf16.mxu0 0
        %3132 = vmatpush1.bf16.msra.mxu0 0
        %3133 = vmatprep.subr.bf16.mxu0 0
        %3134 = vmatpush1.bf16.msra.mxu0 0
        %3135 = vmatprep.subr.bf16.mxu0 0
        %3136 = vmatpush1.bf16.msra.mxu0 0
        %3137 = vmatprep.subr.bf16.mxu0 0
        %3138 = vmatpush1.bf16.msra.mxu0 0
        %3139 = vmatprep.subr.bf16.mxu0 0
        %3140 = vmatpush1.bf16.msra.mxu0 0
        %3141 = vmatprep.mubr.bf16.mxu0 0
        %3142 = vmatmul.mubr.bf16.gmra.mrb[0].mxu0 %v815
        %v3143 = vpop.f32.mrb[0].mxu0
        %v3144 = vadd.f32 0.0, %v3143
        %v3145 = vpop.f32.mrb[0].mxu0
        %v3146 = vpop.f32.mrb[0].mxu0
        %v3147 = vpop.f32.mrb[0].mxu0
        %3148 = vdwg.mxu0
        %3149 = vmatprep.subr.bf16.mxu0 0
        %3150 = vmatpush1.bf16.msra.mxu0 %v3063
        %3151 = vmatprep.subr.bf16.mxu0 0
        %3152 = vmatpush1.bf16.msra.mxu0 0
        %3153 = vmatprep.subr.bf16.mxu0 0
        %3154 = vmatpush1.bf16.msra.mxu0 0
        %3155 = vmatprep.subr.bf16.mxu0 0
        %3156 = vmatpush1.bf16.msra.mxu0 0
        %3157 = vmatprep.subr.bf16.mxu0 0
        %3158 = vmatpush1.bf16.msra.mxu0 0
        %3159 = vmatprep.subr.bf16.mxu0 0
        %3160 = vmatpush1.bf16.msra.mxu0 0
        %3161 = vmatprep.subr.bf16.mxu0 0
        %3162 = vmatpush1.bf16.msra.mxu0 0
        %3163 = vmatprep.subr.bf16.mxu0 0
        %3164 = vmatpush1.bf16.msra.mxu0 0
        %3165 = vmatprep.subr.bf16.mxu0 0
        %3166 = vmatpush1.bf16.msra.mxu0 0
        %3167 = vmatprep.subr.bf16.mxu0 0
        %3168 = vmatpush1.bf16.msra.mxu0 0
        %3169 = vmatprep.subr.bf16.mxu0 0
        %3170 = vmatpush1.bf16.msra.mxu0 0
        %3171 = vmatprep.subr.bf16.mxu0 0
        %3172 = vmatpush1.bf16.msra.mxu0 0
        %3173 = vmatprep.subr.bf16.mxu0 0
        %3174 = vmatpush1.bf16.msra.mxu0 0
        %3175 = vmatprep.subr.bf16.mxu0 0
        %3176 = vmatpush1.bf16.msra.mxu0 0
        %3177 = vmatprep.subr.bf16.mxu0 0
        %3178 = vmatpush1.bf16.msra.mxu0 0
        %3179 = vmatprep.subr.bf16.mxu0 0
        %3180 = vmatpush1.bf16.msra.mxu0 0
        %3181 = vmatprep.mubr.bf16.mxu0 0
        %3182 = vmatmul.mubr.bf16.gmra.mrb[0].mxu0 %v858
        %v3183 = vpop.f32.mrb[0].mxu0
        %v3184 = vadd.f32 0.0, %v3183
        %v3185 = vpop.f32.mrb[0].mxu0
        %v3186 = vpop.f32.mrb[0].mxu0
        %v3187 = vpop.f32.mrb[0].mxu0
        %3188 = vdwg.mxu0
        %3189 = vmatprep.subr.bf16.mxu0 0
        %3190 = vmatpush1.bf16.msra.mxu0 %v3064
        %3191 = vmatprep.subr.bf16.mxu0 0
        %3192 = vmatpush1.bf16.msra.mxu0 0
        %3193 = vmatprep.subr.bf16.mxu0 0
        %3194 = vmatpush1.bf16.msra.mxu0 0
        %3195 = vmatprep.subr.bf16.mxu0 0
        %3196 = vmatpush1.bf16.msra.mxu0 0
        %3197 = vmatprep.subr.bf16.mxu0 0
        %3198 = vmatpush1.bf16.msra.mxu0 0
        %3199 = vmatprep.subr.bf16.mxu0 0
        %3200 = vmatpush1.bf16.msra.mxu0 0
        %3201 = vmatprep.subr.bf16.mxu0 0
        %3202 = vmatpush1.bf16.msra.mxu0 0
        %3203 = vmatprep.subr.bf16.mxu0 0
        %3204 = vmatpush1.bf16.msra.mxu0 0
        %3205 = vmatprep.subr.bf16.mxu0 0
        %3206 = vmatpush1.bf16.msra.mxu0 0
        %3207 = vmatprep.subr.bf16.mxu0 0
        %3208 = vmatpush1.bf16.msra.mxu0 0
        %3209 = vmatprep.subr.bf16.mxu0 0
        %3210 = vmatpush1.bf16.msra.mxu0 0
        %3211 = vmatprep.subr.bf16.mxu0 0
        %3212 = vmatpush1.bf16.msra.mxu0 0
        %3213 = vmatprep.subr.bf16.mxu0 0
        %3214 = vmatpush1.bf16.msra.mxu0 0
        %3215 = vmatprep.subr.bf16.mxu0 0
        %3216 = vmatpush1.bf16.msra.mxu0 0
        %3217 = vmatprep.subr.bf16.mxu0 0
        %3218 = vmatpush1.bf16.msra.mxu0 0
        %3219 = vmatprep.subr.bf16.mxu0 0
        %3220 = vmatpush1.bf16.msra.mxu0 0
        %3221 = vmatprep.mubr.bf16.mxu0 0
        %3222 = vmatmul.mubr.bf16.gmra.mrb[0].mxu0 %v901
        %v3223 = vpop.f32.mrb[0].mxu0
        %v3224 = vadd.f32 0.0, %v3223
        %v3225 = vpop.f32.mrb[0].mxu0
        %v3226 = vpop.f32.mrb[0].mxu0
        %v3227 = vpop.f32.mrb[0].mxu0
        %3228 = vdwg.mxu0
        %3229 = vmatprep.subr.bf16.mxu0 0
        %3230 = vmatpush1.bf16.msra.mxu0 %v3065
        %3231 = vmatprep.subr.bf16.mxu0 0
        %3232 = vmatpush1.bf16.msra.mxu0 0
        %3233 = vmatprep.subr.bf16.mxu0 0
        %3234 = vmatpush1.bf16.msra.mxu0 0
        %3235 = vmatprep.subr.bf16.mxu0 0
        %3236 = vmatpush1.bf16.msra.mxu0 0
        %3237 = vmatprep.subr.bf16.mxu0 0
        %3238 = vmatpush1.bf16.msra.mxu0 0
        %3239 = vmatprep.subr.bf16.mxu0 0
        %3240 = vmatpush1.bf16.msra.mxu0 0
        %3241 = vmatprep.subr.bf16.mxu0 0
        %3242 = vmatpush1.bf16.msra.mxu0 0
        %3243 = vmatprep.subr.bf16.mxu0 0
        %3244 = vmatpush1.bf16.msra.mxu0 0
        %3245 = vmatprep.subr.bf16.mxu0 0
        %3246 = vmatpush1.bf16.msra.mxu0 0
        %3247 = vmatprep.subr.bf16.mxu0 0
        %3248 = vmatpush1.bf16.msra.mxu0 0
        %3249 = vmatprep.subr.bf16.mxu0 0
        %3250 = vmatpush1.bf16.msra.mxu0 0
        %3251 = vmatprep.subr.bf16.mxu0 0
        %3252 = vmatpush1.bf16.msra.mxu0 0
        %3253 = vmatprep.subr.bf16.mxu0 0
        %3254 = vmatpush1.bf16.msra.mxu0 0
        %3255 = vmatprep.subr.bf16.mxu0 0
        %3256 = vmatpush1.bf16.msra.mxu0 0
        %3257 = vmatprep.subr.bf16.mxu0 0
        %3258 = vmatpush1.bf16.msra.mxu0 0
        %3259 = vmatprep.subr.bf16.mxu0 0
        %3260 = vmatpush1.bf16.msra.mxu0 0
        %3261 = vmatprep.mubr.bf16.mxu0 0
        %3262 = vmatmul.mubr.bf16.gmra.mrb[0].mxu0 %v944
        %v3263 = vpop.f32.mrb[0].mxu0
        %v3264 = vadd.f32 0.0, %v3263
        %v3265 = vpop.f32.mrb[0].mxu0
        %v3266 = vpop.f32.mrb[0].mxu0
        %v3267 = vpop.f32.mrb[0].mxu0
        %3268 = vdwg.mxu0
        %3269 = vmatprep.subr.bf16.mxu0 0
        %3270 = vmatpush1.bf16.msra.mxu0 %v3066
        %3271 = vmatprep.subr.bf16.mxu0 0
        %3272 = vmatpush1.bf16.msra.mxu0 0
        %3273 = vmatprep.subr.bf16.mxu0 0
        %3274 = vmatpush1.bf16.msra.mxu0 0
        %3275 = vmatprep.subr.bf16.mxu0 0
        %3276 = vmatpush1.bf16.msra.mxu0 0
        %3277 = vmatprep.subr.bf16.mxu0 0
        %3278 = vmatpush1.bf16.msra.mxu0 0
        %3279 = vmatprep.subr.bf16.mxu0 0
        %3280 = vmatpush1.bf16.msra.mxu0 0
        %3281 = vmatprep.subr.bf16.mxu0 0
        %3282 = vmatpush1.bf16.msra.mxu0 0
        %3283 = vmatprep.subr.bf16.mxu0 0
        %3284 = vmatpush1.bf16.msra.mxu0 0
        %3285 = vmatprep.subr.bf16.mxu0 0
        %3286 = vmatpush1.bf16.msra.mxu0 0
        %3287 = vmatprep.subr.bf16.mxu0 0
        %3288 = vmatpush1.bf16.msra.mxu0 0
        %3289 = vmatprep.subr.bf16.mxu0 0
        %3290 = vmatpush1.bf16.msra.mxu0 0
        %3291 = vmatprep.subr.bf16.mxu0 0
        %3292 = vmatpush1.bf16.msra.mxu0 0
        %3293 = vmatprep.subr.bf16.mxu0 0
        %3294 = vmatpush1.bf16.msra.mxu0 0
        %3295 = vmatprep.subr.bf16.mxu0 0
        %3296 = vmatpush1.bf16.msra.mxu0 0
        %3297 = vmatprep.subr.bf16.mxu0 0
        %3298 = vmatpush1.bf16.msra.mxu0 0
        %3299 = vmatprep.subr.bf16.mxu0 0
        %3300 = vmatpush1.bf16.msra.mxu0 0
        %3301 = vmatprep.mubr.bf16.mxu0 0
        %3302 = vmatmul.mubr.bf16.gmra.mrb[0].mxu0 %v987
        %v3303 = vpop.f32.mrb[0].mxu0
        %v3304 = vadd.f32 0.0, %v3303
        %v3305 = vpop.f32.mrb[0].mxu0
        %v3306 = vpop.f32.mrb[0].mxu0
        %v3307 = vpop.f32.mrb[0].mxu0
        %3308 = vdwg.mxu0
        %3309 = vmatprep.subr.bf16.mxu0 0
        %3310 = vmatpush1.bf16.msra.mxu0 %v3067
        %3311 = vmatprep.subr.bf16.mxu0 0
        %3312 = vmatpush1.bf16.msra.mxu0 0
        %3313 = vmatprep.subr.bf16.mxu0 0
        %3314 = vmatpush1.bf16.msra.mxu0 0
        %3315 = vmatprep.subr.bf16.mxu0 0
        %3316 = vmatpush1.bf16.msra.mxu0 0
        %3317 = vmatprep.subr.bf16.mxu0 0
        %3318 = vmatpush1.bf16.msra.mxu0 0
        %3319 = vmatprep.subr.bf16.mxu0 0
        %3320 = vmatpush1.bf16.msra.mxu0 0
        %3321 = vmatprep.subr.bf16.mxu0 0
        %3322 = vmatpush1.bf16.msra.mxu0 0
        %3323 = vmatprep.subr.bf16.mxu0 0
        %3324 = vmatpush1.bf16.msra.mxu0 0
        %3325 = vmatprep.subr.bf16.mxu0 0
        %3326 = vmatpush1.bf16.msra.mxu0 0
        %3327 = vmatprep.subr.bf16.mxu0 0
        %3328 = vmatpush1.bf16.msra.mxu0 0
        %3329 = vmatprep.subr.bf16.mxu0 0
        %3330 = vmatpush1.bf16.msra.mxu0 0
        %3331 = vmatprep.subr.bf16.mxu0 0
        %3332 = vmatpush1.bf16.msra.mxu0 0
        %3333 = vmatprep.subr.bf16.mxu0 0
        %3334 = vmatpush1.bf16.msra.mxu0 0
        %3335 = vmatprep.subr.bf16.mxu0 0
        %3336 = vmatpush1.bf16.msra.mxu0 0
        %3337 = vmatprep.subr.bf16.mxu0 0
        %3338 = vmatpush1.bf16.msra.mxu0 0
        %3339 = vmatprep.subr.bf16.mxu0 0
        %3340 = vmatpush1.bf16.msra.mxu0 0
        %3341 = vmatprep.mubr.bf16.mxu0 0
        %3342 = vmatmul.mubr.bf16.gmra.mrb[0].mxu0 %v1030
        %v3343 = vpop.f32.mrb[0].mxu0
        %v3344 = vadd.f32 0.0, %v3343
        %v3345 = vpop.f32.mrb[0].mxu0
        %v3346 = vpop.f32.mrb[0].mxu0
        %v3347 = vpop.f32.mrb[0].mxu0
        %3348 = vdwg.mxu0
        %3349 = vmatprep.subr.bf16.mxu0 0
        %3350 = vmatpush1.bf16.msra.mxu0 %v3068
        %3351 = vmatprep.subr.bf16.mxu0 0
        %3352 = vmatpush1.bf16.msra.mxu0 0
        %3353 = vmatprep.subr.bf16.mxu0 0
        %3354 = vmatpush1.bf16.msra.mxu0 0
        %3355 = vmatprep.subr.bf16.mxu0 0
        %3356 = vmatpush1.bf16.msra.mxu0 0
        %3357 = vmatprep.subr.bf16.mxu0 0
        %3358 = vmatpush1.bf16.msra.mxu0 0
        %3359 = vmatprep.subr.bf16.mxu0 0
        %3360 = vmatpush1.bf16.msra.mxu0 0
        %3361 = vmatprep.subr.bf16.mxu0 0
        %3362 = vmatpush1.bf16.msra.mxu0 0
        %3363 = vmatprep.subr.bf16.mxu0 0
        %3364 = vmatpush1.bf16.msra.mxu0 0
        %3365 = vmatprep.subr.bf16.mxu0 0
        %3366 = vmatpush1.bf16.msra.mxu0 0
        %3367 = vmatprep.subr.bf16.mxu0 0
        %3368 = vmatpush1.bf16.msra.mxu0 0
        %3369 = vmatprep.subr.bf16.mxu0 0
        %3370 = vmatpush1.bf16.msra.mxu0 0
        %3371 = vmatprep.subr.bf16.mxu0 0
        %3372 = vmatpush1.bf16.msra.mxu0 0
        %3373 = vmatprep.subr.bf16.mxu0 0
        %3374 = vmatpush1.bf16.msra.mxu0 0
        %3375 = vmatprep.subr.bf16.mxu0 0
        %3376 = vmatpush1.bf16.msra.mxu0 0
        %3377 = vmatprep.subr.bf16.mxu0 0
        %3378 = vmatpush1.bf16.msra.mxu0 0
        %3379 = vmatprep.subr.bf16.mxu0 0
        %3380 = vmatpush1.bf16.msra.mxu0 0
        %3381 = vmatprep.mubr.bf16.mxu0 0
        %3382 = vmatmul.mubr.bf16.gmra.mrb[0].mxu0 %v1073
        %v3383 = vpop.f32.mrb[0].mxu0
        %v3384 = vadd.f32 0.0, %v3383
        %v3385 = vpop.f32.mrb[0].mxu0
        %v3386 = vpop.f32.mrb[0].mxu0
        %v3387 = vpop.f32.mrb[0].mxu0
        %3388 = vdwg.mxu0
        %v3389 = vpack.c.bf16 %v3144, %v3104
        %v3390 = vpack.c.bf16 %v3224, %v3184
        %v3391 = vpack.c.bf16 %v3304, %v3264
        %v3392 = vpack.c.bf16 %v3384, %v3344
        %s3393 = scalar_lea.vmem %s5, 32
        %v3394 = vld [vmem:[%s3393] sm:$0xf]
        %v3395 = vld [vmem:[%s3393 + $0x4] sm:$0xf]
        %v3396 = vld [vmem:[%s3393 + $0x8] sm:$0xf]
        %v3397 = vld [vmem:[%s3393 + $0xc] sm:$0xf]
        %s3398 = scalar_lea.vmem %s6, 2
        %v3399 = vld [vmem:[%s3398] sm:$0x1]
        %v3401 = vlaneseq
        %v3402 = vshrl.u32 %v3401, 7
        %v3403 = vsub.s32 0, %v3402
        %v3404 = vrot.slane %v3399, %v3403
        %v3410 = vunpack.c.l.b16 %v3394
        %v3411 = vunpack.c.l.b16 %v3395
        %v3412 = vunpack.c.l.b16 %v3396
        %v3413 = vunpack.c.l.b16 %v3397
        %v3414 = vpack.c.b16 %v3411, %v3410
        %v3415 = vpack.c.b16 %v3413, %v3412
        %v3419 = vsel %vm1142, %v3389, 0
        %v3422 = vsel %vm1142, %v3390, 0
        %v3425 = vsel %vm1142, %v3391, 0
        %v3428 = vsel %vm1142, %v3392, 0
        %3430 = vmatprep.subr.bf16.mxu0 0
        %3431 = vmatpush1.bf16.msra.mxu0 %v3414
        %3432 = vmatprep.subr.bf16.mxu0 0
        %3433 = vmatpush1.bf16.msra.mxu0 %v3415
        %3434 = vmatprep.subr.bf16.mxu0 0
        %3435 = vmatpush1.bf16.msra.mxu0 0
        %3436 = vmatprep.subr.bf16.mxu0 0
        %3437 = vmatpush1.bf16.msra.mxu0 0
        %3438 = vmatprep.subr.bf16.mxu0 0
        %3439 = vmatpush1.bf16.msra.mxu0 0
        %3440 = vmatprep.subr.bf16.mxu0 0
        %3441 = vmatpush1.bf16.msra.mxu0 0
        %3442 = vmatprep.subr.bf16.mxu0 0
        %3443 = vmatpush1.bf16.msra.mxu0 0
        %3444 = vmatprep.subr.bf16.mxu0 0
        %3445 = vmatpush1.bf16.msra.mxu0 0
        %3446 = vmatprep.subr.bf16.mxu0 0
        %3447 = vmatpush1.bf16.msra.mxu0 0
        %3448 = vmatprep.subr.bf16.mxu0 0
        %3449 = vmatpush1.bf16.msra.mxu0 0
        %3450 = vmatprep.subr.bf16.mxu0 0
        %3451 = vmatpush1.bf16.msra.mxu0 0
        %3452 = vmatprep.subr.bf16.mxu0 0
        %3453 = vmatpush1.bf16.msra.mxu0 0
        %3454 = vmatprep.subr.bf16.mxu0 0
        %3455 = vmatpush1.bf16.msra.mxu0 0
        %3456 = vmatprep.subr.bf16.mxu0 0
        %3457 = vmatpush1.bf16.msra.mxu0 0
        %3458 = vmatprep.subr.bf16.mxu0 0
        %3459 = vmatpush1.bf16.msra.mxu0 0
        %3460 = vmatprep.subr.bf16.mxu0 0
        %3461 = vmatpush1.bf16.msra.mxu0 0
        %3462 = vmatprep.mubr.bf16.mxu0 0
        %3463 = vmatmul.mubr.bf16.gmra.mrb[0].mxu0 %v3419
        %v3464 = vpop.f32.mrb[0].mxu0
        %v3465 = vadd.f32 %v3404, %v3464
        %v3466 = vpop.f32.mrb[0].mxu0
        %v3467 = vpop.f32.mrb[0].mxu0
        %v3468 = vadd.f32 %v3404, %v3467
        %v3469 = vpop.f32.mrb[0].mxu0
        %3470 = vmatprep.mubr.bf16.mxu0 0
        %3471 = vmatmul.mubr.bf16.gmra.mrb[0].mxu0 %v3422
        %v3472 = vpop.f32.mrb[0].mxu0
        %v3473 = vadd.f32 %v3404, %v3472
        %v3474 = vpop.f32.mrb[0].mxu0
        %v3475 = vpop.f32.mrb[0].mxu0
        %v3476 = vadd.f32 %v3404, %v3475
        %v3477 = vpop.f32.mrb[0].mxu0
        %3478 = vmatprep.mubr.bf16.mxu0 0
        %3479 = vmatmul.mubr.bf16.gmra.mrb[0].mxu0 %v3425
        %v3480 = vpop.f32.mrb[0].mxu0
        %v3481 = vadd.f32 %v3404, %v3480
        %v3482 = vpop.f32.mrb[0].mxu0
        %v3483 = vpop.f32.mrb[0].mxu0
        %v3484 = vadd.f32 %v3404, %v3483
        %v3485 = vpop.f32.mrb[0].mxu0
        %3486 = vmatprep.mubr.bf16.mxu0 0
        %3487 = vmatmul.mubr.bf16.gmra.mrb[0].mxu0 %v3428
        %v3488 = vpop.f32.mrb[0].mxu0
        %v3489 = vadd.f32 %v3404, %v3488
        %v3490 = vpop.f32.mrb[0].mxu0
        %v3491 = vpop.f32.mrb[0].mxu0
        %v3492 = vadd.f32 %v3404, %v3491
        %v3493 = vpop.f32.mrb[0].mxu0
        %3494 = vdwg.mxu0
        %v3495 = vmax.f32 %v3465, 0.0
        %v3496 = vmax.f32 %v3468, 0.0
        %v3497 = vmax.f32 %v3473, 0.0
        %v3498 = vmax.f32 %v3476, 0.0
        %v3499 = vmax.f32 %v3481, 0.0
        %v3500 = vmax.f32 %v3484, 0.0
        %v3501 = vmax.f32 %v3489, 0.0
        %v3502 = vmax.f32 %v3492, 0.0
        %v3503 = vpack.c.bf16 %v3495, %v3495
        %v3504 = vpack.c.bf16 %v3496, %v3496
        %v3505 = vpack.c.bf16 %v3497, %v3497
        %v3506 = vpack.c.bf16 %v3498, %v3498
        %v3507 = vpack.c.bf16 %v3499, %v3499
        %v3508 = vpack.c.bf16 %v3500, %v3500
        %v3509 = vpack.c.bf16 %v3501, %v3501
        %v3510 = vpack.c.bf16 %v3502, %v3502
        %v3512 = vsel %vm1240, %v3503, 0
        %3514 = vmatprep.subr.bf16.mxu0 0
        %3515 = vmatpush1.bf16.msra.mxu0 %v3512
        %3516 = vmatprep.subr.bf16.mxu0 0
        %3517 = vmatpush1.bf16.msra.mxu0 0
        %3518 = vmatprep.subr.bf16.mxu0 0
        %3519 = vmatpush1.bf16.msra.mxu0 0
        %3520 = vmatprep.subr.bf16.mxu0 0
        %3521 = vmatpush1.bf16.msra.mxu0 0
        %3522 = vmatprep.subr.bf16.mxu0 0
        %3523 = vmatpush1.bf16.msra.mxu0 0
        %3524 = vmatprep.subr.bf16.mxu0 0
        %3525 = vmatpush1.bf16.msra.mxu0 0
        %3526 = vmatprep.subr.bf16.mxu0 0
        %3527 = vmatpush1.bf16.msra.mxu0 0
        %3528 = vmatprep.subr.bf16.mxu0 0
        %3529 = vmatpush1.bf16.msra.mxu0 0
        %3530 = vmatprep.subr.bf16.mxu0 0
        %3531 = vmatpush1.bf16.msra.mxu0 0
        %3532 = vmatprep.subr.bf16.mxu0 0
        %3533 = vmatpush1.bf16.msra.mxu0 0
        %3534 = vmatprep.subr.bf16.mxu0 0
        %3535 = vmatpush1.bf16.msra.mxu0 0
        %3536 = vmatprep.subr.bf16.mxu0 0
        %3537 = vmatpush1.bf16.msra.mxu0 0
        %3538 = vmatprep.subr.bf16.mxu0 0
        %3539 = vmatpush1.bf16.msra.mxu0 0
        %3540 = vmatprep.subr.bf16.mxu0 0
        %3541 = vmatpush1.bf16.msra.mxu0 0
        %3542 = vmatprep.subr.bf16.mxu0 0
        %3543 = vmatpush1.bf16.msra.mxu0 0
        %3544 = vmatprep.subr.bf16.mxu0 0
        %3545 = vmatpush1.bf16.msra.mxu0 0
        %3546 = vmatprep.mubr.bf16.mxu0 0
        %3547 = vmatmul.mubr.bf16.gmra.mrb[0].mxu0 %v1238
        %v3548 = vpop.f32.mrb[0].mxu0
        %v3549 = vadd.f32 0.0, %v3548
        %v3550 = vpop.f32.mrb[0].mxu0
        %v3551 = vpop.f32.mrb[0].mxu0
        %v3552 = vadd.f32 0.0, %v3551
        %v3553 = vpop.f32.mrb[0].mxu0
        %3554 = vdwg.mxu0
        %v3556 = vsel %vm1240, %v3504, 0
        %3558 = vmatprep.subr.bf16.mxu0 0
        %3559 = vmatpush1.bf16.msra.mxu0 %v3556
        %3560 = vmatprep.subr.bf16.mxu0 0
        %3561 = vmatpush1.bf16.msra.mxu0 0
        %3562 = vmatprep.subr.bf16.mxu0 0
        %3563 = vmatpush1.bf16.msra.mxu0 0
        %3564 = vmatprep.subr.bf16.mxu0 0
        %3565 = vmatpush1.bf16.msra.mxu0 0
        %3566 = vmatprep.subr.bf16.mxu0 0
        %3567 = vmatpush1.bf16.msra.mxu0 0
        %3568 = vmatprep.subr.bf16.mxu0 0
        %3569 = vmatpush1.bf16.msra.mxu0 0
        %3570 = vmatprep.subr.bf16.mxu0 0
        %3571 = vmatpush1.bf16.msra.mxu0 0
        %3572 = vmatprep.subr.bf16.mxu0 0
        %3573 = vmatpush1.bf16.msra.mxu0 0
        %3574 = vmatprep.subr.bf16.mxu0 0
        %3575 = vmatpush1.bf16.msra.mxu0 0
        %3576 = vmatprep.subr.bf16.mxu0 0
        %3577 = vmatpush1.bf16.msra.mxu0 0
        %3578 = vmatprep.subr.bf16.mxu0 0
        %3579 = vmatpush1.bf16.msra.mxu0 0
        %3580 = vmatprep.subr.bf16.mxu0 0
        %3581 = vmatpush1.bf16.msra.mxu0 0
        %3582 = vmatprep.subr.bf16.mxu0 0
        %3583 = vmatpush1.bf16.msra.mxu0 0
        %3584 = vmatprep.subr.bf16.mxu0 0
        %3585 = vmatpush1.bf16.msra.mxu0 0
        %3586 = vmatprep.subr.bf16.mxu0 0
        %3587 = vmatpush1.bf16.msra.mxu0 0
        %3588 = vmatprep.subr.bf16.mxu0 0
        %3589 = vmatpush1.bf16.msra.mxu0 0
        %3590 = vmatprep.mubr.bf16.mxu0 0
        %3591 = vmatmul.mubr.bf16.gmra.mrb[0].mxu0 %v1286
        %v3592 = vpop.f32.mrb[0].mxu0
        %v3593 = vadd.f32 0.0, %v3592
        %v3594 = vpop.f32.mrb[0].mxu0
        %v3595 = vpop.f32.mrb[0].mxu0
        %v3596 = vadd.f32 0.0, %v3595
        %v3597 = vpop.f32.mrb[0].mxu0
        %3598 = vdwg.mxu0
        %v3600 = vsel %vm1240, %v3505, 0
        %3602 = vmatprep.subr.bf16.mxu0 0
        %3603 = vmatpush1.bf16.msra.mxu0 %v3600
        %3604 = vmatprep.subr.bf16.mxu0 0
        %3605 = vmatpush1.bf16.msra.mxu0 0
        %3606 = vmatprep.subr.bf16.mxu0 0
        %3607 = vmatpush1.bf16.msra.mxu0 0
        %3608 = vmatprep.subr.bf16.mxu0 0
        %3609 = vmatpush1.bf16.msra.mxu0 0
        %3610 = vmatprep.subr.bf16.mxu0 0
        %3611 = vmatpush1.bf16.msra.mxu0 0
        %3612 = vmatprep.subr.bf16.mxu0 0
        %3613 = vmatpush1.bf16.msra.mxu0 0
        %3614 = vmatprep.subr.bf16.mxu0 0
        %3615 = vmatpush1.bf16.msra.mxu0 0
        %3616 = vmatprep.subr.bf16.mxu0 0
        %3617 = vmatpush1.bf16.msra.mxu0 0
        %3618 = vmatprep.subr.bf16.mxu0 0
        %3619 = vmatpush1.bf16.msra.mxu0 0
        %3620 = vmatprep.subr.bf16.mxu0 0
        %3621 = vmatpush1.bf16.msra.mxu0 0
        %3622 = vmatprep.subr.bf16.mxu0 0
        %3623 = vmatpush1.bf16.msra.mxu0 0
        %3624 = vmatprep.subr.bf16.mxu0 0
        %3625 = vmatpush1.bf16.msra.mxu0 0
        %3626 = vmatprep.subr.bf16.mxu0 0
        %3627 = vmatpush1.bf16.msra.mxu0 0
        %3628 = vmatprep.subr.bf16.mxu0 0
        %3629 = vmatpush1.bf16.msra.mxu0 0
        %3630 = vmatprep.subr.bf16.mxu0 0
        %3631 = vmatpush1.bf16.msra.mxu0 0
        %3632 = vmatprep.subr.bf16.mxu0 0
        %3633 = vmatpush1.bf16.msra.mxu0 0
        %3634 = vmatprep.mubr.bf16.mxu0 0
        %3635 = vmatmul.mubr.bf16.gmra.mrb[0].mxu0 %v1333
        %v3636 = vpop.f32.mrb[0].mxu0
        %v3637 = vadd.f32 0.0, %v3636
        %v3638 = vpop.f32.mrb[0].mxu0
        %v3639 = vpop.f32.mrb[0].mxu0
        %v3640 = vadd.f32 0.0, %v3639
        %v3641 = vpop.f32.mrb[0].mxu0
        %3642 = vdwg.mxu0
        %v3644 = vsel %vm1240, %v3506, 0
        %3646 = vmatprep.subr.bf16.mxu0 0
        %3647 = vmatpush1.bf16.msra.mxu0 %v3644
        %3648 = vmatprep.subr.bf16.mxu0 0
        %3649 = vmatpush1.bf16.msra.mxu0 0
        %3650 = vmatprep.subr.bf16.mxu0 0
        %3651 = vmatpush1.bf16.msra.mxu0 0
        %3652 = vmatprep.subr.bf16.mxu0 0
        %3653 = vmatpush1.bf16.msra.mxu0 0
        %3654 = vmatprep.subr.bf16.mxu0 0
        %3655 = vmatpush1.bf16.msra.mxu0 0
        %3656 = vmatprep.subr.bf16.mxu0 0
        %3657 = vmatpush1.bf16.msra.mxu0 0
        %3658 = vmatprep.subr.bf16.mxu0 0
        %3659 = vmatpush1.bf16.msra.mxu0 0
        %3660 = vmatprep.subr.bf16.mxu0 0
        %3661 = vmatpush1.bf16.msra.mxu0 0
        %3662 = vmatprep.subr.bf16.mxu0 0
        %3663 = vmatpush1.bf16.msra.mxu0 0
        %3664 = vmatprep.subr.bf16.mxu0 0
        %3665 = vmatpush1.bf16.msra.mxu0 0
        %3666 = vmatprep.subr.bf16.mxu0 0
        %3667 = vmatpush1.bf16.msra.mxu0 0
        %3668 = vmatprep.subr.bf16.mxu0 0
        %3669 = vmatpush1.bf16.msra.mxu0 0
        %3670 = vmatprep.subr.bf16.mxu0 0
        %3671 = vmatpush1.bf16.msra.mxu0 0
        %3672 = vmatprep.subr.bf16.mxu0 0
        %3673 = vmatpush1.bf16.msra.mxu0 0
        %3674 = vmatprep.subr.bf16.mxu0 0
        %3675 = vmatpush1.bf16.msra.mxu0 0
        %3676 = vmatprep.subr.bf16.mxu0 0
        %3677 = vmatpush1.bf16.msra.mxu0 0
        %3678 = vmatprep.mubr.bf16.mxu0 0
        %3679 = vmatmul.mubr.bf16.gmra.mrb[0].mxu0 %v1380
        %v3680 = vpop.f32.mrb[0].mxu0
        %v3681 = vadd.f32 0.0, %v3680
        %v3682 = vpop.f32.mrb[0].mxu0
        %v3683 = vpop.f32.mrb[0].mxu0
        %v3684 = vadd.f32 0.0, %v3683
        %v3685 = vpop.f32.mrb[0].mxu0
        %3686 = vdwg.mxu0
        %v3688 = vsel %vm1240, %v3507, 0
        %3690 = vmatprep.subr.bf16.mxu0 0
        %3691 = vmatpush1.bf16.msra.mxu0 %v3688
        %3692 = vmatprep.subr.bf16.mxu0 0
        %3693 = vmatpush1.bf16.msra.mxu0 0
        %3694 = vmatprep.subr.bf16.mxu0 0
        %3695 = vmatpush1.bf16.msra.mxu0 0
        %3696 = vmatprep.subr.bf16.mxu0 0
        %3697 = vmatpush1.bf16.msra.mxu0 0
        %3698 = vmatprep.subr.bf16.mxu0 0
        %3699 = vmatpush1.bf16.msra.mxu0 0
        %3700 = vmatprep.subr.bf16.mxu0 0
        %3701 = vmatpush1.bf16.msra.mxu0 0
        %3702 = vmatprep.subr.bf16.mxu0 0
        %3703 = vmatpush1.bf16.msra.mxu0 0
        %3704 = vmatprep.subr.bf16.mxu0 0
        %3705 = vmatpush1.bf16.msra.mxu0 0
        %3706 = vmatprep.subr.bf16.mxu0 0
        %3707 = vmatpush1.bf16.msra.mxu0 0
        %3708 = vmatprep.subr.bf16.mxu0 0
        %3709 = vmatpush1.bf16.msra.mxu0 0
        %3710 = vmatprep.subr.bf16.mxu0 0
        %3711 = vmatpush1.bf16.msra.mxu0 0
        %3712 = vmatprep.subr.bf16.mxu0 0
        %3713 = vmatpush1.bf16.msra.mxu0 0
        %3714 = vmatprep.subr.bf16.mxu0 0
        %3715 = vmatpush1.bf16.msra.mxu0 0
        %3716 = vmatprep.subr.bf16.mxu0 0
        %3717 = vmatpush1.bf16.msra.mxu0 0
        %3718 = vmatprep.subr.bf16.mxu0 0
        %3719 = vmatpush1.bf16.msra.mxu0 0
        %3720 = vmatprep.subr.bf16.mxu0 0
        %3721 = vmatpush1.bf16.msra.mxu0 0
        %3722 = vmatprep.mubr.bf16.mxu0 0
        %3723 = vmatmul.mubr.bf16.gmra.mrb[0].mxu0 %v1427
        %v3724 = vpop.f32.mrb[0].mxu0
        %v3725 = vadd.f32 0.0, %v3724
        %v3726 = vpop.f32.mrb[0].mxu0
        %v3727 = vpop.f32.mrb[0].mxu0
        %v3728 = vadd.f32 0.0, %v3727
        %v3729 = vpop.f32.mrb[0].mxu0
        %3730 = vdwg.mxu0
        %v3732 = vsel %vm1240, %v3508, 0
        %3734 = vmatprep.subr.bf16.mxu0 0
        %3735 = vmatpush1.bf16.msra.mxu0 %v3732
        %3736 = vmatprep.subr.bf16.mxu0 0
        %3737 = vmatpush1.bf16.msra.mxu0 0
        %3738 = vmatprep.subr.bf16.mxu0 0
        %3739 = vmatpush1.bf16.msra.mxu0 0
        %3740 = vmatprep.subr.bf16.mxu0 0
        %3741 = vmatpush1.bf16.msra.mxu0 0
        %3742 = vmatprep.subr.bf16.mxu0 0
        %3743 = vmatpush1.bf16.msra.mxu0 0
        %3744 = vmatprep.subr.bf16.mxu0 0
        %3745 = vmatpush1.bf16.msra.mxu0 0
        %3746 = vmatprep.subr.bf16.mxu0 0
        %3747 = vmatpush1.bf16.msra.mxu0 0
        %3748 = vmatprep.subr.bf16.mxu0 0
        %3749 = vmatpush1.bf16.msra.mxu0 0
        %3750 = vmatprep.subr.bf16.mxu0 0
        %3751 = vmatpush1.bf16.msra.mxu0 0
        %3752 = vmatprep.subr.bf16.mxu0 0
        %3753 = vmatpush1.bf16.msra.mxu0 0
        %3754 = vmatprep.subr.bf16.mxu0 0
        %3755 = vmatpush1.bf16.msra.mxu0 0
        %3756 = vmatprep.subr.bf16.mxu0 0
        %3757 = vmatpush1.bf16.msra.mxu0 0
        %3758 = vmatprep.subr.bf16.mxu0 0
        %3759 = vmatpush1.bf16.msra.mxu0 0
        %3760 = vmatprep.subr.bf16.mxu0 0
        %3761 = vmatpush1.bf16.msra.mxu0 0
        %3762 = vmatprep.subr.bf16.mxu0 0
        %3763 = vmatpush1.bf16.msra.mxu0 0
        %3764 = vmatprep.subr.bf16.mxu0 0
        %3765 = vmatpush1.bf16.msra.mxu0 0
        %3766 = vmatprep.mubr.bf16.mxu0 0
        %3767 = vmatmul.mubr.bf16.gmra.mrb[0].mxu0 %v1474
        %v3768 = vpop.f32.mrb[0].mxu0
        %v3769 = vadd.f32 0.0, %v3768
        %v3770 = vpop.f32.mrb[0].mxu0
        %v3771 = vpop.f32.mrb[0].mxu0
        %v3772 = vadd.f32 0.0, %v3771
        %v3773 = vpop.f32.mrb[0].mxu0
        %3774 = vdwg.mxu0
        %v3776 = vsel %vm1240, %v3509, 0
        %3778 = vmatprep.subr.bf16.mxu0 0
        %3779 = vmatpush1.bf16.msra.mxu0 %v3776
        %3780 = vmatprep.subr.bf16.mxu0 0
        %3781 = vmatpush1.bf16.msra.mxu0 0
        %3782 = vmatprep.subr.bf16.mxu0 0
        %3783 = vmatpush1.bf16.msra.mxu0 0
        %3784 = vmatprep.subr.bf16.mxu0 0
        %3785 = vmatpush1.bf16.msra.mxu0 0
        %3786 = vmatprep.subr.bf16.mxu0 0
        %3787 = vmatpush1.bf16.msra.mxu0 0
        %3788 = vmatprep.subr.bf16.mxu0 0
        %3789 = vmatpush1.bf16.msra.mxu0 0
        %3790 = vmatprep.subr.bf16.mxu0 0
        %3791 = vmatpush1.bf16.msra.mxu0 0
        %3792 = vmatprep.subr.bf16.mxu0 0
        %3793 = vmatpush1.bf16.msra.mxu0 0
        %3794 = vmatprep.subr.bf16.mxu0 0
        %3795 = vmatpush1.bf16.msra.mxu0 0
        %3796 = vmatprep.subr.bf16.mxu0 0
        %3797 = vmatpush1.bf16.msra.mxu0 0
        %3798 = vmatprep.subr.bf16.mxu0 0
        %3799 = vmatpush1.bf16.msra.mxu0 0
        %3800 = vmatprep.subr.bf16.mxu0 0
        %3801 = vmatpush1.bf16.msra.mxu0 0
        %3802 = vmatprep.subr.bf16.mxu0 0
        %3803 = vmatpush1.bf16.msra.mxu0 0
        %3804 = vmatprep.subr.bf16.mxu0 0
        %3805 = vmatpush1.bf16.msra.mxu0 0
        %3806 = vmatprep.subr.bf16.mxu0 0
        %3807 = vmatpush1.bf16.msra.mxu0 0
        %3808 = vmatprep.subr.bf16.mxu0 0
        %3809 = vmatpush1.bf16.msra.mxu0 0
        %3810 = vmatprep.mubr.bf16.mxu0 0
        %3811 = vmatmul.mubr.bf16.gmra.mrb[0].mxu0 %v1521
        %v3812 = vpop.f32.mrb[0].mxu0
        %v3813 = vadd.f32 0.0, %v3812
        %v3814 = vpop.f32.mrb[0].mxu0
        %v3815 = vpop.f32.mrb[0].mxu0
        %v3816 = vadd.f32 0.0, %v3815
        %v3817 = vpop.f32.mrb[0].mxu0
        %3818 = vdwg.mxu0
        %v3820 = vsel %vm1240, %v3510, 0
        %3822 = vmatprep.subr.bf16.mxu0 0
        %3823 = vmatpush1.bf16.msra.mxu0 %v3820
        %3824 = vmatprep.subr.bf16.mxu0 0
        %3825 = vmatpush1.bf16.msra.mxu0 0
        %3826 = vmatprep.subr.bf16.mxu0 0
        %3827 = vmatpush1.bf16.msra.mxu0 0
        %3828 = vmatprep.subr.bf16.mxu0 0
        %3829 = vmatpush1.bf16.msra.mxu0 0
        %3830 = vmatprep.subr.bf16.mxu0 0
        %3831 = vmatpush1.bf16.msra.mxu0 0
        %3832 = vmatprep.subr.bf16.mxu0 0
        %3833 = vmatpush1.bf16.msra.mxu0 0
        %3834 = vmatprep.subr.bf16.mxu0 0
        %3835 = vmatpush1.bf16.msra.mxu0 0
        %3836 = vmatprep.subr.bf16.mxu0 0
        %3837 = vmatpush1.bf16.msra.mxu0 0
        %3838 = vmatprep.subr.bf16.mxu0 0
        %3839 = vmatpush1.bf16.msra.mxu0 0
        %3840 = vmatprep.subr.bf16.mxu0 0
        %3841 = vmatpush1.bf16.msra.mxu0 0
        %3842 = vmatprep.subr.bf16.mxu0 0
        %3843 = vmatpush1.bf16.msra.mxu0 0
        %3844 = vmatprep.subr.bf16.mxu0 0
        %3845 = vmatpush1.bf16.msra.mxu0 0
        %3846 = vmatprep.subr.bf16.mxu0 0
        %3847 = vmatpush1.bf16.msra.mxu0 0
        %3848 = vmatprep.subr.bf16.mxu0 0
        %3849 = vmatpush1.bf16.msra.mxu0 0
        %3850 = vmatprep.subr.bf16.mxu0 0
        %3851 = vmatpush1.bf16.msra.mxu0 0
        %3852 = vmatprep.subr.bf16.mxu0 0
        %3853 = vmatpush1.bf16.msra.mxu0 0
        %3854 = vmatprep.mubr.bf16.mxu0 0
        %3855 = vmatmul.mubr.bf16.gmra.mrb[0].mxu0 %v1568
        %v3856 = vpop.f32.mrb[0].mxu0
        %v3857 = vadd.f32 0.0, %v3856
        %v3858 = vpop.f32.mrb[0].mxu0
        %v3859 = vpop.f32.mrb[0].mxu0
        %v3860 = vadd.f32 0.0, %v3859
        %v3861 = vpop.f32.mrb[0].mxu0
        %3862 = vdwg.mxu0
        %s3863 = scalar_lea.vmem %s7, 32
        %v3864 = vld [vmem:[%s3863] sm:$0xf]
        %v3865 = vld [vmem:[%s3863 + $0x4] sm:$0xf]
        %v3866 = vld [vmem:[%s3863 + $0x8] sm:$0xf]
        %v3867 = vld [vmem:[%s3863 + $0xc] sm:$0xf]
        %v3868 = vpack.c.bf16 %v3552, %v3549
        %v3869 = vpack.c.bf16 %v3596, %v3593
        %v3870 = vpack.c.bf16 %v3640, %v3637
        %v3871 = vpack.c.bf16 %v3684, %v3681
        %v3872 = vpack.c.bf16 %v3728, %v3725
        %v3873 = vpack.c.bf16 %v3772, %v3769
        %v3874 = vpack.c.bf16 %v3816, %v3813
        %v3875 = vpack.c.bf16 %v3860, %v3857
        %s3876 = scalar_lea.vmem %s8, 32
        %v3877 = vld [vmem:[%s3876] sm:$0xf]
        %v3878 = vld [vmem:[%s3876 + $0x4] sm:$0xf]
        %v3879 = vld [vmem:[%s3876 + $0x8] sm:$0xf]
        %v3880 = vld [vmem:[%s3876 + $0xc] sm:$0xf]
        %v3885 = vunpack.c.l.b16 %v3877
        %v3886 = vunpack.c.l.b16 %v3878
        %v3887 = vunpack.c.l.b16 %v3879
        %v3888 = vunpack.c.l.b16 %v3880
        %v3889 = vpack.c.b16 %v3886, %v3885
        %v3890 = vpack.c.b16 %v3888, %v3887
        %v3894 = vsel %vm1142, %v3868, 0
        %v3897 = vsel %vm1142, %v3869, 0
        %v3900 = vsel %vm1142, %v3870, 0
        %v3903 = vsel %vm1142, %v3871, 0
        %v3906 = vsel %vm1142, %v3872, 0
        %v3909 = vsel %vm1142, %v3873, 0
        %v3912 = vsel %vm1142, %v3874, 0
        %v3915 = vsel %vm1142, %v3875, 0
        %3917 = vmatprep.subr.bf16.mxu0 0
        %3918 = vmatpush1.bf16.msra.mxu0 %v3889
        %3919 = vmatprep.subr.bf16.mxu0 0
        %3920 = vmatpush1.bf16.msra.mxu0 %v3890
        %3921 = vmatprep.subr.bf16.mxu0 0
        %3922 = vmatpush1.bf16.msra.mxu0 0
        %3923 = vmatprep.subr.bf16.mxu0 0
        %3924 = vmatpush1.bf16.msra.mxu0 0
        %3925 = vmatprep.subr.bf16.mxu0 0
        %3926 = vmatpush1.bf16.msra.mxu0 0
        %3927 = vmatprep.subr.bf16.mxu0 0
        %3928 = vmatpush1.bf16.msra.mxu0 0
        %3929 = vmatprep.subr.bf16.mxu0 0
        %3930 = vmatpush1.bf16.msra.mxu0 0
        %3931 = vmatprep.subr.bf16.mxu0 0
        %3932 = vmatpush1.bf16.msra.mxu0 0
        %3933 = vmatprep.subr.bf16.mxu0 0
        %3934 = vmatpush1.bf16.msra.mxu0 0
        %3935 = vmatprep.subr.bf16.mxu0 0
        %3936 = vmatpush1.bf16.msra.mxu0 0
        %3937 = vmatprep.subr.bf16.mxu0 0
        %3938 = vmatpush1.bf16.msra.mxu0 0
        %3939 = vmatprep.subr.bf16.mxu0 0
        %3940 = vmatpush1.bf16.msra.mxu0 0
        %3941 = vmatprep.subr.bf16.mxu0 0
        %3942 = vmatpush1.bf16.msra.mxu0 0
        %3943 = vmatprep.subr.bf16.mxu0 0
        %3944 = vmatpush1.bf16.msra.mxu0 0
        %3945 = vmatprep.subr.bf16.mxu0 0
        %3946 = vmatpush1.bf16.msra.mxu0 0
        %3947 = vmatprep.subr.bf16.mxu0 0
        %3948 = vmatpush1.bf16.msra.mxu0 0
        %3949 = vmatprep.mubr.bf16.mxu0 0
        %3950 = vmatmul.mubr.bf16.gmra.mrb[0].mxu0 %v3894
        %v3951 = vpop.f32.mrb[0].mxu0
        %v3952 = vadd.f32 0.0, %v3951
        %v3953 = vpop.f32.mrb[0].mxu0
        %v3954 = vpop.f32.mrb[0].mxu0
        %v3955 = vadd.f32 0.0, %v3954
        %v3956 = vpop.f32.mrb[0].mxu0
        %3957 = vmatprep.mubr.bf16.mxu0 0
        %3958 = vmatmul.mubr.bf16.gmra.mrb[0].mxu0 %v3897
        %v3959 = vpop.f32.mrb[0].mxu0
        %v3960 = vadd.f32 0.0, %v3959
        %v3961 = vpop.f32.mrb[0].mxu0
        %v3962 = vpop.f32.mrb[0].mxu0
        %v3963 = vadd.f32 0.0, %v3962
        %v3964 = vpop.f32.mrb[0].mxu0
        %3965 = vmatprep.mubr.bf16.mxu0 0
        %3966 = vmatmul.mubr.bf16.gmra.mrb[0].mxu0 %v3900
        %v3967 = vpop.f32.mrb[0].mxu0
        %v3968 = vadd.f32 0.0, %v3967
        %v3969 = vpop.f32.mrb[0].mxu0
        %v3970 = vpop.f32.mrb[0].mxu0
        %v3971 = vadd.f32 0.0, %v3970
        %v3972 = vpop.f32.mrb[0].mxu0
        %3973 = vmatprep.mubr.bf16.mxu0 0
        %3974 = vmatmul.mubr.bf16.gmra.mrb[0].mxu0 %v3903
        %v3975 = vpop.f32.mrb[0].mxu0
        %v3976 = vadd.f32 0.0, %v3975
        %v3977 = vpop.f32.mrb[0].mxu0
        %v3978 = vpop.f32.mrb[0].mxu0
        %v3979 = vadd.f32 0.0, %v3978
        %v3980 = vpop.f32.mrb[0].mxu0
        %3981 = vmatprep.mubr.bf16.mxu0 0
        %3982 = vmatmul.mubr.bf16.gmra.mrb[0].mxu0 %v3906
        %v3983 = vpop.f32.mrb[0].mxu0
        %v3984 = vadd.f32 0.0, %v3983
        %v3985 = vpop.f32.mrb[0].mxu0
        %v3986 = vpop.f32.mrb[0].mxu0
        %v3987 = vadd.f32 0.0, %v3986
        %v3988 = vpop.f32.mrb[0].mxu0
        %3989 = vmatprep.mubr.bf16.mxu0 0
        %3990 = vmatmul.mubr.bf16.gmra.mrb[0].mxu0 %v3909
        %v3991 = vpop.f32.mrb[0].mxu0
        %v3992 = vadd.f32 0.0, %v3991
        %v3993 = vpop.f32.mrb[0].mxu0
        %v3994 = vpop.f32.mrb[0].mxu0
        %v3995 = vadd.f32 0.0, %v3994
        %v3996 = vpop.f32.mrb[0].mxu0
        %3997 = vmatprep.mubr.bf16.mxu0 0
        %3998 = vmatmul.mubr.bf16.gmra.mrb[0].mxu0 %v3912
        %v3999 = vpop.f32.mrb[0].mxu0
        %v4000 = vadd.f32 0.0, %v3999
        %v4001 = vpop.f32.mrb[0].mxu0
        %v4002 = vpop.f32.mrb[0].mxu0
        %v4003 = vadd.f32 0.0, %v4002
        %v4004 = vpop.f32.mrb[0].mxu0
        %4005 = vmatprep.mubr.bf16.mxu0 0
        %4006 = vmatmul.mubr.bf16.gmra.mrb[0].mxu0 %v3915
        %v4007 = vpop.f32.mrb[0].mxu0
        %v4008 = vadd.f32 0.0, %v4007
        %v4009 = vpop.f32.mrb[0].mxu0
        %v4010 = vpop.f32.mrb[0].mxu0
        %v4011 = vadd.f32 0.0, %v4010
        %v4012 = vpop.f32.mrb[0].mxu0
        %4013 = vdwg.mxu0
        %v4018 = vunpack.c.l.b16 %v3864
        %v4019 = vunpack.c.l.b16 %v3865
        %v4020 = vunpack.c.l.b16 %v3866
        %v4021 = vunpack.c.l.b16 %v3867
        %v4022 = vpack.c.b16 %v4019, %v4018
        %v4023 = vpack.c.b16 %v4021, %v4020
        %v4027 = vsel %vm1142, %v3061, 0
        %v4030 = vsel %vm1142, %v3062, 0
        %v4033 = vsel %vm1142, %v3063, 0
        %v4036 = vsel %vm1142, %v3064, 0
        %v4039 = vsel %vm1142, %v3065, 0
        %v4042 = vsel %vm1142, %v3066, 0
        %v4045 = vsel %vm1142, %v3067, 0
        %v4048 = vsel %vm1142, %v3068, 0
        %4050 = vmatprep.subr.bf16.mxu0 0
        %4051 = vmatpush1.bf16.msra.mxu0 %v4022
        %4052 = vmatprep.subr.bf16.mxu0 0
        %4053 = vmatpush1.bf16.msra.mxu0 %v4023
        %4054 = vmatprep.subr.bf16.mxu0 0
        %4055 = vmatpush1.bf16.msra.mxu0 0
        %4056 = vmatprep.subr.bf16.mxu0 0
        %4057 = vmatpush1.bf16.msra.mxu0 0
        %4058 = vmatprep.subr.bf16.mxu0 0
        %4059 = vmatpush1.bf16.msra.mxu0 0
        %4060 = vmatprep.subr.bf16.mxu0 0
        %4061 = vmatpush1.bf16.msra.mxu0 0
        %4062 = vmatprep.subr.bf16.mxu0 0
        %4063 = vmatpush1.bf16.msra.mxu0 0
        %4064 = vmatprep.subr.bf16.mxu0 0
        %4065 = vmatpush1.bf16.msra.mxu0 0
        %4066 = vmatprep.subr.bf16.mxu0 0
        %4067 = vmatpush1.bf16.msra.mxu0 0
        %4068 = vmatprep.subr.bf16.mxu0 0
        %4069 = vmatpush1.bf16.msra.mxu0 0
        %4070 = vmatprep.subr.bf16.mxu0 0
        %4071 = vmatpush1.bf16.msra.mxu0 0
        %4072 = vmatprep.subr.bf16.mxu0 0
        %4073 = vmatpush1.bf16.msra.mxu0 0
        %4074 = vmatprep.subr.bf16.mxu0 0
        %4075 = vmatpush1.bf16.msra.mxu0 0
        %4076 = vmatprep.subr.bf16.mxu0 0
        %4077 = vmatpush1.bf16.msra.mxu0 0
        %4078 = vmatprep.subr.bf16.mxu0 0
        %4079 = vmatpush1.bf16.msra.mxu0 0
        %4080 = vmatprep.subr.bf16.mxu0 0
        %4081 = vmatpush1.bf16.msra.mxu0 0
        %4082 = vmatprep.mubr.bf16.mxu0 0
        %4083 = vmatmul.mubr.bf16.gmra.mrb[0].mxu0 %v4027
        %v4084 = vpop.f32.mrb[0].mxu0
        %v4085 = vadd.f32 %v3952, %v4084
        %v4086 = vpop.f32.mrb[0].mxu0
        %v4087 = vpop.f32.mrb[0].mxu0
        %v4088 = vadd.f32 %v3955, %v4087
        %v4089 = vpop.f32.mrb[0].mxu0
        %4090 = vmatprep.mubr.bf16.mxu0 0
        %4091 = vmatmul.mubr.bf16.gmra.mrb[0].mxu0 %v4030
        %v4092 = vpop.f32.mrb[0].mxu0
        %v4093 = vadd.f32 %v3960, %v4092
        %v4094 = vpop.f32.mrb[0].mxu0
        %v4095 = vpop.f32.mrb[0].mxu0
        %v4096 = vadd.f32 %v3963, %v4095
        %v4097 = vpop.f32.mrb[0].mxu0
        %4098 = vmatprep.mubr.bf16.mxu0 0
        %4099 = vmatmul.mubr.bf16.gmra.mrb[0].mxu0 %v4033
        %v4100 = vpop.f32.mrb[0].mxu0
        %v4101 = vadd.f32 %v3968, %v4100
        %v4102 = vpop.f32.mrb[0].mxu0
        %v4103 = vpop.f32.mrb[0].mxu0
        %v4104 = vadd.f32 %v3971, %v4103
        %v4105 = vpop.f32.mrb[0].mxu0
        %4106 = vmatprep.mubr.bf16.mxu0 0
        %4107 = vmatmul.mubr.bf16.gmra.mrb[0].mxu0 %v4036
        %v4108 = vpop.f32.mrb[0].mxu0
        %v4109 = vadd.f32 %v3976, %v4108
        %v4110 = vpop.f32.mrb[0].mxu0
        %v4111 = vpop.f32.mrb[0].mxu0
        %v4112 = vadd.f32 %v3979, %v4111
        %v4113 = vpop.f32.mrb[0].mxu0
        %4114 = vmatprep.mubr.bf16.mxu0 0
        %4115 = vmatmul.mubr.bf16.gmra.mrb[0].mxu0 %v4039
        %v4116 = vpop.f32.mrb[0].mxu0
        %v4117 = vadd.f32 %v3984, %v4116
        %v4118 = vpop.f32.mrb[0].mxu0
        %v4119 = vpop.f32.mrb[0].mxu0
        %v4120 = vadd.f32 %v3987, %v4119
        %v4121 = vpop.f32.mrb[0].mxu0
        %4122 = vmatprep.mubr.bf16.mxu0 0
        %4123 = vmatmul.mubr.bf16.gmra.mrb[0].mxu0 %v4042
        %v4124 = vpop.f32.mrb[0].mxu0
        %v4125 = vadd.f32 %v3992, %v4124
        %v4126 = vpop.f32.mrb[0].mxu0
        %v4127 = vpop.f32.mrb[0].mxu0
        %v4128 = vadd.f32 %v3995, %v4127
        %v4129 = vpop.f32.mrb[0].mxu0
        %4130 = vmatprep.mubr.bf16.mxu0 0
        %4131 = vmatmul.mubr.bf16.gmra.mrb[0].mxu0 %v4045
        %v4132 = vpop.f32.mrb[0].mxu0
        %v4133 = vadd.f32 %v4000, %v4132
        %v4134 = vpop.f32.mrb[0].mxu0
        %v4135 = vpop.f32.mrb[0].mxu0
        %v4136 = vadd.f32 %v4003, %v4135
        %v4137 = vpop.f32.mrb[0].mxu0
        %4138 = vmatprep.mubr.bf16.mxu0 0
        %4139 = vmatmul.mubr.bf16.gmra.mrb[0].mxu0 %v4048
        %v4140 = vpop.f32.mrb[0].mxu0
        %v4141 = vadd.f32 %v4008, %v4140
        %v4142 = vpop.f32.mrb[0].mxu0
        %v4143 = vpop.f32.mrb[0].mxu0
        %v4144 = vadd.f32 %v4011, %v4143
        %v4145 = vpop.f32.mrb[0].mxu0
        %4146 = vdwg.mxu0
        %s4147 = scalar_lea.vmem %s9, 2
        %v4148 = vld [vmem:[%s4147] sm:$0x1]
        %v4150 = vlaneseq
        %v4151 = vshrl.u32 %v4150, 7
        %v4152 = vsub.s32 0, %v4151
        %v4153 = vrot.slane %v4148, %v4152
        %v4155 = vadd.f32 %v4085, %v4153
        %v4156 = vadd.f32 %v4088, %v4153
        %v4157 = vadd.f32 %v4093, %v4153
        %v4158 = vadd.f32 %v4096, %v4153
        %v4159 = vadd.f32 %v4101, %v4153
        %v4160 = vadd.f32 %v4104, %v4153
        %v4161 = vadd.f32 %v4109, %v4153
        %v4162 = vadd.f32 %v4112, %v4153
        %v4163 = vadd.f32 %v4117, %v4153
        %v4164 = vadd.f32 %v4120, %v4153
        %v4165 = vadd.f32 %v4125, %v4153
        %v4166 = vadd.f32 %v4128, %v4153
        %v4167 = vadd.f32 %v4133, %v4153
        %v4168 = vadd.f32 %v4136, %v4153
        %v4169 = vadd.f32 %v4141, %v4153
        %v4170 = vadd.f32 %v4144, %v4153
        %v4171 = vmax.f32 %v4155, 0.0
        %v4172 = vmax.f32 %v4156, 0.0
        %v4173 = vmax.f32 %v4157, 0.0
        %v4174 = vmax.f32 %v4158, 0.0
        %v4175 = vmax.f32 %v4159, 0.0
        %v4176 = vmax.f32 %v4160, 0.0
        %v4177 = vmax.f32 %v4161, 0.0
        %v4178 = vmax.f32 %v4162, 0.0
        %v4179 = vmax.f32 %v4163, 0.0
        %v4180 = vmax.f32 %v4164, 0.0
        %v4181 = vmax.f32 %v4165, 0.0
        %v4182 = vmax.f32 %v4166, 0.0
        %v4183 = vmax.f32 %v4167, 0.0
        %v4184 = vmax.f32 %v4168, 0.0
        %v4185 = vmax.f32 %v4169, 0.0
        %v4186 = vmax.f32 %v4170, 0.0
        %4187 = vst.msk [vmem:[%s389] sm:$0xff] %vm1142, %v4171
        %4188 = vst.msk [vmem:[%s389 + $0x8] sm:$0xff] %vm1142, %v4172
        %4189 = vst.msk [vmem:[%s389 + $0x10] sm:$0xff] %vm1142, %v4173
        %4190 = vst.msk [vmem:[%s389 + $0x18] sm:$0xff] %vm1142, %v4174
        %4191 = vst.msk [vmem:[%s389 + $0x20] sm:$0xff] %vm1142, %v4175
        %4192 = vst.msk [vmem:[%s389 + $0x28] sm:$0xff] %vm1142, %v4176
        %4193 = vst.msk [vmem:[%s389 + $0x30] sm:$0xff] %vm1142, %v4177
        %4194 = vst.msk [vmem:[%s389 + $0x38] sm:$0xff] %vm1142, %v4178
        %4195 = vst.msk [vmem:[%s389 + $0x40] sm:$0xff] %vm1142, %v4179
        %4196 = vst.msk [vmem:[%s389 + $0x48] sm:$0xff] %vm1142, %v4180
        %4197 = vst.msk [vmem:[%s389 + $0x50] sm:$0xff] %vm1142, %v4181
        %4198 = vst.msk [vmem:[%s389 + $0x58] sm:$0xff] %vm1142, %v4182
        %4199 = vst.msk [vmem:[%s389 + $0x60] sm:$0xff] %vm1142, %v4183
        %4200 = vst.msk [vmem:[%s389 + $0x68] sm:$0xff] %vm1142, %v4184
        %4201 = vst.msk [vmem:[%s389 + $0x70] sm:$0xff] %vm1142, %v4185
        %4202 = vst.msk [vmem:[%s389 + $0x78] sm:$0xff] %vm1142, %v4186
        %s4203 = sand.u32 %s257, 1
        %s4204 = scalar_lea.sflag [#allocation3], %s4203
        %s4205 = sand.u32 %s257, 1
        %s4206 = smul.addr %s4205, 128
        %s4207 = scalar_lea.vmem [#allocation2], %s4206
        // Predicated region
        $region61: #{tpu_custom_call.1} parent=59 // pred_check
          %p4208 = pneg %p267
        $region62: #{tpu_custom_call.1} parent=59 // pred_check_branch
          %4210 = sbr.rel (%p4208) target = $region64
        $region63: #{tpu_custom_call.1} parent=59 // pred_region
          %s4211 = smul.u32 8, %s24
          %s4213 = ssub.s32 2048, 2048
          %4214 = vsyncadd %s4204, %s4213
          %s4215 = smul.addr %s4211, 2
          %s4216 = smul.addr %s4215, 128
          %s4217 = scalar_lea.hbm %s10, %s4216
          %s4218 = sshll.u32 %s4207, 4
          %s4219 = int_to_ptr.vmem [resolvable:$true] %s4218
          %4224 = dma.vmem_to_hbm [thread:$0]  %s4219, 2048, %s4217, %s4204, 128, 128, 8
        $region64: #{tpu_custom_call.1} parent=59 // pred_fallthru
          _
      $region60: #{tpu_custom_call.1} parent=5 // pred_fallthru
        _
      %p4225 = scmp.le.s32.totalorder 2, %s19
      // Predicated region
      $region65: #{tpu_custom_call.1} parent=5 // pred_check
        %p4226 = pneg %p4225
      $region66: #{tpu_custom_call.1} parent=5 // pred_check_branch
        %4228 = sbr.rel (%p4226) target = $region68
      $region67: #{tpu_custom_call.1} parent=5 // pred_region
        %s4229 = ssub.s32 %s19, 2
        // Predicated region
        $region69: #{tpu_custom_call.1} parent=67 // pred_check
          %p4230 = pneg %p273
        $region70: #{tpu_custom_call.1} parent=67 // pred_check_branch
          %4232 = sbr.rel (%p4230) target = $region72
        $region71: #{tpu_custom_call.1} parent=67 // pred_region
          %s4233 = sand.u32 %s258, 1
          %s4234 = scalar_lea.sflag [#allocation3], %s4233
          %s4235 = sand.u32 %s258, 1
          %s4236 = smul.addr %s4235, 128
          %s4237 = scalar_lea.vmem [#allocation2], %s4236
          %4238 = dma.done %s4234, 2048
        $region72: #{tpu_custom_call.1} parent=67 // pred_fallthru
          _
      $region68: #{tpu_custom_call.1} parent=5 // pred_fallthru
        _
    $region6: #{tpu_custom_call.1} parent=1 // loop_footer
      %s23 = sadd.s32 1, %s19
    $region7: #{tpu_custom_call.1} parent=1 // loop_footer_branch
      %18 = sbr.rel target = $region3
    $region8: #{tpu_custom_call.1} parent=1 // loop_exit
      _
    %4239 = vsyncpa [#allocation3], 1
    %s4240 = scalar_lea.sflag [#allocation3], 1
    %4241 = vsyncpa %s4240, 1

</llo_original>
